<compile_context>
chip_gen: v6e
topology: v6e:2x2x1
jax: 0.10.0
libtpu: 0.0.40
codegen_flags: <defaults>
</compile_context>

<pallas_src>
import math

import numpy as np
import jax
import jax.numpy as jnp
from jax import lax
from jax.experimental import pallas as pl
from jax.experimental.pallas import tpu as pltpu

# ----------------------------- hyper-params -----------------------------
ALGEBRA_DIM = 3
EMBED_DIM = 8            # == 2 ** ALGEBRA_DIM (required by reference semantics)
HIDDEN_DIM = 32
SEQ_LEN = 16             # number of input points == seq_length
NUM_OUT_POINTS = 16      # must equal SEQ_LEN
NUM_ENC_LAYERS = 1
NUM_DEC_LAYERS = 1
BATCH = 2
LN_EPS = 1e-5
LANES = 128


# ----------------------------- host-side constants -----------------------------
def build_pos_encoding(d_model, max_len):
    position = np.arange(max_len)[:, None].astype(np.float32)
    div_term = np.exp(np.arange(0, d_model, 2).astype(np.float32) *
                      (-math.log(10000.0) / d_model))
    pe = np.zeros((max_len, d_model), np.float32)
    pe[:, 0::2] = np.sin(position * div_term)
    n_odd = pe[:, 1::2].shape[1]
    pe[:, 1::2] = np.cos(position * div_term[:n_odd])
    return pe


def pack_entries(entries):
    """Pack 2D f32 arrays (cols <= 128) into one lane-dense (R, 128) slab.

    Each entry starts at an 8-row-aligned offset so static slices never cross a
    sublane tile boundary.  Returns (slab, {name: (row_off, rows, cols)}).
    """
    offsets = {}
    row = 0
    for name, a in entries:
        a = np.asarray(a, np.float32)
        assert a.ndim == 2 and a.shape[1] <= LANES, (name, a.shape)
        offsets[name] = (row, a.shape[0], a.shape[1])
        row += ((a.shape[0] + 7) // 8) * 8
    slab = np.zeros((row, LANES), np.float32)
    for name, a in entries:
        ro, r, c = offsets[name]
        slab[ro:ro + r, :c] = np.asarray(a, np.float32)
    return jnp.asarray(slab), offsets


# ----------------------------- the single fused kernel -----------------------------
def _make_kernel(off, B, S):
    N = B * S

    def kernel(src_ref, pk_ref, out_ref):
        def g(name):                                 # static slice view of the packed slab
            ro, r, c = off[name]
            return pk_ref[ro:ro + r, 0:c]

        src = src_ref[...]                           # (N, 3) batch-stacked input points
        pe = g("pe")                                 # (N, D) positional encoding, tiled per batch
        msum = g("msum")                             # (N, N) block-diag ones: per-batch sum->rows
        bsel = g("bsel")                             # (N, B) batch one-hot
        lidx = g("lidx")                             # (N, 1) within-batch row index (f32)

        def ln(x, gname, bname):
            mu = jnp.mean(x, axis=-1, keepdims=True)
            var = jnp.mean((x - mu) ** 2, axis=-1, keepdims=True)
            return (x - mu) * lax.rsqrt(var + LN_EPS) * g(gname) + g(bname)

        def attn(xn, p):
            # SelfAttentionGA: einsum('bqk,bvd->bqd', softmax(scores), v) with softmax rows
            # summing to 1 == per-batch column-sum of V broadcast over queries.  The GA score
            # path is a mathematical no-op on the output and is elided (see file docstring).
            v = (jnp.dot(xn, g(p + "v_w"), preferred_element_type=jnp.float32)
                 + g(p + "v_b"))
            return jnp.dot(msum, v, preferred_element_type=jnp.float32)

        def ffn(x, p):
            h = jnp.maximum(
                jnp.dot(x, g(p + "fi_w"), preferred_element_type=jnp.float32) + g(p + "fi_b"),
                0.0)
            return jnp.dot(h, g(p + "fo_w"), preferred_element_type=jnp.float32) + g(p + "fo_b")

        # ------------------------------ encoder ------------------------------
        x = jnp.dot(src, g("emb_w"), preferred_element_type=jnp.float32) + g("emb_b") + pe
        for l in range(NUM_ENC_LAYERS):
            p = "enc%d_" % l
            x = x + attn(ln(x, p + "n1_g", p + "n1_b"), p)
            x = x + ffn(x, p)
            x = ln(x, p + "n2_g", p + "n2_b")
        _memory = x  # noqa: F841  (dead w.r.t. the output by reference semantics; see docstring)

        # ------------------- farthest point sampling (fully unrolled) -------------------
        # TODO(synk): torch.randint initial seed point replaced by deterministic index 0.
        dist = jnp.full((N, 1), 1e10, jnp.float32)
        far_oh = (lidx == 0.0).astype(jnp.float32)           # one-hot of current farthest row
        q3 = jnp.zeros((N, 3), jnp.float32)                  # sampled query coordinates
        for i in range(NUM_OUT_POINTS):                      # fixed trip count -> full unroll
            cent = jnp.dot(msum, far_oh * src,
                           preferred_element_type=jnp.float32)           # (N,3) per-batch centroid
            q3 = q3 + (lidx == float(i)).astype(jnp.float32) * cent       # record sample i
            d = jnp.sum((src - cent) ** 2, axis=1, keepdims=True)         # (N,1)
            dist = jnp.minimum(dist, d)
            mcol = jnp.max(jnp.where(bsel > 0.5, dist, -1e30),
                           axis=0, keepdims=True)                         # (1,B) per-batch max
            mrow = jnp.sum(bsel * mcol, axis=1, keepdims=True)            # (N,1) broadcast back
            cidx = jnp.where(dist >= mrow, lidx, float(S))
            icol = jnp.min(jnp.where(bsel > 0.5, cidx, float(S)),
                           axis=0, keepdims=True)                         # (1,B) first argmax
            irow = jnp.sum(bsel * icol, axis=1, keepdims=True)            # (N,1)
            far_oh = (lidx == irow).astype(jnp.float32)

        # ------------------------------ decoder ------------------------------
        # embed_grade(queries, 1) puts (x,y,z) into blades 1..3; then add PE.
        t = jnp.dot(q3, g("grade1"), preferred_element_type=jnp.float32) + pe
        for l in range(NUM_DEC_LAYERS):
            p = "dec%d_" % l
            t = t + attn(ln(t, p + "n1_g", p + "n1_b"), p + "sa_")
            # Cross-attention: `memory` only enters the elided score path, so it is not consumed.
            t = t + attn(ln(t, p + "n2_g", p + "n2_b"), p + "ca_")
            t = t + ffn(t, p)
            t = ln(t, p + "n3_g", p + "n3_b")

        # ---------------- reconstruction head (padded to 128 lanes, unmasked store) ----------------
        rec = jnp.dot(t, g("recon_w"), preferred_element_type=jnp.float32) + g("recon_b")
        out_ref[...] = rec.astype(out_ref.dtype)

    return kernel


def build_forward(params, B, S):
    D = EMBED_DIM
    N = B * S

    entries = []

    def add(name, a):
        entries.append((name, np.asarray(a, np.float32)))

    add("emb_w", params["emb_w"])
    add("emb_b", params["emb_b"])
    add("pe", np.tile(build_pos_encoding(D, max(64, S))[:S], (B, 1)))
    grade1 = np.zeros((3, D), np.float32)
    grade1[np.arange(3), np.arange(1, 4)] = 1.0
    add("grade1", grade1)
    add("msum", np.kron(np.eye(B, dtype=np.float32), np.ones((S, S), np.float32)))
    add("bsel", np.kron(np.eye(B, dtype=np.float32), np.ones((S, 1), np.float32)))
    add("lidx", np.tile(np.arange(S, dtype=np.float32), B).reshape(N, 1))

    for l, lp in enumerate(params["enc_layers"]):
        p = "enc%d_" % l
        add(p + "v_w", lp["attn"]["v_w"])
        add(p + "v_b", lp["attn"]["v_b"])
        for k in ("n1_g", "n1_b", "n2_g", "n2_b", "fi_w", "fi_b", "fo_w", "fo_b"):
            add(p + k, lp[k])
    for l, lp in enumerate(params["dec_layers"]):
        p = "dec%d_" % l
        add(p + "sa_v_w", lp["self_attn"]["v_w"])
        add(p + "sa_v_b", lp["self_attn"]["v_b"])
        add(p + "ca_v_w", lp["cross_attn"]["v_w"])
        add(p + "ca_v_b", lp["cross_attn"]["v_b"])
        for k in ("n1_g", "n1_b", "n2_g", "n2_b", "n3_g", "n3_b",
                  "fi_w", "fi_b", "fo_w", "fo_b"):
            add(p + k, lp[k])

    recon_w = np.zeros((D, LANES), np.float32)
    recon_w[:, :3] = np.asarray(params["recon_w"])
    recon_b = np.zeros((1, LANES), np.float32)
    recon_b[:, :3] = np.asarray(params["recon_b"])
    add("recon_w", recon_w)
    add("recon_b", recon_b)

    slab, off = pack_entries(entries)
    kernel = _make_kernel(off, B, S)

    fwd = pl.pallas_call(
        kernel,
        out_shape=jax.ShapeDtypeStruct((N, LANES), jnp.float32),
        grid=(1,),  # batch folded into rows -> one fused grid step (no serial grid loop)
        in_specs=[pl.BlockSpec((N, 3), lambda i: (0, 0)),
                  pl.BlockSpec(slab.shape, lambda i: (0, 0))],
        out_specs=pl.BlockSpec((N, LANES), lambda i: (0, 0)),
        compiler_params=pltpu.CompilerParams(
            dimension_semantics=("arbitrary",)),  # single step: megacore sharding is moot
    )

    def forward(src):
        out = fwd(src.reshape(N, 3), slab)        # (N, 128) lane-dense kernel output
        return out[:, :3].reshape(B, S, 3)

    return forward


# ----------------------------- deterministic parameter init -----------------------------
class KeyGen:
    def __init__(self, key):
        self.key = key

    def __call__(self):
        self.key, sub = jax.random.split(self.key)
        return sub


def init_params(key):
    D, H = EMBED_DIM, HIDDEN_DIM
    kg = KeyGen(key)

    def rnd(shape, scale=0.1):
        return (jax.random.normal(kg(), shape) * scale).astype(jnp.float32)

    def attn_p():
        # Only v_proj can influence the output (the GA score path is mathematically dead under
        # the reference's 'bqk,bvd->bqd' einsum), so its parameters are not materialized.
        return {"v_w": rnd((D, D)), "v_b": rnd((1, D))}

    def ones():
        return jnp.ones((1, D), jnp.float32)

    def zeros():
        return jnp.zeros((1, D), jnp.float32)

    def enc_layer():
        return {"attn": attn_p(),
                "n1_g": ones(), "n1_b": zeros(),
                "n2_g": ones(), "n2_b": zeros(),
                "fi_w": rnd((D, H)), "fi_b": rnd((1, H)),
                "fo_w": rnd((H, D)), "fo_b": rnd((1, D))}

    def dec_layer():
        return {"self_attn": attn_p(), "cross_attn": attn_p(),
                "n1_g": ones(), "n1_b": zeros(),
                "n2_g": ones(), "n2_b": zeros(),
                "n3_g": ones(), "n3_b": zeros(),
                "fi_w": rnd((D, H)), "fi_b": rnd((1, H)),
                "fo_w": rnd((H, D)), "fo_b": rnd((1, D))}

    return {"emb_w": rnd((3, D)), "emb_b": rnd((1, D)),
            "enc_layers": [enc_layer() for _ in range(NUM_ENC_LAYERS)],
            "dec_layers": [dec_layer() for _ in range(NUM_DEC_LAYERS)],
            "recon_w": rnd((D, 3)), "recon_b": rnd((1, 3))}


# ----------------------------- main -----------------------------
if __name__ == "__main__":
    assert EMBED_DIM == 2 ** ALGEBRA_DIM and NUM_OUT_POINTS == SEQ_LEN

    key = jax.random.PRNGKey(0)
    kp, kx = jax.random.split(key)

    params = init_params(kp)
    src = jax.random.normal(kx, (BATCH, SEQ_LEN, 3), dtype=jnp.float32)

    forward = jax.jit(build_forward(params, BATCH, SEQ_LEN))
    out = forward(src)
    jax.block_until_ready(out)

    assert out.shape == (BATCH, NUM_OUT_POINTS, 3)
    assert bool(jnp.all(jnp.isfinite(out)))
    print("KERNEL_OK")
</pallas_src>

<mosaic_0001>
module attributes {stable_mosaic.version = 11 : i64} {
  func.func @kernel(%arg0: i32, %arg1: memref<32x3xf32, #tpu.memory_space<vmem>>, %arg2: memref<408x128xf32, #tpu.memory_space<vmem>>, %arg3: memref<32x128xf32, #tpu.memory_space<vmem>>) attributes {dimension_semantics = [#tpu.dimension_semantics<arbitrary>], iteration_bounds = array<i64: 1>, scalar_prefetch = 0 : i64, scratch_operands = 0 : i64, tpu.core_type = #tpu.core_type<tc>, window_params = [{pipeline_mode = #tpu.pipeline_mode<synchronous>, transform_indices = @transform_0, window_bounds = array<i64: 32, 3>}, {pipeline_mode = #tpu.pipeline_mode<synchronous>, transform_indices = @transform_1, window_bounds = array<i64: 408, 128>}, {pipeline_mode = #tpu.pipeline_mode<synchronous>, transform_indices = @transform_2, window_bounds = array<i64: 32, 128>}]} {
    %c0 = arith.constant 0 : index
    %c0_0 = arith.constant 0 : index
    %0 = vector.load %arg1[%c0, %c0_0] : memref<32x3xf32, #tpu.memory_space<vmem>>, vector<32x3xf32>
    %c16 = arith.constant 16 : index
    %c0_1 = arith.constant 0 : index
    %1 = vector.load %arg2[%c16, %c0_1] : memref<408x128xf32, #tpu.memory_space<vmem>>, vector<32x8xf32>
    %c56 = arith.constant 56 : index
    %c0_2 = arith.constant 0 : index
    %2 = vector.load %arg2[%c56, %c0_2] : memref<408x128xf32, #tpu.memory_space<vmem>>, vector<32x32xf32>
    %c88 = arith.constant 88 : index
    %c0_3 = arith.constant 0 : index
    %3 = vector.load %arg2[%c88, %c0_3] : memref<408x128xf32, #tpu.memory_space<vmem>>, vector<32x2xf32>
    %c120 = arith.constant 120 : index
    %c0_4 = arith.constant 0 : index
    %4 = vector.load %arg2[%c120, %c0_4] : memref<408x128xf32, #tpu.memory_space<vmem>>, vector<32x1xf32>
    %cst = arith.constant 1.000000e+10 : f32
    %5 = vector.broadcast %cst : f32 to vector<32x1xf32>
    %cst_5 = arith.constant 0.000000e+00 : f32
    %6 = vector.broadcast %cst_5 : f32 to vector<32x1xf32>
    %7 = arith.cmpf oeq, %4, %6 : vector<32x1xf32>
    %8 = arith.extui %7 : vector<32x1xi1> to vector<32x1xi32>
    %9 = arith.sitofp %8 : vector<32x1xi32> to vector<32x1xf32>
    %cst_6 = arith.constant 0.000000e+00 : f32
    %10 = vector.broadcast %cst_6 : f32 to vector<32x3xf32>
    %11 = vector.broadcast %9 : vector<32x1xf32> to vector<32x3xf32>
    %12 = arith.mulf %11, %0 : vector<32x3xf32>
    %cst_7 = arith.constant dense<0.000000e+00> : vector<32x3xf32>
    %13 = tpu.matmul %2, %12, %cst_7 {dimension_numbers = #tpu.dot_dimension_numbers<[1], [0], [0], [1], [0, 0, 1, 1], [], []>} : vector<32x32xf32>, vector<32x3xf32>, vector<32x3xf32> -> vector<32x3xf32>
    %cst_8 = arith.constant 0.000000e+00 : f32
    %14 = vector.broadcast %cst_8 : f32 to vector<32x1xf32>
    %15 = arith.cmpf oeq, %4, %14 : vector<32x1xf32>
    %16 = arith.extui %15 : vector<32x1xi1> to vector<32x1xi32>
    %17 = arith.sitofp %16 : vector<32x1xi32> to vector<32x1xf32>
    %18 = vector.broadcast %17 : vector<32x1xf32> to vector<32x3xf32>
    %19 = arith.mulf %18, %13 : vector<32x3xf32>
    %20 = arith.addf %10, %19 : vector<32x3xf32>
    %21 = arith.subf %0, %13 : vector<32x3xf32>
    %22 = arith.mulf %21, %21 : vector<32x3xf32>
    %cst_9 = arith.constant dense<0.000000e+00> : vector<32xf32>
    %23 = vector.multi_reduction <add>, %22, %cst_9 [1] : vector<32x3xf32> to vector<32xf32>
    %24 = vector.shape_cast %23 : vector<32xf32> to vector<32x1xf32>
    %25 = arith.minimumf %5, %24 : vector<32x1xf32>
    %cst_10 = arith.constant 5.000000e-01 : f32
    %26 = vector.broadcast %cst_10 : f32 to vector<32x2xf32>
    %27 = arith.cmpf ogt, %3, %26 : vector<32x2xf32>
    %cst_11 = arith.constant -1.000000e+30 : f32
    %28 = vector.shape_cast %25 : vector<32x1xf32> to vector<32x1xf32>
    %29 = vector.broadcast %28 : vector<32x1xf32> to vector<32x2xf32>
    %30 = vector.broadcast %cst_11 : f32 to vector<32x2xf32>
    %31 = arith.select %27, %29, %30 : vector<32x2xi1>, vector<32x2xf32>
    %cst_12 = arith.constant dense<0xFF800000> : vector<2xf32>
    %32 = vector.multi_reduction <maximumf>, %31, %cst_12 [0] : vector<32x2xf32> to vector<2xf32>
    %33 = vector.shape_cast %32 : vector<2xf32> to vector<1x2xf32>
    %34 = vector.broadcast %33 : vector<1x2xf32> to vector<32x2xf32>
    %35 = arith.mulf %3, %34 : vector<32x2xf32>
    %cst_13 = arith.constant dense<0.000000e+00> : vector<32xf32>
    %36 = vector.multi_reduction <add>, %35, %cst_13 [1] : vector<32x2xf32> to vector<32xf32>
    %37 = vector.shape_cast %36 : vector<32xf32> to vector<32x1xf32>
    %38 = arith.cmpf oge, %25, %37 : vector<32x1xf32>
    %cst_14 = arith.constant 1.600000e+01 : f32
    %39 = vector.broadcast %cst_14 : f32 to vector<32x1xf32>
    %40 = arith.select %38, %4, %39 : vector<32x1xi1>, vector<32x1xf32>
    %cst_15 = arith.constant 5.000000e-01 : f32
    %41 = vector.broadcast %cst_15 : f32 to vector<32x2xf32>
    %42 = arith.cmpf ogt, %3, %41 : vector<32x2xf32>
    %cst_16 = arith.constant 1.600000e+01 : f32
    %43 = vector.shape_cast %40 : vector<32x1xf32> to vector<32x1xf32>
    %44 = vector.broadcast %43 : vector<32x1xf32> to vector<32x2xf32>
    %45 = vector.broadcast %cst_16 : f32 to vector<32x2xf32>
    %46 = arith.select %42, %44, %45 : vector<32x2xi1>, vector<32x2xf32>
    %cst_17 = arith.constant dense<0x7F800000> : vector<2xf32>
    %47 = vector.multi_reduction <minimumf>, %46, %cst_17 [0] : vector<32x2xf32> to vector<2xf32>
    %48 = vector.shape_cast %47 : vector<2xf32> to vector<1x2xf32>
    %49 = vector.broadcast %48 : vector<1x2xf32> to vector<32x2xf32>
    %50 = arith.mulf %3, %49 : vector<32x2xf32>
    %cst_18 = arith.constant dense<0.000000e+00> : vector<32xf32>
    %51 = vector.multi_reduction <add>, %50, %cst_18 [1] : vector<32x2xf32> to vector<32xf32>
    %52 = vector.shape_cast %51 : vector<32xf32> to vector<32x1xf32>
    %53 = arith.cmpf oeq, %4, %52 : vector<32x1xf32>
    %54 = arith.extui %53 : vector<32x1xi1> to vector<32x1xi32>
    %55 = arith.sitofp %54 : vector<32x1xi32> to vector<32x1xf32>
    %56 = vector.broadcast %55 : vector<32x1xf32> to vector<32x3xf32>
    %57 = arith.mulf %56, %0 : vector<32x3xf32>
    %cst_19 = arith.constant dense<0.000000e+00> : vector<32x3xf32>
    %58 = tpu.matmul %2, %57, %cst_19 {dimension_numbers = #tpu.dot_dimension_numbers<[1], [0], [0], [1], [0, 0, 1, 1], [], []>} : vector<32x32xf32>, vector<32x3xf32>, vector<32x3xf32> -> vector<32x3xf32>
    %cst_20 = arith.constant 1.000000e+00 : f32
    %59 = vector.broadcast %cst_20 : f32 to vector<32x1xf32>
    %60 = arith.cmpf oeq, %4, %59 : vector<32x1xf32>
    %61 = arith.extui %60 : vector<32x1xi1> to vector<32x1xi32>
    %62 = arith.sitofp %61 : vector<32x1xi32> to vector<32x1xf32>
    %63 = vector.broadcast %62 : vector<32x1xf32> to vector<32x3xf32>
    %64 = arith.mulf %63, %58 : vector<32x3xf32>
    %65 = arith.addf %20, %64 : vector<32x3xf32>
    %66 = arith.subf %0, %58 : vector<32x3xf32>
    %67 = arith.mulf %66, %66 : vector<32x3xf32>
    %cst_21 = arith.constant dense<0.000000e+00> : vector<32xf32>
    %68 = vector.multi_reduction <add>, %67, %cst_21 [1] : vector<32x3xf32> to vector<32xf32>
    %69 = vector.shape_cast %68 : vector<32xf32> to vector<32x1xf32>
    %70 = arith.minimumf %25, %69 : vector<32x1xf32>
    %cst_22 = arith.constant 5.000000e-01 : f32
    %71 = vector.broadcast %cst_22 : f32 to vector<32x2xf32>
    %72 = arith.cmpf ogt, %3, %71 : vector<32x2xf32>
    %cst_23 = arith.constant -1.000000e+30 : f32
    %73 = vector.shape_cast %70 : vector<32x1xf32> to vector<32x1xf32>
    %74 = vector.broadcast %73 : vector<32x1xf32> to vector<32x2xf32>
    %75 = vector.broadcast %cst_23 : f32 to vector<32x2xf32>
    %76 = arith.select %72, %74, %75 : vector<32x2xi1>, vector<32x2xf32>
    %cst_24 = arith.constant dense<0xFF800000> : vector<2xf32>
    %77 = vector.multi_reduction <maximumf>, %76, %cst_24 [0] : vector<32x2xf32> to vector<2xf32>
    %78 = vector.shape_cast %77 : vector<2xf32> to vector<1x2xf32>
    %79 = vector.broadcast %78 : vector<1x2xf32> to vector<32x2xf32>
    %80 = arith.mulf %3, %79 : vector<32x2xf32>
    %cst_25 = arith.constant dense<0.000000e+00> : vector<32xf32>
    %81 = vector.multi_reduction <add>, %80, %cst_25 [1] : vector<32x2xf32> to vector<32xf32>
    %82 = vector.shape_cast %81 : vector<32xf32> to vector<32x1xf32>
    %83 = arith.cmpf oge, %70, %82 : vector<32x1xf32>
    %cst_26 = arith.constant 1.600000e+01 : f32
    %84 = vector.broadcast %cst_26 : f32 to vector<32x1xf32>
    %85 = arith.select %83, %4, %84 : vector<32x1xi1>, vector<32x1xf32>
    %cst_27 = arith.constant 5.000000e-01 : f32
    %86 = vector.broadcast %cst_27 : f32 to vector<32x2xf32>
    %87 = arith.cmpf ogt, %3, %86 : vector<32x2xf32>
    %cst_28 = arith.constant 1.600000e+01 : f32
    %88 = vector.shape_cast %85 : vector<32x1xf32> to vector<32x1xf32>
    %89 = vector.broadcast %88 : vector<32x1xf32> to vector<32x2xf32>
    %90 = vector.broadcast %cst_28 : f32 to vector<32x2xf32>
    %91 = arith.select %87, %89, %90 : vector<32x2xi1>, vector<32x2xf32>
    %cst_29 = arith.constant dense<0x7F800000> : vector<2xf32>
    %92 = vector.multi_reduction <minimumf>, %91, %cst_29 [0] : vector<32x2xf32> to vector<2xf32>
    %93 = vector.shape_cast %92 : vector<2xf32> to vector<1x2xf32>
    %94 = vector.broadcast %93 : vector<1x2xf32> to vector<32x2xf32>
    %95 = arith.mulf %3, %94 : vector<32x2xf32>
    %cst_30 = arith.constant dense<0.000000e+00> : vector<32xf32>
    %96 = vector.multi_reduction <add>, %95, %cst_30 [1] : vector<32x2xf32> to vector<32xf32>
    %97 = vector.shape_cast %96 : vector<32xf32> to vector<32x1xf32>
    %98 = arith.cmpf oeq, %4, %97 : vector<32x1xf32>
    %99 = arith.extui %98 : vector<32x1xi1> to vector<32x1xi32>
    %100 = arith.sitofp %99 : vector<32x1xi32> to vector<32x1xf32>
    %101 = vector.broadcast %100 : vector<32x1xf32> to vector<32x3xf32>
    %102 = arith.mulf %101, %0 : vector<32x3xf32>
    %cst_31 = arith.constant dense<0.000000e+00> : vector<32x3xf32>
    %103 = tpu.matmul %2, %102, %cst_31 {dimension_numbers = #tpu.dot_dimension_numbers<[1], [0], [0], [1], [0, 0, 1, 1], [], []>} : vector<32x32xf32>, vector<32x3xf32>, vector<32x3xf32> -> vector<32x3xf32>
    %cst_32 = arith.constant 2.000000e+00 : f32
    %104 = vector.broadcast %cst_32 : f32 to vector<32x1xf32>
    %105 = arith.cmpf oeq, %4, %104 : vector<32x1xf32>
    %106 = arith.extui %105 : vector<32x1xi1> to vector<32x1xi32>
    %107 = arith.sitofp %106 : vector<32x1xi32> to vector<32x1xf32>
    %108 = vector.broadcast %107 : vector<32x1xf32> to vector<32x3xf32>
    %109 = arith.mulf %108, %103 : vector<32x3xf32>
    %110 = arith.addf %65, %109 : vector<32x3xf32>
    %111 = arith.subf %0, %103 : vector<32x3xf32>
    %112 = arith.mulf %111, %111 : vector<32x3xf32>
    %cst_33 = arith.constant dense<0.000000e+00> : vector<32xf32>
    %113 = vector.multi_reduction <add>, %112, %cst_33 [1] : vector<32x3xf32> to vector<32xf32>
    %114 = vector.shape_cast %113 : vector<32xf32> to vector<32x1xf32>
    %115 = arith.minimumf %70, %114 : vector<32x1xf32>
    %cst_34 = arith.constant 5.000000e-01 : f32
    %116 = vector.broadcast %cst_34 : f32 to vector<32x2xf32>
    %117 = arith.cmpf ogt, %3, %116 : vector<32x2xf32>
    %cst_35 = arith.constant -1.000000e+30 : f32
    %118 = vector.shape_cast %115 : vector<32x1xf32> to vector<32x1xf32>
    %119 = vector.broadcast %118 : vector<32x1xf32> to vector<32x2xf32>
    %120 = vector.broadcast %cst_35 : f32 to vector<32x2xf32>
    %121 = arith.select %117, %119, %120 : vector<32x2xi1>, vector<32x2xf32>
    %cst_36 = arith.constant dense<0xFF800000> : vector<2xf32>
    %122 = vector.multi_reduction <maximumf>, %121, %cst_36 [0] : vector<32x2xf32> to vector<2xf32>
    %123 = vector.shape_cast %122 : vector<2xf32> to vector<1x2xf32>
    %124 = vector.broadcast %123 : vector<1x2xf32> to vector<32x2xf32>
    %125 = arith.mulf %3, %124 : vector<32x2xf32>
    %cst_37 = arith.constant dense<0.000000e+00> : vector<32xf32>
    %126 = vector.multi_reduction <add>, %125, %cst_37 [1] : vector<32x2xf32> to vector<32xf32>
    %127 = vector.shape_cast %126 : vector<32xf32> to vector<32x1xf32>
    %128 = arith.cmpf oge, %115, %127 : vector<32x1xf32>
    %cst_38 = arith.constant 1.600000e+01 : f32
    %129 = vector.broadcast %cst_38 : f32 to vector<32x1xf32>
    %130 = arith.select %128, %4, %129 : vector<32x1xi1>, vector<32x1xf32>
    %cst_39 = arith.constant 5.000000e-01 : f32
    %131 = vector.broadcast %cst_39 : f32 to vector<32x2xf32>
    %132 = arith.cmpf ogt, %3, %131 : vector<32x2xf32>
    %cst_40 = arith.constant 1.600000e+01 : f32
    %133 = vector.shape_cast %130 : vector<32x1xf32> to vector<32x1xf32>
    %134 = vector.broadcast %133 : vector<32x1xf32> to vector<32x2xf32>
    %135 = vector.broadcast %cst_40 : f32 to vector<32x2xf32>
    %136 = arith.select %132, %134, %135 : vector<32x2xi1>, vector<32x2xf32>
    %cst_41 = arith.constant dense<0x7F800000> : vector<2xf32>
    %137 = vector.multi_reduction <minimumf>, %136, %cst_41 [0] : vector<32x2xf32> to vector<2xf32>
    %138 = vector.shape_cast %137 : vector<2xf32> to vector<1x2xf32>
    %139 = vector.broadcast %138 : vector<1x2xf32> to vector<32x2xf32>
    %140 = arith.mulf %3, %139 : vector<32x2xf32>
    %cst_42 = arith.constant dense<0.000000e+00> : vector<32xf32>
    %141 = vector.multi_reduction <add>, %140, %cst_42 [1] : vector<32x2xf32> to vector<32xf32>
    %142 = vector.shape_cast %141 : vector<32xf32> to vector<32x1xf32>
    %143 = arith.cmpf oeq, %4, %142 : vector<32x1xf32>
    %144 = arith.extui %143 : vector<32x1xi1> to vector<32x1xi32>
    %145 = arith.sitofp %144 : vector<32x1xi32> to vector<32x1xf32>
    %146 = vector.broadcast %145 : vector<32x1xf32> to vector<32x3xf32>
    %147 = arith.mulf %146, %0 : vector<32x3xf32>
    %cst_43 = arith.constant dense<0.000000e+00> : vector<32x3xf32>
    %148 = tpu.matmul %2, %147, %cst_43 {dimension_numbers = #tpu.dot_dimension_numbers<[1], [0], [0], [1], [0, 0, 1, 1], [], []>} : vector<32x32xf32>, vector<32x3xf32>, vector<32x3xf32> -> vector<32x3xf32>
    %cst_44 = arith.constant 3.000000e+00 : f32
    %149 = vector.broadcast %cst_44 : f32 to vector<32x1xf32>
    %150 = arith.cmpf oeq, %4, %149 : vector<32x1xf32>
    %151 = arith.extui %150 : vector<32x1xi1> to vector<32x1xi32>
    %152 = arith.sitofp %151 : vector<32x1xi32> to vector<32x1xf32>
    %153 = vector.broadcast %152 : vector<32x1xf32> to vector<32x3xf32>
    %154 = arith.mulf %153, %148 : vector<32x3xf32>
    %155 = arith.addf %110, %154 : vector<32x3xf32>
    %156 = arith.subf %0, %148 : vector<32x3xf32>
    %157 = arith.mulf %156, %156 : vector<32x3xf32>
    %cst_45 = arith.constant dense<0.000000e+00> : vector<32xf32>
    %158 = vector.multi_reduction <add>, %157, %cst_45 [1] : vector<32x3xf32> to vector<32xf32>
    %159 = vector.shape_cast %158 : vector<32xf32> to vector<32x1xf32>
    %160 = arith.minimumf %115, %159 : vector<32x1xf32>
    %cst_46 = arith.constant 5.000000e-01 : f32
    %161 = vector.broadcast %cst_46 : f32 to vector<32x2xf32>
    %162 = arith.cmpf ogt, %3, %161 : vector<32x2xf32>
    %cst_47 = arith.constant -1.000000e+30 : f32
    %163 = vector.shape_cast %160 : vector<32x1xf32> to vector<32x1xf32>
    %164 = vector.broadcast %163 : vector<32x1xf32> to vector<32x2xf32>
    %165 = vector.broadcast %cst_47 : f32 to vector<32x2xf32>
    %166 = arith.select %162, %164, %165 : vector<32x2xi1>, vector<32x2xf32>
    %cst_48 = arith.constant dense<0xFF800000> : vector<2xf32>
    %167 = vector.multi_reduction <maximumf>, %166, %cst_48 [0] : vector<32x2xf32> to vector<2xf32>
    %168 = vector.shape_cast %167 : vector<2xf32> to vector<1x2xf32>
    %169 = vector.broadcast %168 : vector<1x2xf32> to vector<32x2xf32>
    %170 = arith.mulf %3, %169 : vector<32x2xf32>
    %cst_49 = arith.constant dense<0.000000e+00> : vector<32xf32>
    %171 = vector.multi_reduction <add>, %170, %cst_49 [1] : vector<32x2xf32> to vector<32xf32>
    %172 = vector.shape_cast %171 : vector<32xf32> to vector<32x1xf32>
    %173 = arith.cmpf oge, %160, %172 : vector<32x1xf32>
    %cst_50 = arith.constant 1.600000e+01 : f32
    %174 = vector.broadcast %cst_50 : f32 to vector<32x1xf32>
    %175 = arith.select %173, %4, %174 : vector<32x1xi1>, vector<32x1xf32>
    %cst_51 = arith.constant 5.000000e-01 : f32
    %176 = vector.broadcast %cst_51 : f32 to vector<32x2xf32>
    %177 = arith.cmpf ogt, %3, %176 : vector<32x2xf32>
    %cst_52 = arith.constant 1.600000e+01 : f32
    %178 = vector.shape_cast %175 : vector<32x1xf32> to vector<32x1xf32>
    %179 = vector.broadcast %178 : vector<32x1xf32> to vector<32x2xf32>
    %180 = vector.broadcast %cst_52 : f32 to vector<32x2xf32>
    %181 = arith.select %177, %179, %180 : vector<32x2xi1>, vector<32x2xf32>
    %cst_53 = arith.constant dense<0x7F800000> : vector<2xf32>
    %182 = vector.multi_reduction <minimumf>, %181, %cst_53 [0] : vector<32x2xf32> to vector<2xf32>
    %183 = vector.shape_cast %182 : vector<2xf32> to vector<1x2xf32>
    %184 = vector.broadcast %183 : vector<1x2xf32> to vector<32x2xf32>
    %185 = arith.mulf %3, %184 : vector<32x2xf32>
    %cst_54 = arith.constant dense<0.000000e+00> : vector<32xf32>
    %186 = vector.multi_reduction <add>, %185, %cst_54 [1] : vector<32x2xf32> to vector<32xf32>
    %187 = vector.shape_cast %186 : vector<32xf32> to vector<32x1xf32>
    %188 = arith.cmpf oeq, %4, %187 : vector<32x1xf32>
    %189 = arith.extui %188 : vector<32x1xi1> to vector<32x1xi32>
    %190 = arith.sitofp %189 : vector<32x1xi32> to vector<32x1xf32>
    %191 = vector.broadcast %190 : vector<32x1xf32> to vector<32x3xf32>
    %192 = arith.mulf %191, %0 : vector<32x3xf32>
    %cst_55 = arith.constant dense<0.000000e+00> : vector<32x3xf32>
    %193 = tpu.matmul %2, %192, %cst_55 {dimension_numbers = #tpu.dot_dimension_numbers<[1], [0], [0], [1], [0, 0, 1, 1], [], []>} : vector<32x32xf32>, vector<32x3xf32>, vector<32x3xf32> -> vector<32x3xf32>
    %cst_56 = arith.constant 4.000000e+00 : f32
    %194 = vector.broadcast %cst_56 : f32 to vector<32x1xf32>
    %195 = arith.cmpf oeq, %4, %194 : vector<32x1xf32>
    %196 = arith.extui %195 : vector<32x1xi1> to vector<32x1xi32>
    %197 = arith.sitofp %196 : vector<32x1xi32> to vector<32x1xf32>
    %198 = vector.broadcast %197 : vector<32x1xf32> to vector<32x3xf32>
    %199 = arith.mulf %198, %193 : vector<32x3xf32>
    %200 = arith.addf %155, %199 : vector<32x3xf32>
    %201 = arith.subf %0, %193 : vector<32x3xf32>
    %202 = arith.mulf %201, %201 : vector<32x3xf32>
    %cst_57 = arith.constant dense<0.000000e+00> : vector<32xf32>
    %203 = vector.multi_reduction <add>, %202, %cst_57 [1] : vector<32x3xf32> to vector<32xf32>
    %204 = vector.shape_cast %203 : vector<32xf32> to vector<32x1xf32>
    %205 = arith.minimumf %160, %204 : vector<32x1xf32>
    %cst_58 = arith.constant 5.000000e-01 : f32
    %206 = vector.broadcast %cst_58 : f32 to vector<32x2xf32>
    %207 = arith.cmpf ogt, %3, %206 : vector<32x2xf32>
    %cst_59 = arith.constant -1.000000e+30 : f32
    %208 = vector.shape_cast %205 : vector<32x1xf32> to vector<32x1xf32>
    %209 = vector.broadcast %208 : vector<32x1xf32> to vector<32x2xf32>
    %210 = vector.broadcast %cst_59 : f32 to vector<32x2xf32>
    %211 = arith.select %207, %209, %210 : vector<32x2xi1>, vector<32x2xf32>
    %cst_60 = arith.constant dense<0xFF800000> : vector<2xf32>
    %212 = vector.multi_reduction <maximumf>, %211, %cst_60 [0] : vector<32x2xf32> to vector<2xf32>
    %213 = vector.shape_cast %212 : vector<2xf32> to vector<1x2xf32>
    %214 = vector.broadcast %213 : vector<1x2xf32> to vector<32x2xf32>
    %215 = arith.mulf %3, %214 : vector<32x2xf32>
    %cst_61 = arith.constant dense<0.000000e+00> : vector<32xf32>
    %216 = vector.multi_reduction <add>, %215, %cst_61 [1] : vector<32x2xf32> to vector<32xf32>
    %217 = vector.shape_cast %216 : vector<32xf32> to vector<32x1xf32>
    %218 = arith.cmpf oge, %205, %217 : vector<32x1xf32>
    %cst_62 = arith.constant 1.600000e+01 : f32
    %219 = vector.broadcast %cst_62 : f32 to vector<32x1xf32>
    %220 = arith.select %218, %4, %219 : vector<32x1xi1>, vector<32x1xf32>
    %cst_63 = arith.constant 5.000000e-01 : f32
    %221 = vector.broadcast %cst_63 : f32 to vector<32x2xf32>
    %222 = arith.cmpf ogt, %3, %221 : vector<32x2xf32>
    %cst_64 = arith.constant 1.600000e+01 : f32
    %223 = vector.shape_cast %220 : vector<32x1xf32> to vector<32x1xf32>
    %224 = vector.broadcast %223 : vector<32x1xf32> to vector<32x2xf32>
    %225 = vector.broadcast %cst_64 : f32 to vector<32x2xf32>
    %226 = arith.select %222, %224, %225 : vector<32x2xi1>, vector<32x2xf32>
    %cst_65 = arith.constant dense<0x7F800000> : vector<2xf32>
    %227 = vector.multi_reduction <minimumf>, %226, %cst_65 [0] : vector<32x2xf32> to vector<2xf32>
    %228 = vector.shape_cast %227 : vector<2xf32> to vector<1x2xf32>
    %229 = vector.broadcast %228 : vector<1x2xf32> to vector<32x2xf32>
    %230 = arith.mulf %3, %229 : vector<32x2xf32>
    %cst_66 = arith.constant dense<0.000000e+00> : vector<32xf32>
    %231 = vector.multi_reduction <add>, %230, %cst_66 [1] : vector<32x2xf32> to vector<32xf32>
    %232 = vector.shape_cast %231 : vector<32xf32> to vector<32x1xf32>
    %233 = arith.cmpf oeq, %4, %232 : vector<32x1xf32>
    %234 = arith.extui %233 : vector<32x1xi1> to vector<32x1xi32>
    %235 = arith.sitofp %234 : vector<32x1xi32> to vector<32x1xf32>
    %236 = vector.broadcast %235 : vector<32x1xf32> to vector<32x3xf32>
    %237 = arith.mulf %236, %0 : vector<32x3xf32>
    %cst_67 = arith.constant dense<0.000000e+00> : vector<32x3xf32>
    %238 = tpu.matmul %2, %237, %cst_67 {dimension_numbers = #tpu.dot_dimension_numbers<[1], [0], [0], [1], [0, 0, 1, 1], [], []>} : vector<32x32xf32>, vector<32x3xf32>, vector<32x3xf32> -> vector<32x3xf32>
    %cst_68 = arith.constant 5.000000e+00 : f32
    %239 = vector.broadcast %cst_68 : f32 to vector<32x1xf32>
    %240 = arith.cmpf oeq, %4, %239 : vector<32x1xf32>
    %241 = arith.extui %240 : vector<32x1xi1> to vector<32x1xi32>
    %242 = arith.sitofp %241 : vector<32x1xi32> to vector<32x1xf32>
    %243 = vector.broadcast %242 : vector<32x1xf32> to vector<32x3xf32>
    %244 = arith.mulf %243, %238 : vector<32x3xf32>
    %245 = arith.addf %200, %244 : vector<32x3xf32>
    %246 = arith.subf %0, %238 : vector<32x3xf32>
    %247 = arith.mulf %246, %246 : vector<32x3xf32>
    %cst_69 = arith.constant dense<0.000000e+00> : vector<32xf32>
    %248 = vector.multi_reduction <add>, %247, %cst_69 [1] : vector<32x3xf32> to vector<32xf32>
    %249 = vector.shape_cast %248 : vector<32xf32> to vector<32x1xf32>
    %250 = arith.minimumf %205, %249 : vector<32x1xf32>
    %cst_70 = arith.constant 5.000000e-01 : f32
    %251 = vector.broadcast %cst_70 : f32 to vector<32x2xf32>
    %252 = arith.cmpf ogt, %3, %251 : vector<32x2xf32>
    %cst_71 = arith.constant -1.000000e+30 : f32
    %253 = vector.shape_cast %250 : vector<32x1xf32> to vector<32x1xf32>
    %254 = vector.broadcast %253 : vector<32x1xf32> to vector<32x2xf32>
    %255 = vector.broadcast %cst_71 : f32 to vector<32x2xf32>
    %256 = arith.select %252, %254, %255 : vector<32x2xi1>, vector<32x2xf32>
    %cst_72 = arith.constant dense<0xFF800000> : vector<2xf32>
    %257 = vector.multi_reduction <maximumf>, %256, %cst_72 [0] : vector<32x2xf32> to vector<2xf32>
    %258 = vector.shape_cast %257 : vector<2xf32> to vector<1x2xf32>
    %259 = vector.broadcast %258 : vector<1x2xf32> to vector<32x2xf32>
    %260 = arith.mulf %3, %259 : vector<32x2xf32>
    %cst_73 = arith.constant dense<0.000000e+00> : vector<32xf32>
    %261 = vector.multi_reduction <add>, %260, %cst_73 [1] : vector<32x2xf32> to vector<32xf32>
    %262 = vector.shape_cast %261 : vector<32xf32> to vector<32x1xf32>
    %263 = arith.cmpf oge, %250, %262 : vector<32x1xf32>
    %cst_74 = arith.constant 1.600000e+01 : f32
    %264 = vector.broadcast %cst_74 : f32 to vector<32x1xf32>
    %265 = arith.select %263, %4, %264 : vector<32x1xi1>, vector<32x1xf32>
    %cst_75 = arith.constant 5.000000e-01 : f32
    %266 = vector.broadcast %cst_75 : f32 to vector<32x2xf32>
    %267 = arith.cmpf ogt, %3, %266 : vector<32x2xf32>
    %cst_76 = arith.constant 1.600000e+01 : f32
    %268 = vector.shape_cast %265 : vector<32x1xf32> to vector<32x1xf32>
    %269 = vector.broadcast %268 : vector<32x1xf32> to vector<32x2xf32>
    %270 = vector.broadcast %cst_76 : f32 to vector<32x2xf32>
    %271 = arith.select %267, %269, %270 : vector<32x2xi1>, vector<32x2xf32>
    %cst_77 = arith.constant dense<0x7F800000> : vector<2xf32>
    %272 = vector.multi_reduction <minimumf>, %271, %cst_77 [0] : vector<32x2xf32> to vector<2xf32>
    %273 = vector.shape_cast %272 : vector<2xf32> to vector<1x2xf32>
    %274 = vector.broadcast %273 : vector<1x2xf32> to vector<32x2xf32>
    %275 = arith.mulf %3, %274 : vector<32x2xf32>
    %cst_78 = arith.constant dense<0.000000e+00> : vector<32xf32>
    %276 = vector.multi_reduction <add>, %275, %cst_78 [1] : vector<32x2xf32> to vector<32xf32>
    %277 = vector.shape_cast %276 : vector<32xf32> to vector<32x1xf32>
    %278 = arith.cmpf oeq, %4, %277 : vector<32x1xf32>
    %279 = arith.extui %278 : vector<32x1xi1> to vector<32x1xi32>
    %280 = arith.sitofp %279 : vector<32x1xi32> to vector<32x1xf32>
    %281 = vector.broadcast %280 : vector<32x1xf32> to vector<32x3xf32>
    %282 = arith.mulf %281, %0 : vector<32x3xf32>
    %cst_79 = arith.constant dense<0.000000e+00> : vector<32x3xf32>
    %283 = tpu.matmul %2, %282, %cst_79 {dimension_numbers = #tpu.dot_dimension_numbers<[1], [0], [0], [1], [0, 0, 1, 1], [], []>} : vector<32x32xf32>, vector<32x3xf32>, vector<32x3xf32> -> vector<32x3xf32>
    %cst_80 = arith.constant 6.000000e+00 : f32
    %284 = vector.broadcast %cst_80 : f32 to vector<32x1xf32>
    %285 = arith.cmpf oeq, %4, %284 : vector<32x1xf32>
    %286 = arith.extui %285 : vector<32x1xi1> to vector<32x1xi32>
    %287 = arith.sitofp %286 : vector<32x1xi32> to vector<32x1xf32>
    %288 = vector.broadcast %287 : vector<32x1xf32> to vector<32x3xf32>
    %289 = arith.mulf %288, %283 : vector<32x3xf32>
    %290 = arith.addf %245, %289 : vector<32x3xf32>
    %291 = arith.subf %0, %283 : vector<32x3xf32>
    %292 = arith.mulf %291, %291 : vector<32x3xf32>
    %cst_81 = arith.constant dense<0.000000e+00> : vector<32xf32>
    %293 = vector.multi_reduction <add>, %292, %cst_81 [1] : vector<32x3xf32> to vector<32xf32>
    %294 = vector.shape_cast %293 : vector<32xf32> to vector<32x1xf32>
    %295 = arith.minimumf %250, %294 : vector<32x1xf32>
    %cst_82 = arith.constant 5.000000e-01 : f32
    %296 = vector.broadcast %cst_82 : f32 to vector<32x2xf32>
    %297 = arith.cmpf ogt, %3, %296 : vector<32x2xf32>
    %cst_83 = arith.constant -1.000000e+30 : f32
    %298 = vector.shape_cast %295 : vector<32x1xf32> to vector<32x1xf32>
    %299 = vector.broadcast %298 : vector<32x1xf32> to vector<32x2xf32>
    %300 = vector.broadcast %cst_83 : f32 to vector<32x2xf32>
    %301 = arith.select %297, %299, %300 : vector<32x2xi1>, vector<32x2xf32>
    %cst_84 = arith.constant dense<0xFF800000> : vector<2xf32>
    %302 = vector.multi_reduction <maximumf>, %301, %cst_84 [0] : vector<32x2xf32> to vector<2xf32>
    %303 = vector.shape_cast %302 : vector<2xf32> to vector<1x2xf32>
    %304 = vector.broadcast %303 : vector<1x2xf32> to vector<32x2xf32>
    %305 = arith.mulf %3, %304 : vector<32x2xf32>
    %cst_85 = arith.constant dense<0.000000e+00> : vector<32xf32>
    %306 = vector.multi_reduction <add>, %305, %cst_85 [1] : vector<32x2xf32> to vector<32xf32>
    %307 = vector.shape_cast %306 : vector<32xf32> to vector<32x1xf32>
    %308 = arith.cmpf oge, %295, %307 : vector<32x1xf32>
    %cst_86 = arith.constant 1.600000e+01 : f32
    %309 = vector.broadcast %cst_86 : f32 to vector<32x1xf32>
    %310 = arith.select %308, %4, %309 : vector<32x1xi1>, vector<32x1xf32>
    %cst_87 = arith.constant 5.000000e-01 : f32
    %311 = vector.broadcast %cst_87 : f32 to vector<32x2xf32>
    %312 = arith.cmpf ogt, %3, %311 : vector<32x2xf32>
    %cst_88 = arith.constant 1.600000e+01 : f32
    %313 = vector.shape_cast %310 : vector<32x1xf32> to vector<32x1xf32>
    %314 = vector.broadcast %313 : vector<32x1xf32> to vector<32x2xf32>
    %315 = vector.broadcast %cst_88 : f32 to vector<32x2xf32>
    %316 = arith.select %312, %314, %315 : vector<32x2xi1>, vector<32x2xf32>
    %cst_89 = arith.constant dense<0x7F800000> : vector<2xf32>
    %317 = vector.multi_reduction <minimumf>, %316, %cst_89 [0] : vector<32x2xf32> to vector<2xf32>
    %318 = vector.shape_cast %317 : vector<2xf32> to vector<1x2xf32>
    %319 = vector.broadcast %318 : vector<1x2xf32> to vector<32x2xf32>
    %320 = arith.mulf %3, %319 : vector<32x2xf32>
    %cst_90 = arith.constant dense<0.000000e+00> : vector<32xf32>
    %321 = vector.multi_reduction <add>, %320, %cst_90 [1] : vector<32x2xf32> to vector<32xf32>
    %322 = vector.shape_cast %321 : vector<32xf32> to vector<32x1xf32>
    %323 = arith.cmpf oeq, %4, %322 : vector<32x1xf32>
    %324 = arith.extui %323 : vector<32x1xi1> to vector<32x1xi32>
    %325 = arith.sitofp %324 : vector<32x1xi32> to vector<32x1xf32>
    %326 = vector.broadcast %325 : vector<32x1xf32> to vector<32x3xf32>
    %327 = arith.mulf %326, %0 : vector<32x3xf32>
    %cst_91 = arith.constant dense<0.000000e+00> : vector<32x3xf32>
    %328 = tpu.matmul %2, %327, %cst_91 {dimension_numbers = #tpu.dot_dimension_numbers<[1], [0], [0], [1], [0, 0, 1, 1], [], []>} : vector<32x32xf32>, vector<32x3xf32>, vector<32x3xf32> -> vector<32x3xf32>
    %cst_92 = arith.constant 7.000000e+00 : f32
    %329 = vector.broadcast %cst_92 : f32 to vector<32x1xf32>
    %330 = arith.cmpf oeq, %4, %329 : vector<32x1xf32>
    %331 = arith.extui %330 : vector<32x1xi1> to vector<32x1xi32>
    %332 = arith.sitofp %331 : vector<32x1xi32> to vector<32x1xf32>
    %333 = vector.broadcast %332 : vector<32x1xf32> to vector<32x3xf32>
    %334 = arith.mulf %333, %328 : vector<32x3xf32>
    %335 = arith.addf %290, %334 : vector<32x3xf32>
    %336 = arith.subf %0, %328 : vector<32x3xf32>
    %337 = arith.mulf %336, %336 : vector<32x3xf32>
    %cst_93 = arith.constant dense<0.000000e+00> : vector<32xf32>
    %338 = vector.multi_reduction <add>, %337, %cst_93 [1] : vector<32x3xf32> to vector<32xf32>
    %339 = vector.shape_cast %338 : vector<32xf32> to vector<32x1xf32>
    %340 = arith.minimumf %295, %339 : vector<32x1xf32>
    %cst_94 = arith.constant 5.000000e-01 : f32
    %341 = vector.broadcast %cst_94 : f32 to vector<32x2xf32>
    %342 = arith.cmpf ogt, %3, %341 : vector<32x2xf32>
    %cst_95 = arith.constant -1.000000e+30 : f32
    %343 = vector.shape_cast %340 : vector<32x1xf32> to vector<32x1xf32>
    %344 = vector.broadcast %343 : vector<32x1xf32> to vector<32x2xf32>
    %345 = vector.broadcast %cst_95 : f32 to vector<32x2xf32>
    %346 = arith.select %342, %344, %345 : vector<32x2xi1>, vector<32x2xf32>
    %cst_96 = arith.constant dense<0xFF800000> : vector<2xf32>
    %347 = vector.multi_reduction <maximumf>, %346, %cst_96 [0] : vector<32x2xf32> to vector<2xf32>
    %348 = vector.shape_cast %347 : vector<2xf32> to vector<1x2xf32>
    %349 = vector.broadcast %348 : vector<1x2xf32> to vector<32x2xf32>
    %350 = arith.mulf %3, %349 : vector<32x2xf32>
    %cst_97 = arith.constant dense<0.000000e+00> : vector<32xf32>
    %351 = vector.multi_reduction <add>, %350, %cst_97 [1] : vector<32x2xf32> to vector<32xf32>
    %352 = vector.shape_cast %351 : vector<32xf32> to vector<32x1xf32>
    %353 = arith.cmpf oge, %340, %352 : vector<32x1xf32>
    %cst_98 = arith.constant 1.600000e+01 : f32
    %354 = vector.broadcast %cst_98 : f32 to vector<32x1xf32>
    %355 = arith.select %353, %4, %354 : vector<32x1xi1>, vector<32x1xf32>
    %cst_99 = arith.constant 5.000000e-01 : f32
    %356 = vector.broadcast %cst_99 : f32 to vector<32x2xf32>
    %357 = arith.cmpf ogt, %3, %356 : vector<32x2xf32>
    %cst_100 = arith.constant 1.600000e+01 : f32
    %358 = vector.shape_cast %355 : vector<32x1xf32> to vector<32x1xf32>
    %359 = vector.broadcast %358 : vector<32x1xf32> to vector<32x2xf32>
    %360 = vector.broadcast %cst_100 : f32 to vector<32x2xf32>
    %361 = arith.select %357, %359, %360 : vector<32x2xi1>, vector<32x2xf32>
    %cst_101 = arith.constant dense<0x7F800000> : vector<2xf32>
    %362 = vector.multi_reduction <minimumf>, %361, %cst_101 [0] : vector<32x2xf32> to vector<2xf32>
    %363 = vector.shape_cast %362 : vector<2xf32> to vector<1x2xf32>
    %364 = vector.broadcast %363 : vector<1x2xf32> to vector<32x2xf32>
    %365 = arith.mulf %3, %364 : vector<32x2xf32>
    %cst_102 = arith.constant dense<0.000000e+00> : vector<32xf32>
    %366 = vector.multi_reduction <add>, %365, %cst_102 [1] : vector<32x2xf32> to vector<32xf32>
    %367 = vector.shape_cast %366 : vector<32xf32> to vector<32x1xf32>
    %368 = arith.cmpf oeq, %4, %367 : vector<32x1xf32>
    %369 = arith.extui %368 : vector<32x1xi1> to vector<32x1xi32>
    %370 = arith.sitofp %369 : vector<32x1xi32> to vector<32x1xf32>
    %371 = vector.broadcast %370 : vector<32x1xf32> to vector<32x3xf32>
    %372 = arith.mulf %371, %0 : vector<32x3xf32>
    %cst_103 = arith.constant dense<0.000000e+00> : vector<32x3xf32>
    %373 = tpu.matmul %2, %372, %cst_103 {dimension_numbers = #tpu.dot_dimension_numbers<[1], [0], [0], [1], [0, 0, 1, 1], [], []>} : vector<32x32xf32>, vector<32x3xf32>, vector<32x3xf32> -> vector<32x3xf32>
    %cst_104 = arith.constant 8.000000e+00 : f32
    %374 = vector.broadcast %cst_104 : f32 to vector<32x1xf32>
    %375 = arith.cmpf oeq, %4, %374 : vector<32x1xf32>
    %376 = arith.extui %375 : vector<32x1xi1> to vector<32x1xi32>
    %377 = arith.sitofp %376 : vector<32x1xi32> to vector<32x1xf32>
    %378 = vector.broadcast %377 : vector<32x1xf32> to vector<32x3xf32>
    %379 = arith.mulf %378, %373 : vector<32x3xf32>
    %380 = arith.addf %335, %379 : vector<32x3xf32>
    %381 = arith.subf %0, %373 : vector<32x3xf32>
    %382 = arith.mulf %381, %381 : vector<32x3xf32>
    %cst_105 = arith.constant dense<0.000000e+00> : vector<32xf32>
    %383 = vector.multi_reduction <add>, %382, %cst_105 [1] : vector<32x3xf32> to vector<32xf32>
    %384 = vector.shape_cast %383 : vector<32xf32> to vector<32x1xf32>
    %385 = arith.minimumf %340, %384 : vector<32x1xf32>
    %cst_106 = arith.constant 5.000000e-01 : f32
    %386 = vector.broadcast %cst_106 : f32 to vector<32x2xf32>
    %387 = arith.cmpf ogt, %3, %386 : vector<32x2xf32>
    %cst_107 = arith.constant -1.000000e+30 : f32
    %388 = vector.shape_cast %385 : vector<32x1xf32> to vector<32x1xf32>
    %389 = vector.broadcast %388 : vector<32x1xf32> to vector<32x2xf32>
    %390 = vector.broadcast %cst_107 : f32 to vector<32x2xf32>
    %391 = arith.select %387, %389, %390 : vector<32x2xi1>, vector<32x2xf32>
    %cst_108 = arith.constant dense<0xFF800000> : vector<2xf32>
    %392 = vector.multi_reduction <maximumf>, %391, %cst_108 [0] : vector<32x2xf32> to vector<2xf32>
    %393 = vector.shape_cast %392 : vector<2xf32> to vector<1x2xf32>
    %394 = vector.broadcast %393 : vector<1x2xf32> to vector<32x2xf32>
    %395 = arith.mulf %3, %394 : vector<32x2xf32>
    %cst_109 = arith.constant dense<0.000000e+00> : vector<32xf32>
    %396 = vector.multi_reduction <add>, %395, %cst_109 [1] : vector<32x2xf32> to vector<32xf32>
    %397 = vector.shape_cast %396 : vector<32xf32> to vector<32x1xf32>
    %398 = arith.cmpf oge, %385, %397 : vector<32x1xf32>
    %cst_110 = arith.constant 1.600000e+01 : f32
    %399 = vector.broadcast %cst_110 : f32 to vector<32x1xf32>
    %400 = arith.select %398, %4, %399 : vector<32x1xi1>, vector<32x1xf32>
    %cst_111 = arith.constant 5.000000e-01 : f32
    %401 = vector.broadcast %cst_111 : f32 to vector<32x2xf32>
    %402 = arith.cmpf ogt, %3, %401 : vector<32x2xf32>
    %cst_112 = arith.constant 1.600000e+01 : f32
    %403 = vector.shape_cast %400 : vector<32x1xf32> to vector<32x1xf32>
    %404 = vector.broadcast %403 : vector<32x1xf32> to vector<32x2xf32>
    %405 = vector.broadcast %cst_112 : f32 to vector<32x2xf32>
    %406 = arith.select %402, %404, %405 : vector<32x2xi1>, vector<32x2xf32>
    %cst_113 = arith.constant dense<0x7F800000> : vector<2xf32>
    %407 = vector.multi_reduction <minimumf>, %406, %cst_113 [0] : vector<32x2xf32> to vector<2xf32>
    %408 = vector.shape_cast %407 : vector<2xf32> to vector<1x2xf32>
    %409 = vector.broadcast %408 : vector<1x2xf32> to vector<32x2xf32>
    %410 = arith.mulf %3, %409 : vector<32x2xf32>
    %cst_114 = arith.constant dense<0.000000e+00> : vector<32xf32>
    %411 = vector.multi_reduction <add>, %410, %cst_114 [1] : vector<32x2xf32> to vector<32xf32>
    %412 = vector.shape_cast %411 : vector<32xf32> to vector<32x1xf32>
    %413 = arith.cmpf oeq, %4, %412 : vector<32x1xf32>
    %414 = arith.extui %413 : vector<32x1xi1> to vector<32x1xi32>
    %415 = arith.sitofp %414 : vector<32x1xi32> to vector<32x1xf32>
    %416 = vector.broadcast %415 : vector<32x1xf32> to vector<32x3xf32>
    %417 = arith.mulf %416, %0 : vector<32x3xf32>
    %cst_115 = arith.constant dense<0.000000e+00> : vector<32x3xf32>
    %418 = tpu.matmul %2, %417, %cst_115 {dimension_numbers = #tpu.dot_dimension_numbers<[1], [0], [0], [1], [0, 0, 1, 1], [], []>} : vector<32x32xf32>, vector<32x3xf32>, vector<32x3xf32> -> vector<32x3xf32>
    %cst_116 = arith.constant 9.000000e+00 : f32
    %419 = vector.broadcast %cst_116 : f32 to vector<32x1xf32>
    %420 = arith.cmpf oeq, %4, %419 : vector<32x1xf32>
    %421 = arith.extui %420 : vector<32x1xi1> to vector<32x1xi32>
    %422 = arith.sitofp %421 : vector<32x1xi32> to vector<32x1xf32>
    %423 = vector.broadcast %422 : vector<32x1xf32> to vector<32x3xf32>
    %424 = arith.mulf %423, %418 : vector<32x3xf32>
    %425 = arith.addf %380, %424 : vector<32x3xf32>
    %426 = arith.subf %0, %418 : vector<32x3xf32>
    %427 = arith.mulf %426, %426 : vector<32x3xf32>
    %cst_117 = arith.constant dense<0.000000e+00> : vector<32xf32>
    %428 = vector.multi_reduction <add>, %427, %cst_117 [1] : vector<32x3xf32> to vector<32xf32>
    %429 = vector.shape_cast %428 : vector<32xf32> to vector<32x1xf32>
    %430 = arith.minimumf %385, %429 : vector<32x1xf32>
    %cst_118 = arith.constant 5.000000e-01 : f32
    %431 = vector.broadcast %cst_118 : f32 to vector<32x2xf32>
    %432 = arith.cmpf ogt, %3, %431 : vector<32x2xf32>
    %cst_119 = arith.constant -1.000000e+30 : f32
    %433 = vector.shape_cast %430 : vector<32x1xf32> to vector<32x1xf32>
    %434 = vector.broadcast %433 : vector<32x1xf32> to vector<32x2xf32>
    %435 = vector.broadcast %cst_119 : f32 to vector<32x2xf32>
    %436 = arith.select %432, %434, %435 : vector<32x2xi1>, vector<32x2xf32>
    %cst_120 = arith.constant dense<0xFF800000> : vector<2xf32>
    %437 = vector.multi_reduction <maximumf>, %436, %cst_120 [0] : vector<32x2xf32> to vector<2xf32>
    %438 = vector.shape_cast %437 : vector<2xf32> to vector<1x2xf32>
    %439 = vector.broadcast %438 : vector<1x2xf32> to vector<32x2xf32>
    %440 = arith.mulf %3, %439 : vector<32x2xf32>
    %cst_121 = arith.constant dense<0.000000e+00> : vector<32xf32>
    %441 = vector.multi_reduction <add>, %440, %cst_121 [1] : vector<32x2xf32> to vector<32xf32>
    %442 = vector.shape_cast %441 : vector<32xf32> to vector<32x1xf32>
    %443 = arith.cmpf oge, %430, %442 : vector<32x1xf32>
    %cst_122 = arith.constant 1.600000e+01 : f32
    %444 = vector.broadcast %cst_122 : f32 to vector<32x1xf32>
    %445 = arith.select %443, %4, %444 : vector<32x1xi1>, vector<32x1xf32>
    %cst_123 = arith.constant 5.000000e-01 : f32
    %446 = vector.broadcast %cst_123 : f32 to vector<32x2xf32>
    %447 = arith.cmpf ogt, %3, %446 : vector<32x2xf32>
    %cst_124 = arith.constant 1.600000e+01 : f32
    %448 = vector.shape_cast %445 : vector<32x1xf32> to vector<32x1xf32>
    %449 = vector.broadcast %448 : vector<32x1xf32> to vector<32x2xf32>
    %450 = vector.broadcast %cst_124 : f32 to vector<32x2xf32>
    %451 = arith.select %447, %449, %450 : vector<32x2xi1>, vector<32x2xf32>
    %cst_125 = arith.constant dense<0x7F800000> : vector<2xf32>
    %452 = vector.multi_reduction <minimumf>, %451, %cst_125 [0] : vector<32x2xf32> to vector<2xf32>
    %453 = vector.shape_cast %452 : vector<2xf32> to vector<1x2xf32>
    %454 = vector.broadcast %453 : vector<1x2xf32> to vector<32x2xf32>
    %455 = arith.mulf %3, %454 : vector<32x2xf32>
    %cst_126 = arith.constant dense<0.000000e+00> : vector<32xf32>
    %456 = vector.multi_reduction <add>, %455, %cst_126 [1] : vector<32x2xf32> to vector<32xf32>
    %457 = vector.shape_cast %456 : vector<32xf32> to vector<32x1xf32>
    %458 = arith.cmpf oeq, %4, %457 : vector<32x1xf32>
    %459 = arith.extui %458 : vector<32x1xi1> to vector<32x1xi32>
    %460 = arith.sitofp %459 : vector<32x1xi32> to vector<32x1xf32>
    %461 = vector.broadcast %460 : vector<32x1xf32> to vector<32x3xf32>
    %462 = arith.mulf %461, %0 : vector<32x3xf32>
    %cst_127 = arith.constant dense<0.000000e+00> : vector<32x3xf32>
    %463 = tpu.matmul %2, %462, %cst_127 {dimension_numbers = #tpu.dot_dimension_numbers<[1], [0], [0], [1], [0, 0, 1, 1], [], []>} : vector<32x32xf32>, vector<32x3xf32>, vector<32x3xf32> -> vector<32x3xf32>
    %cst_128 = arith.constant 1.000000e+01 : f32
    %464 = vector.broadcast %cst_128 : f32 to vector<32x1xf32>
    %465 = arith.cmpf oeq, %4, %464 : vector<32x1xf32>
    %466 = arith.extui %465 : vector<32x1xi1> to vector<32x1xi32>
    %467 = arith.sitofp %466 : vector<32x1xi32> to vector<32x1xf32>
    %468 = vector.broadcast %467 : vector<32x1xf32> to vector<32x3xf32>
    %469 = arith.mulf %468, %463 : vector<32x3xf32>
    %470 = arith.addf %425, %469 : vector<32x3xf32>
    %471 = arith.subf %0, %463 : vector<32x3xf32>
    %472 = arith.mulf %471, %471 : vector<32x3xf32>
    %cst_129 = arith.constant dense<0.000000e+00> : vector<32xf32>
    %473 = vector.multi_reduction <add>, %472, %cst_129 [1] : vector<32x3xf32> to vector<32xf32>
    %474 = vector.shape_cast %473 : vector<32xf32> to vector<32x1xf32>
    %475 = arith.minimumf %430, %474 : vector<32x1xf32>
    %cst_130 = arith.constant 5.000000e-01 : f32
    %476 = vector.broadcast %cst_130 : f32 to vector<32x2xf32>
    %477 = arith.cmpf ogt, %3, %476 : vector<32x2xf32>
    %cst_131 = arith.constant -1.000000e+30 : f32
    %478 = vector.shape_cast %475 : vector<32x1xf32> to vector<32x1xf32>
    %479 = vector.broadcast %478 : vector<32x1xf32> to vector<32x2xf32>
    %480 = vector.broadcast %cst_131 : f32 to vector<32x2xf32>
    %481 = arith.select %477, %479, %480 : vector<32x2xi1>, vector<32x2xf32>
    %cst_132 = arith.constant dense<0xFF800000> : vector<2xf32>
    %482 = vector.multi_reduction <maximumf>, %481, %cst_132 [0] : vector<32x2xf32> to vector<2xf32>
    %483 = vector.shape_cast %482 : vector<2xf32> to vector<1x2xf32>
    %484 = vector.broadcast %483 : vector<1x2xf32> to vector<32x2xf32>
    %485 = arith.mulf %3, %484 : vector<32x2xf32>
    %cst_133 = arith.constant dense<0.000000e+00> : vector<32xf32>
    %486 = vector.multi_reduction <add>, %485, %cst_133 [1] : vector<32x2xf32> to vector<32xf32>
    %487 = vector.shape_cast %486 : vector<32xf32> to vector<32x1xf32>
    %488 = arith.cmpf oge, %475, %487 : vector<32x1xf32>
    %cst_134 = arith.constant 1.600000e+01 : f32
    %489 = vector.broadcast %cst_134 : f32 to vector<32x1xf32>
    %490 = arith.select %488, %4, %489 : vector<32x1xi1>, vector<32x1xf32>
    %cst_135 = arith.constant 5.000000e-01 : f32
    %491 = vector.broadcast %cst_135 : f32 to vector<32x2xf32>
    %492 = arith.cmpf ogt, %3, %491 : vector<32x2xf32>
    %cst_136 = arith.constant 1.600000e+01 : f32
    %493 = vector.shape_cast %490 : vector<32x1xf32> to vector<32x1xf32>
    %494 = vector.broadcast %493 : vector<32x1xf32> to vector<32x2xf32>
    %495 = vector.broadcast %cst_136 : f32 to vector<32x2xf32>
    %496 = arith.select %492, %494, %495 : vector<32x2xi1>, vector<32x2xf32>
    %cst_137 = arith.constant dense<0x7F800000> : vector<2xf32>
    %497 = vector.multi_reduction <minimumf>, %496, %cst_137 [0] : vector<32x2xf32> to vector<2xf32>
    %498 = vector.shape_cast %497 : vector<2xf32> to vector<1x2xf32>
    %499 = vector.broadcast %498 : vector<1x2xf32> to vector<32x2xf32>
    %500 = arith.mulf %3, %499 : vector<32x2xf32>
    %cst_138 = arith.constant dense<0.000000e+00> : vector<32xf32>
    %501 = vector.multi_reduction <add>, %500, %cst_138 [1] : vector<32x2xf32> to vector<32xf32>
    %502 = vector.shape_cast %501 : vector<32xf32> to vector<32x1xf32>
    %503 = arith.cmpf oeq, %4, %502 : vector<32x1xf32>
    %504 = arith.extui %503 : vector<32x1xi1> to vector<32x1xi32>
    %505 = arith.sitofp %504 : vector<32x1xi32> to vector<32x1xf32>
    %506 = vector.broadcast %505 : vector<32x1xf32> to vector<32x3xf32>
    %507 = arith.mulf %506, %0 : vector<32x3xf32>
    %cst_139 = arith.constant dense<0.000000e+00> : vector<32x3xf32>
    %508 = tpu.matmul %2, %507, %cst_139 {dimension_numbers = #tpu.dot_dimension_numbers<[1], [0], [0], [1], [0, 0, 1, 1], [], []>} : vector<32x32xf32>, vector<32x3xf32>, vector<32x3xf32> -> vector<32x3xf32>
    %cst_140 = arith.constant 1.100000e+01 : f32
    %509 = vector.broadcast %cst_140 : f32 to vector<32x1xf32>
    %510 = arith.cmpf oeq, %4, %509 : vector<32x1xf32>
    %511 = arith.extui %510 : vector<32x1xi1> to vector<32x1xi32>
    %512 = arith.sitofp %511 : vector<32x1xi32> to vector<32x1xf32>
    %513 = vector.broadcast %512 : vector<32x1xf32> to vector<32x3xf32>
    %514 = arith.mulf %513, %508 : vector<32x3xf32>
    %515 = arith.addf %470, %514 : vector<32x3xf32>
    %516 = arith.subf %0, %508 : vector<32x3xf32>
    %517 = arith.mulf %516, %516 : vector<32x3xf32>
    %cst_141 = arith.constant dense<0.000000e+00> : vector<32xf32>
    %518 = vector.multi_reduction <add>, %517, %cst_141 [1] : vector<32x3xf32> to vector<32xf32>
    %519 = vector.shape_cast %518 : vector<32xf32> to vector<32x1xf32>
    %520 = arith.minimumf %475, %519 : vector<32x1xf32>
    %cst_142 = arith.constant 5.000000e-01 : f32
    %521 = vector.broadcast %cst_142 : f32 to vector<32x2xf32>
    %522 = arith.cmpf ogt, %3, %521 : vector<32x2xf32>
    %cst_143 = arith.constant -1.000000e+30 : f32
    %523 = vector.shape_cast %520 : vector<32x1xf32> to vector<32x1xf32>
    %524 = vector.broadcast %523 : vector<32x1xf32> to vector<32x2xf32>
    %525 = vector.broadcast %cst_143 : f32 to vector<32x2xf32>
    %526 = arith.select %522, %524, %525 : vector<32x2xi1>, vector<32x2xf32>
    %cst_144 = arith.constant dense<0xFF800000> : vector<2xf32>
    %527 = vector.multi_reduction <maximumf>, %526, %cst_144 [0] : vector<32x2xf32> to vector<2xf32>
    %528 = vector.shape_cast %527 : vector<2xf32> to vector<1x2xf32>
    %529 = vector.broadcast %528 : vector<1x2xf32> to vector<32x2xf32>
    %530 = arith.mulf %3, %529 : vector<32x2xf32>
    %cst_145 = arith.constant dense<0.000000e+00> : vector<32xf32>
    %531 = vector.multi_reduction <add>, %530, %cst_145 [1] : vector<32x2xf32> to vector<32xf32>
    %532 = vector.shape_cast %531 : vector<32xf32> to vector<32x1xf32>
    %533 = arith.cmpf oge, %520, %532 : vector<32x1xf32>
    %cst_146 = arith.constant 1.600000e+01 : f32
    %534 = vector.broadcast %cst_146 : f32 to vector<32x1xf32>
    %535 = arith.select %533, %4, %534 : vector<32x1xi1>, vector<32x1xf32>
    %cst_147 = arith.constant 5.000000e-01 : f32
    %536 = vector.broadcast %cst_147 : f32 to vector<32x2xf32>
    %537 = arith.cmpf ogt, %3, %536 : vector<32x2xf32>
    %cst_148 = arith.constant 1.600000e+01 : f32
    %538 = vector.shape_cast %535 : vector<32x1xf32> to vector<32x1xf32>
    %539 = vector.broadcast %538 : vector<32x1xf32> to vector<32x2xf32>
    %540 = vector.broadcast %cst_148 : f32 to vector<32x2xf32>
    %541 = arith.select %537, %539, %540 : vector<32x2xi1>, vector<32x2xf32>
    %cst_149 = arith.constant dense<0x7F800000> : vector<2xf32>
    %542 = vector.multi_reduction <minimumf>, %541, %cst_149 [0] : vector<32x2xf32> to vector<2xf32>
    %543 = vector.shape_cast %542 : vector<2xf32> to vector<1x2xf32>
    %544 = vector.broadcast %543 : vector<1x2xf32> to vector<32x2xf32>
    %545 = arith.mulf %3, %544 : vector<32x2xf32>
    %cst_150 = arith.constant dense<0.000000e+00> : vector<32xf32>
    %546 = vector.multi_reduction <add>, %545, %cst_150 [1] : vector<32x2xf32> to vector<32xf32>
    %547 = vector.shape_cast %546 : vector<32xf32> to vector<32x1xf32>
    %548 = arith.cmpf oeq, %4, %547 : vector<32x1xf32>
    %549 = arith.extui %548 : vector<32x1xi1> to vector<32x1xi32>
    %550 = arith.sitofp %549 : vector<32x1xi32> to vector<32x1xf32>
    %551 = vector.broadcast %550 : vector<32x1xf32> to vector<32x3xf32>
    %552 = arith.mulf %551, %0 : vector<32x3xf32>
    %cst_151 = arith.constant dense<0.000000e+00> : vector<32x3xf32>
    %553 = tpu.matmul %2, %552, %cst_151 {dimension_numbers = #tpu.dot_dimension_numbers<[1], [0], [0], [1], [0, 0, 1, 1], [], []>} : vector<32x32xf32>, vector<32x3xf32>, vector<32x3xf32> -> vector<32x3xf32>
    %cst_152 = arith.constant 1.200000e+01 : f32
    %554 = vector.broadcast %cst_152 : f32 to vector<32x1xf32>
    %555 = arith.cmpf oeq, %4, %554 : vector<32x1xf32>
    %556 = arith.extui %555 : vector<32x1xi1> to vector<32x1xi32>
    %557 = arith.sitofp %556 : vector<32x1xi32> to vector<32x1xf32>
    %558 = vector.broadcast %557 : vector<32x1xf32> to vector<32x3xf32>
    %559 = arith.mulf %558, %553 : vector<32x3xf32>
    %560 = arith.addf %515, %559 : vector<32x3xf32>
    %561 = arith.subf %0, %553 : vector<32x3xf32>
    %562 = arith.mulf %561, %561 : vector<32x3xf32>
    %cst_153 = arith.constant dense<0.000000e+00> : vector<32xf32>
    %563 = vector.multi_reduction <add>, %562, %cst_153 [1] : vector<32x3xf32> to vector<32xf32>
    %564 = vector.shape_cast %563 : vector<32xf32> to vector<32x1xf32>
    %565 = arith.minimumf %520, %564 : vector<32x1xf32>
    %cst_154 = arith.constant 5.000000e-01 : f32
    %566 = vector.broadcast %cst_154 : f32 to vector<32x2xf32>
    %567 = arith.cmpf ogt, %3, %566 : vector<32x2xf32>
    %cst_155 = arith.constant -1.000000e+30 : f32
    %568 = vector.shape_cast %565 : vector<32x1xf32> to vector<32x1xf32>
    %569 = vector.broadcast %568 : vector<32x1xf32> to vector<32x2xf32>
    %570 = vector.broadcast %cst_155 : f32 to vector<32x2xf32>
    %571 = arith.select %567, %569, %570 : vector<32x2xi1>, vector<32x2xf32>
    %cst_156 = arith.constant dense<0xFF800000> : vector<2xf32>
    %572 = vector.multi_reduction <maximumf>, %571, %cst_156 [0] : vector<32x2xf32> to vector<2xf32>
    %573 = vector.shape_cast %572 : vector<2xf32> to vector<1x2xf32>
    %574 = vector.broadcast %573 : vector<1x2xf32> to vector<32x2xf32>
    %575 = arith.mulf %3, %574 : vector<32x2xf32>
    %cst_157 = arith.constant dense<0.000000e+00> : vector<32xf32>
    %576 = vector.multi_reduction <add>, %575, %cst_157 [1] : vector<32x2xf32> to vector<32xf32>
    %577 = vector.shape_cast %576 : vector<32xf32> to vector<32x1xf32>
    %578 = arith.cmpf oge, %565, %577 : vector<32x1xf32>
    %cst_158 = arith.constant 1.600000e+01 : f32
    %579 = vector.broadcast %cst_158 : f32 to vector<32x1xf32>
    %580 = arith.select %578, %4, %579 : vector<32x1xi1>, vector<32x1xf32>
    %cst_159 = arith.constant 5.000000e-01 : f32
    %581 = vector.broadcast %cst_159 : f32 to vector<32x2xf32>
    %582 = arith.cmpf ogt, %3, %581 : vector<32x2xf32>
    %cst_160 = arith.constant 1.600000e+01 : f32
    %583 = vector.shape_cast %580 : vector<32x1xf32> to vector<32x1xf32>
    %584 = vector.broadcast %583 : vector<32x1xf32> to vector<32x2xf32>
    %585 = vector.broadcast %cst_160 : f32 to vector<32x2xf32>
    %586 = arith.select %582, %584, %585 : vector<32x2xi1>, vector<32x2xf32>
    %cst_161 = arith.constant dense<0x7F800000> : vector<2xf32>
    %587 = vector.multi_reduction <minimumf>, %586, %cst_161 [0] : vector<32x2xf32> to vector<2xf32>
    %588 = vector.shape_cast %587 : vector<2xf32> to vector<1x2xf32>
    %589 = vector.broadcast %588 : vector<1x2xf32> to vector<32x2xf32>
    %590 = arith.mulf %3, %589 : vector<32x2xf32>
    %cst_162 = arith.constant dense<0.000000e+00> : vector<32xf32>
    %591 = vector.multi_reduction <add>, %590, %cst_162 [1] : vector<32x2xf32> to vector<32xf32>
    %592 = vector.shape_cast %591 : vector<32xf32> to vector<32x1xf32>
    %593 = arith.cmpf oeq, %4, %592 : vector<32x1xf32>
    %594 = arith.extui %593 : vector<32x1xi1> to vector<32x1xi32>
    %595 = arith.sitofp %594 : vector<32x1xi32> to vector<32x1xf32>
    %596 = vector.broadcast %595 : vector<32x1xf32> to vector<32x3xf32>
    %597 = arith.mulf %596, %0 : vector<32x3xf32>
    %cst_163 = arith.constant dense<0.000000e+00> : vector<32x3xf32>
    %598 = tpu.matmul %2, %597, %cst_163 {dimension_numbers = #tpu.dot_dimension_numbers<[1], [0], [0], [1], [0, 0, 1, 1], [], []>} : vector<32x32xf32>, vector<32x3xf32>, vector<32x3xf32> -> vector<32x3xf32>
    %cst_164 = arith.constant 1.300000e+01 : f32
    %599 = vector.broadcast %cst_164 : f32 to vector<32x1xf32>
    %600 = arith.cmpf oeq, %4, %599 : vector<32x1xf32>
    %601 = arith.extui %600 : vector<32x1xi1> to vector<32x1xi32>
    %602 = arith.sitofp %601 : vector<32x1xi32> to vector<32x1xf32>
    %603 = vector.broadcast %602 : vector<32x1xf32> to vector<32x3xf32>
    %604 = arith.mulf %603, %598 : vector<32x3xf32>
    %605 = arith.addf %560, %604 : vector<32x3xf32>
    %606 = arith.subf %0, %598 : vector<32x3xf32>
    %607 = arith.mulf %606, %606 : vector<32x3xf32>
    %cst_165 = arith.constant dense<0.000000e+00> : vector<32xf32>
    %608 = vector.multi_reduction <add>, %607, %cst_165 [1] : vector<32x3xf32> to vector<32xf32>
    %609 = vector.shape_cast %608 : vector<32xf32> to vector<32x1xf32>
    %610 = arith.minimumf %565, %609 : vector<32x1xf32>
    %cst_166 = arith.constant 5.000000e-01 : f32
    %611 = vector.broadcast %cst_166 : f32 to vector<32x2xf32>
    %612 = arith.cmpf ogt, %3, %611 : vector<32x2xf32>
    %cst_167 = arith.constant -1.000000e+30 : f32
    %613 = vector.shape_cast %610 : vector<32x1xf32> to vector<32x1xf32>
    %614 = vector.broadcast %613 : vector<32x1xf32> to vector<32x2xf32>
    %615 = vector.broadcast %cst_167 : f32 to vector<32x2xf32>
    %616 = arith.select %612, %614, %615 : vector<32x2xi1>, vector<32x2xf32>
    %cst_168 = arith.constant dense<0xFF800000> : vector<2xf32>
    %617 = vector.multi_reduction <maximumf>, %616, %cst_168 [0] : vector<32x2xf32> to vector<2xf32>
    %618 = vector.shape_cast %617 : vector<2xf32> to vector<1x2xf32>
    %619 = vector.broadcast %618 : vector<1x2xf32> to vector<32x2xf32>
    %620 = arith.mulf %3, %619 : vector<32x2xf32>
    %cst_169 = arith.constant dense<0.000000e+00> : vector<32xf32>
    %621 = vector.multi_reduction <add>, %620, %cst_169 [1] : vector<32x2xf32> to vector<32xf32>
    %622 = vector.shape_cast %621 : vector<32xf32> to vector<32x1xf32>
    %623 = arith.cmpf oge, %610, %622 : vector<32x1xf32>
    %cst_170 = arith.constant 1.600000e+01 : f32
    %624 = vector.broadcast %cst_170 : f32 to vector<32x1xf32>
    %625 = arith.select %623, %4, %624 : vector<32x1xi1>, vector<32x1xf32>
    %cst_171 = arith.constant 5.000000e-01 : f32
    %626 = vector.broadcast %cst_171 : f32 to vector<32x2xf32>
    %627 = arith.cmpf ogt, %3, %626 : vector<32x2xf32>
    %cst_172 = arith.constant 1.600000e+01 : f32
    %628 = vector.shape_cast %625 : vector<32x1xf32> to vector<32x1xf32>
    %629 = vector.broadcast %628 : vector<32x1xf32> to vector<32x2xf32>
    %630 = vector.broadcast %cst_172 : f32 to vector<32x2xf32>
    %631 = arith.select %627, %629, %630 : vector<32x2xi1>, vector<32x2xf32>
    %cst_173 = arith.constant dense<0x7F800000> : vector<2xf32>
    %632 = vector.multi_reduction <minimumf>, %631, %cst_173 [0] : vector<32x2xf32> to vector<2xf32>
    %633 = vector.shape_cast %632 : vector<2xf32> to vector<1x2xf32>
    %634 = vector.broadcast %633 : vector<1x2xf32> to vector<32x2xf32>
    %635 = arith.mulf %3, %634 : vector<32x2xf32>
    %cst_174 = arith.constant dense<0.000000e+00> : vector<32xf32>
    %636 = vector.multi_reduction <add>, %635, %cst_174 [1] : vector<32x2xf32> to vector<32xf32>
    %637 = vector.shape_cast %636 : vector<32xf32> to vector<32x1xf32>
    %638 = arith.cmpf oeq, %4, %637 : vector<32x1xf32>
    %639 = arith.extui %638 : vector<32x1xi1> to vector<32x1xi32>
    %640 = arith.sitofp %639 : vector<32x1xi32> to vector<32x1xf32>
    %641 = vector.broadcast %640 : vector<32x1xf32> to vector<32x3xf32>
    %642 = arith.mulf %641, %0 : vector<32x3xf32>
    %cst_175 = arith.constant dense<0.000000e+00> : vector<32x3xf32>
    %643 = tpu.matmul %2, %642, %cst_175 {dimension_numbers = #tpu.dot_dimension_numbers<[1], [0], [0], [1], [0, 0, 1, 1], [], []>} : vector<32x32xf32>, vector<32x3xf32>, vector<32x3xf32> -> vector<32x3xf32>
    %cst_176 = arith.constant 1.400000e+01 : f32
    %644 = vector.broadcast %cst_176 : f32 to vector<32x1xf32>
    %645 = arith.cmpf oeq, %4, %644 : vector<32x1xf32>
    %646 = arith.extui %645 : vector<32x1xi1> to vector<32x1xi32>
    %647 = arith.sitofp %646 : vector<32x1xi32> to vector<32x1xf32>
    %648 = vector.broadcast %647 : vector<32x1xf32> to vector<32x3xf32>
    %649 = arith.mulf %648, %643 : vector<32x3xf32>
    %650 = arith.addf %605, %649 : vector<32x3xf32>
    %651 = arith.subf %0, %643 : vector<32x3xf32>
    %652 = arith.mulf %651, %651 : vector<32x3xf32>
    %cst_177 = arith.constant dense<0.000000e+00> : vector<32xf32>
    %653 = vector.multi_reduction <add>, %652, %cst_177 [1] : vector<32x3xf32> to vector<32xf32>
    %654 = vector.shape_cast %653 : vector<32xf32> to vector<32x1xf32>
    %655 = arith.minimumf %610, %654 : vector<32x1xf32>
    %cst_178 = arith.constant 5.000000e-01 : f32
    %656 = vector.broadcast %cst_178 : f32 to vector<32x2xf32>
    %657 = arith.cmpf ogt, %3, %656 : vector<32x2xf32>
    %cst_179 = arith.constant -1.000000e+30 : f32
    %658 = vector.shape_cast %655 : vector<32x1xf32> to vector<32x1xf32>
    %659 = vector.broadcast %658 : vector<32x1xf32> to vector<32x2xf32>
    %660 = vector.broadcast %cst_179 : f32 to vector<32x2xf32>
    %661 = arith.select %657, %659, %660 : vector<32x2xi1>, vector<32x2xf32>
    %cst_180 = arith.constant dense<0xFF800000> : vector<2xf32>
    %662 = vector.multi_reduction <maximumf>, %661, %cst_180 [0] : vector<32x2xf32> to vector<2xf32>
    %663 = vector.shape_cast %662 : vector<2xf32> to vector<1x2xf32>
    %664 = vector.broadcast %663 : vector<1x2xf32> to vector<32x2xf32>
    %665 = arith.mulf %3, %664 : vector<32x2xf32>
    %cst_181 = arith.constant dense<0.000000e+00> : vector<32xf32>
    %666 = vector.multi_reduction <add>, %665, %cst_181 [1] : vector<32x2xf32> to vector<32xf32>
    %667 = vector.shape_cast %666 : vector<32xf32> to vector<32x1xf32>
    %668 = arith.cmpf oge, %655, %667 : vector<32x1xf32>
    %cst_182 = arith.constant 1.600000e+01 : f32
    %669 = vector.broadcast %cst_182 : f32 to vector<32x1xf32>
    %670 = arith.select %668, %4, %669 : vector<32x1xi1>, vector<32x1xf32>
    %cst_183 = arith.constant 5.000000e-01 : f32
    %671 = vector.broadcast %cst_183 : f32 to vector<32x2xf32>
    %672 = arith.cmpf ogt, %3, %671 : vector<32x2xf32>
    %cst_184 = arith.constant 1.600000e+01 : f32
    %673 = vector.shape_cast %670 : vector<32x1xf32> to vector<32x1xf32>
    %674 = vector.broadcast %673 : vector<32x1xf32> to vector<32x2xf32>
    %675 = vector.broadcast %cst_184 : f32 to vector<32x2xf32>
    %676 = arith.select %672, %674, %675 : vector<32x2xi1>, vector<32x2xf32>
    %cst_185 = arith.constant dense<0x7F800000> : vector<2xf32>
    %677 = vector.multi_reduction <minimumf>, %676, %cst_185 [0] : vector<32x2xf32> to vector<2xf32>
    %678 = vector.shape_cast %677 : vector<2xf32> to vector<1x2xf32>
    %679 = vector.broadcast %678 : vector<1x2xf32> to vector<32x2xf32>
    %680 = arith.mulf %3, %679 : vector<32x2xf32>
    %cst_186 = arith.constant dense<0.000000e+00> : vector<32xf32>
    %681 = vector.multi_reduction <add>, %680, %cst_186 [1] : vector<32x2xf32> to vector<32xf32>
    %682 = vector.shape_cast %681 : vector<32xf32> to vector<32x1xf32>
    %683 = arith.cmpf oeq, %4, %682 : vector<32x1xf32>
    %684 = arith.extui %683 : vector<32x1xi1> to vector<32x1xi32>
    %685 = arith.sitofp %684 : vector<32x1xi32> to vector<32x1xf32>
    %686 = vector.broadcast %685 : vector<32x1xf32> to vector<32x3xf32>
    %687 = arith.mulf %686, %0 : vector<32x3xf32>
    %cst_187 = arith.constant dense<0.000000e+00> : vector<32x3xf32>
    %688 = tpu.matmul %2, %687, %cst_187 {dimension_numbers = #tpu.dot_dimension_numbers<[1], [0], [0], [1], [0, 0, 1, 1], [], []>} : vector<32x32xf32>, vector<32x3xf32>, vector<32x3xf32> -> vector<32x3xf32>
    %cst_188 = arith.constant 1.500000e+01 : f32
    %689 = vector.broadcast %cst_188 : f32 to vector<32x1xf32>
    %690 = arith.cmpf oeq, %4, %689 : vector<32x1xf32>
    %691 = arith.extui %690 : vector<32x1xi1> to vector<32x1xi32>
    %692 = arith.sitofp %691 : vector<32x1xi32> to vector<32x1xf32>
    %693 = vector.broadcast %692 : vector<32x1xf32> to vector<32x3xf32>
    %694 = arith.mulf %693, %688 : vector<32x3xf32>
    %695 = arith.addf %650, %694 : vector<32x3xf32>
    %c48 = arith.constant 48 : index
    %c0_189 = arith.constant 0 : index
    %696 = vector.load %arg2[%c48, %c0_189] : memref<408x128xf32, #tpu.memory_space<vmem>>, vector<3x8xf32>
    %cst_190 = arith.constant dense<0.000000e+00> : vector<32x8xf32>
    %697 = tpu.matmul %695, %696, %cst_190 {dimension_numbers = #tpu.dot_dimension_numbers<[1], [0], [0], [1], [0, 0, 1, 1], [], []>} : vector<32x3xf32>, vector<3x8xf32>, vector<32x8xf32> -> vector<32x8xf32>
    %698 = arith.addf %697, %1 : vector<32x8xf32>
    %cst_191 = arith.constant dense<0.000000e+00> : vector<32xf32>
    %699 = vector.multi_reduction <add>, %698, %cst_191 [1] : vector<32x8xf32> to vector<32xf32>
    %700 = vector.shape_cast %699 : vector<32xf32> to vector<32x1xf32>
    %cst_192 = arith.constant 8.000000e+00 : f32
    %701 = vector.broadcast %cst_192 : f32 to vector<32x1xf32>
    %702 = arith.divf %700, %701 : vector<32x1xf32>
    %703 = vector.broadcast %702 : vector<32x1xf32> to vector<32x8xf32>
    %704 = arith.subf %698, %703 : vector<32x8xf32>
    %705 = arith.mulf %704, %704 : vector<32x8xf32>
    %cst_193 = arith.constant dense<0.000000e+00> : vector<32xf32>
    %706 = vector.multi_reduction <add>, %705, %cst_193 [1] : vector<32x8xf32> to vector<32xf32>
    %707 = vector.shape_cast %706 : vector<32xf32> to vector<32x1xf32>
    %cst_194 = arith.constant 8.000000e+00 : f32
    %708 = vector.broadcast %cst_194 : f32 to vector<32x1xf32>
    %709 = arith.divf %707, %708 : vector<32x1xf32>
    %710 = vector.broadcast %702 : vector<32x1xf32> to vector<32x8xf32>
    %711 = arith.subf %698, %710 : vector<32x8xf32>
    %cst_195 = arith.constant 9.99999974E-6 : f32
    %712 = vector.broadcast %cst_195 : f32 to vector<32x1xf32>
    %713 = arith.addf %709, %712 : vector<32x1xf32>
    %714 = math.rsqrt %713 : vector<32x1xf32>
    %715 = vector.broadcast %714 : vector<32x1xf32> to vector<32x8xf32>
    %716 = arith.mulf %711, %715 : vector<32x8xf32>
    %c288 = arith.constant 288 : index
    %c0_196 = arith.constant 0 : index
    %717 = vector.load %arg2[%c288, %c0_196] : memref<408x128xf32, #tpu.memory_space<vmem>>, vector<1x8xf32>
    %718 = vector.broadcast %717 : vector<1x8xf32> to vector<32x8xf32>
    %719 = arith.mulf %716, %718 : vector<32x8xf32>
    %c296 = arith.constant 296 : index
    %c0_197 = arith.constant 0 : index
    %720 = vector.load %arg2[%c296, %c0_197] : memref<408x128xf32, #tpu.memory_space<vmem>>, vector<1x8xf32>
    %721 = vector.broadcast %720 : vector<1x8xf32> to vector<32x8xf32>
    %722 = arith.addf %719, %721 : vector<32x8xf32>
    %c256 = arith.constant 256 : index
    %c0_198 = arith.constant 0 : index
    %723 = vector.load %arg2[%c256, %c0_198] : memref<408x128xf32, #tpu.memory_space<vmem>>, vector<8x8xf32>
    %cst_199 = arith.constant dense<0.000000e+00> : vector<32x8xf32>
    %724 = tpu.matmul %722, %723, %cst_199 {dimension_numbers = #tpu.dot_dimension_numbers<[1], [0], [0], [1], [0, 0, 1, 1], [], []>} : vector<32x8xf32>, vector<8x8xf32>, vector<32x8xf32> -> vector<32x8xf32>
    %c264 = arith.constant 264 : index
    %c0_200 = arith.constant 0 : index
    %725 = vector.load %arg2[%c264, %c0_200] : memref<408x128xf32, #tpu.memory_space<vmem>>, vector<1x8xf32>
    %726 = vector.broadcast %725 : vector<1x8xf32> to vector<32x8xf32>
    %727 = arith.addf %724, %726 : vector<32x8xf32>
    %cst_201 = arith.constant dense<0.000000e+00> : vector<32x8xf32>
    %728 = tpu.matmul %2, %727, %cst_201 {dimension_numbers = #tpu.dot_dimension_numbers<[1], [0], [0], [1], [0, 0, 1, 1], [], []>} : vector<32x32xf32>, vector<32x8xf32>, vector<32x8xf32> -> vector<32x8xf32>
    %729 = arith.addf %698, %728 : vector<32x8xf32>
    %cst_202 = arith.constant dense<0.000000e+00> : vector<32xf32>
    %730 = vector.multi_reduction <add>, %729, %cst_202 [1] : vector<32x8xf32> to vector<32xf32>
    %731 = vector.shape_cast %730 : vector<32xf32> to vector<32x1xf32>
    %cst_203 = arith.constant 8.000000e+00 : f32
    %732 = vector.broadcast %cst_203 : f32 to vector<32x1xf32>
    %733 = arith.divf %731, %732 : vector<32x1xf32>
    %734 = vector.broadcast %733 : vector<32x1xf32> to vector<32x8xf32>
    %735 = arith.subf %729, %734 : vector<32x8xf32>
    %736 = arith.mulf %735, %735 : vector<32x8xf32>
    %cst_204 = arith.constant dense<0.000000e+00> : vector<32xf32>
    %737 = vector.multi_reduction <add>, %736, %cst_204 [1] : vector<32x8xf32> to vector<32xf32>
    %738 = vector.shape_cast %737 : vector<32xf32> to vector<32x1xf32>
    %cst_205 = arith.constant 8.000000e+00 : f32
    %739 = vector.broadcast %cst_205 : f32 to vector<32x1xf32>
    %740 = arith.divf %738, %739 : vector<32x1xf32>
    %741 = vector.broadcast %733 : vector<32x1xf32> to vector<32x8xf32>
    %742 = arith.subf %729, %741 : vector<32x8xf32>
    %cst_206 = arith.constant 9.99999974E-6 : f32
    %743 = vector.broadcast %cst_206 : f32 to vector<32x1xf32>
    %744 = arith.addf %740, %743 : vector<32x1xf32>
    %745 = math.rsqrt %744 : vector<32x1xf32>
    %746 = vector.broadcast %745 : vector<32x1xf32> to vector<32x8xf32>
    %747 = arith.mulf %742, %746 : vector<32x8xf32>
    %c304 = arith.constant 304 : index
    %c0_207 = arith.constant 0 : index
    %748 = vector.load %arg2[%c304, %c0_207] : memref<408x128xf32, #tpu.memory_space<vmem>>, vector<1x8xf32>
    %749 = vector.broadcast %748 : vector<1x8xf32> to vector<32x8xf32>
    %750 = arith.mulf %747, %749 : vector<32x8xf32>
    %c312 = arith.constant 312 : index
    %c0_208 = arith.constant 0 : index
    %751 = vector.load %arg2[%c312, %c0_208] : memref<408x128xf32, #tpu.memory_space<vmem>>, vector<1x8xf32>
    %752 = vector.broadcast %751 : vector<1x8xf32> to vector<32x8xf32>
    %753 = arith.addf %750, %752 : vector<32x8xf32>
    %c272 = arith.constant 272 : index
    %c0_209 = arith.constant 0 : index
    %754 = vector.load %arg2[%c272, %c0_209] : memref<408x128xf32, #tpu.memory_space<vmem>>, vector<8x8xf32>
    %cst_210 = arith.constant dense<0.000000e+00> : vector<32x8xf32>
    %755 = tpu.matmul %753, %754, %cst_210 {dimension_numbers = #tpu.dot_dimension_numbers<[1], [0], [0], [1], [0, 0, 1, 1], [], []>} : vector<32x8xf32>, vector<8x8xf32>, vector<32x8xf32> -> vector<32x8xf32>
    %c280 = arith.constant 280 : index
    %c0_211 = arith.constant 0 : index
    %756 = vector.load %arg2[%c280, %c0_211] : memref<408x128xf32, #tpu.memory_space<vmem>>, vector<1x8xf32>
    %757 = vector.broadcast %756 : vector<1x8xf32> to vector<32x8xf32>
    %758 = arith.addf %755, %757 : vector<32x8xf32>
    %cst_212 = arith.constant dense<0.000000e+00> : vector<32x8xf32>
    %759 = tpu.matmul %2, %758, %cst_212 {dimension_numbers = #tpu.dot_dimension_numbers<[1], [0], [0], [1], [0, 0, 1, 1], [], []>} : vector<32x32xf32>, vector<32x8xf32>, vector<32x8xf32> -> vector<32x8xf32>
    %760 = arith.addf %729, %759 : vector<32x8xf32>
    %c336 = arith.constant 336 : index
    %c0_213 = arith.constant 0 : index
    %761 = vector.load %arg2[%c336, %c0_213] : memref<408x128xf32, #tpu.memory_space<vmem>>, vector<8x32xf32>
    %cst_214 = arith.constant dense<0.000000e+00> : vector<32x32xf32>
    %762 = tpu.matmul %760, %761, %cst_214 {dimension_numbers = #tpu.dot_dimension_numbers<[1], [0], [0], [1], [0, 0, 1, 1], [], []>} : vector<32x8xf32>, vector<8x32xf32>, vector<32x32xf32> -> vector<32x32xf32>
    %c344 = arith.constant 344 : index
    %c0_215 = arith.constant 0 : index
    %763 = vector.load %arg2[%c344, %c0_215] : memref<408x128xf32, #tpu.memory_space<vmem>>, vector<1x32xf32>
    %764 = vector.broadcast %763 : vector<1x32xf32> to vector<32x32xf32>
    %765 = arith.addf %762, %764 : vector<32x32xf32>
    %cst_216 = arith.constant 0.000000e+00 : f32
    %766 = vector.broadcast %cst_216 : f32 to vector<32x32xf32>
    %767 = arith.maximumf %765, %766 : vector<32x32xf32>
    %c352 = arith.constant 352 : index
    %c0_217 = arith.constant 0 : index
    %768 = vector.load %arg2[%c352, %c0_217] : memref<408x128xf32, #tpu.memory_space<vmem>>, vector<32x8xf32>
    %cst_218 = arith.constant dense<0.000000e+00> : vector<32x8xf32>
    %769 = tpu.matmul %767, %768, %cst_218 {dimension_numbers = #tpu.dot_dimension_numbers<[1], [0], [0], [1], [0, 0, 1, 1], [], []>} : vector<32x32xf32>, vector<32x8xf32>, vector<32x8xf32> -> vector<32x8xf32>
    %c384 = arith.constant 384 : index
    %c0_219 = arith.constant 0 : index
    %770 = vector.load %arg2[%c384, %c0_219] : memref<408x128xf32, #tpu.memory_space<vmem>>, vector<1x8xf32>
    %771 = vector.broadcast %770 : vector<1x8xf32> to vector<32x8xf32>
    %772 = arith.addf %769, %771 : vector<32x8xf32>
    %773 = arith.addf %760, %772 : vector<32x8xf32>
    %cst_220 = arith.constant dense<0.000000e+00> : vector<32xf32>
    %774 = vector.multi_reduction <add>, %773, %cst_220 [1] : vector<32x8xf32> to vector<32xf32>
    %775 = vector.shape_cast %774 : vector<32xf32> to vector<32x1xf32>
    %cst_221 = arith.constant 8.000000e+00 : f32
    %776 = vector.broadcast %cst_221 : f32 to vector<32x1xf32>
    %777 = arith.divf %775, %776 : vector<32x1xf32>
    %778 = vector.broadcast %777 : vector<32x1xf32> to vector<32x8xf32>
    %779 = arith.subf %773, %778 : vector<32x8xf32>
    %780 = arith.mulf %779, %779 : vector<32x8xf32>
    %cst_222 = arith.constant dense<0.000000e+00> : vector<32xf32>
    %781 = vector.multi_reduction <add>, %780, %cst_222 [1] : vector<32x8xf32> to vector<32xf32>
    %782 = vector.shape_cast %781 : vector<32xf32> to vector<32x1xf32>
    %cst_223 = arith.constant 8.000000e+00 : f32
    %783 = vector.broadcast %cst_223 : f32 to vector<32x1xf32>
    %784 = arith.divf %782, %783 : vector<32x1xf32>
    %785 = vector.broadcast %777 : vector<32x1xf32> to vector<32x8xf32>
    %786 = arith.subf %773, %785 : vector<32x8xf32>
    %cst_224 = arith.constant 9.99999974E-6 : f32
    %787 = vector.broadcast %cst_224 : f32 to vector<32x1xf32>
    %788 = arith.addf %784, %787 : vector<32x1xf32>
    %789 = math.rsqrt %788 : vector<32x1xf32>
    %790 = vector.broadcast %789 : vector<32x1xf32> to vector<32x8xf32>
    %791 = arith.mulf %786, %790 : vector<32x8xf32>
    %c320 = arith.constant 320 : index
    %c0_225 = arith.constant 0 : index
    %792 = vector.load %arg2[%c320, %c0_225] : memref<408x128xf32, #tpu.memory_space<vmem>>, vector<1x8xf32>
    %793 = vector.broadcast %792 : vector<1x8xf32> to vector<32x8xf32>
    %794 = arith.mulf %791, %793 : vector<32x8xf32>
    %c328 = arith.constant 328 : index
    %c0_226 = arith.constant 0 : index
    %795 = vector.load %arg2[%c328, %c0_226] : memref<408x128xf32, #tpu.memory_space<vmem>>, vector<1x8xf32>
    %796 = vector.broadcast %795 : vector<1x8xf32> to vector<32x8xf32>
    %797 = arith.addf %794, %796 : vector<32x8xf32>
    %c392 = arith.constant 392 : index
    %c0_227 = arith.constant 0 : index
    %798 = vector.load %arg2[%c392, %c0_227] : memref<408x128xf32, #tpu.memory_space<vmem>>, vector<8x128xf32>
    %cst_228 = arith.constant dense<0.000000e+00> : vector<32x128xf32>
    %799 = tpu.matmul %797, %798, %cst_228 {dimension_numbers = #tpu.dot_dimension_numbers<[1], [0], [0], [1], [0, 0, 1, 1], [], []>} : vector<32x8xf32>, vector<8x128xf32>, vector<32x128xf32> -> vector<32x128xf32>
    %c400 = arith.constant 400 : index
    %c0_229 = arith.constant 0 : index
    %800 = vector.load %arg2[%c400, %c0_229] : memref<408x128xf32, #tpu.memory_space<vmem>>, vector<1x128xf32>
    %801 = vector.broadcast %800 : vector<1x128xf32> to vector<32x128xf32>
    %802 = arith.addf %799, %801 : vector<32x128xf32>
    %c0_230 = arith.constant 0 : index
    %c0_231 = arith.constant 0 : index
    %803 = vector.load %arg3[%c0_230, %c0_231] : memref<32x128xf32, #tpu.memory_space<vmem>>, vector<32x128xf32>
    tpu.vector_store %arg3[%c0_230, %c0_231], %802 {strides = array<i32>} : memref<32x128xf32, #tpu.memory_space<vmem>>, vector<32x128xf32>,
    return
  }
  func.func @transform_0(%arg0: i32) -> (i32, i32) {
    %c0_i32 = arith.constant 0 : i32
    %c0_i32_0 = arith.constant 0 : i32
    %c0_i32_1 = arith.constant 0 : i32
    return %c0_i32, %c0_i32_0 : i32, i32
  }
  func.func @transform_1(%arg0: i32) -> (i32, i32) {
    %c0_i32 = arith.constant 0 : i32
    %c0_i32_0 = arith.constant 0 : i32
    %c0_i32_1 = arith.constant 0 : i32
    return %c0_i32, %c0_i32_0 : i32, i32
  }
  func.func @transform_2(%arg0: i32) -> (i32, i32) {
    %c0_i32 = arith.constant 0 : i32
    %c0_i32_0 = arith.constant 0 : i32
    %c0_i32_1 = arith.constant 0 : i32
    return %c0_i32, %c0_i32_0 : i32, i32
  }
}

</mosaic_0001>

<llo_original>
// kernel: forward.1
$region0: #{forward.1}
  #allocation0 [shape = 'u32[]', space=smem, size = 0x4, offset = 0x4, fixed_abs, tag = 'smem constant byte address 0x4 - core index']
  #allocation1 [shape = 'u32[144,128]{1,0:T(1,128)}', space=vmem, size = 0x12000, scoped, tag = 'internal scratch']
  %s0 = inlined_call_operand.vmem [shape: f32[32,3], index: 0, kind: input, shape index: {}]
  %s1 = inlined_call_operand.hbm [shape: f32[408,128], index: 1, kind: input, shape index: {}]
  %s2 = inlined_call_operand.vmem [shape: f32[32,128], index: 2, kind: output, shape index: {}]
  %s3 = sld [smem:[#allocation0]]
  $region22: #{forward.1} parent=0
    _
  %s5 = ssub.s32 1, %s3
  %s6 = scalar_select 0, %s5, %s3
  $region1: #{forward.1} parent=0
    #allocation2 [shape = 'u8[208896]{0}', space=vmem, size = 0x33000, scoped, tag = 'input window, operand 1, single buffered']
    #allocation3 [shape = 's32[1]{0}', space=sflag, size = 0x4, scoped, tag = 'scoped memory for forward.1']
    %7 = vsyncpa [#allocation3], 0
    // Predicated region
    $region2: #{forward.1} parent=1 // pred_check
      _
    $region3: #{forward.1} parent=1 // pred_check_branch
      %9 = sbr.rel (0) target = $region5
    $region4: #{forward.1} parent=1 // pred_region
      _
    $region5: #{forward.1} parent=1 // pred_fallthru
      _
    // Predicated region
    $region6: #{forward.1} parent=1 // pred_check
      _
    $region7: #{forward.1} parent=1 // pred_check_branch
      %11 = sbr.rel (0) target = $region9
    $region8: #{forward.1} parent=1 // pred_region
      %s13 = ssub.s32 6528, 6528
      %14 = vsyncadd [#allocation3], %s13
      %s15 = sshll.u32 [#allocation2], 4
      %s16 = int_to_ptr.vmem [resolvable:$true] %s15
      %21 = dma.hbm_to_vmem [thread:$0]  %s1, 6528, %s16, [#allocation3], 128, 128, 8
    $region9: #{forward.1} parent=1 // pred_fallthru
      _
    // Predicated region
    $region10: #{forward.1} parent=1 // pred_check
      _
    $region11: #{forward.1} parent=1 // pred_check_branch
      %23 = sbr.rel (0) target = $region13
    $region12: #{forward.1} parent=1 // pred_region
      %24 = dma.done [#allocation3], 6528
    $region13: #{forward.1} parent=1 // pred_fallthru
      _
    %v25 = vld [vmem:[%s0] sm:$0xff]
    %v26 = vld [vmem:[%s0 + $0x8] sm:$0xff]
    %v27 = vld [vmem:[%s0 + $0x10] sm:$0xff]
    %v28 = vld [vmem:[%s0 + $0x18] sm:$0xff]
    %v29 = vld [vmem:[#allocation2 + $0x10] sm:$0xff]
    %v30 = vld [vmem:[#allocation2 + $0x18] sm:$0xff]
    %v31 = vld [vmem:[#allocation2 + $0x20] sm:$0xff]
    %v32 = vld [vmem:[#allocation2 + $0x28] sm:$0xff]
    %v33 = vld [vmem:[#allocation2 + $0x38] sm:$0xff]
    %v34 = vld [vmem:[#allocation2 + $0x40] sm:$0xff]
    %v35 = vld [vmem:[#allocation2 + $0x48] sm:$0xff]
    %v36 = vld [vmem:[#allocation2 + $0x50] sm:$0xff]
    %v37 = vld [vmem:[#allocation2 + $0x58] sm:$0xff]
    %v38 = vld [vmem:[#allocation2 + $0x60] sm:$0xff]
    %v39 = vld [vmem:[#allocation2 + $0x68] sm:$0xff]
    %v40 = vld [vmem:[#allocation2 + $0x70] sm:$0xff]
    %v41 = vld [vmem:[#allocation2 + $0x78] sm:$0xff]
    %v42 = vld [vmem:[#allocation2 + $0x80] sm:$0xff]
    %v43 = vld [vmem:[#allocation2 + $0x88] sm:$0xff]
    %v44 = vld [vmem:[#allocation2 + $0x90] sm:$0xff]
    %vm45 = vcmp.eq.f32.partialorder %v41, 0.0
    %vm46 = vcmp.eq.f32.partialorder %v42, 0.0
    %vm47 = vcmp.eq.f32.partialorder %v43, 0.0
    %vm48 = vcmp.eq.f32.partialorder %v44, 0.0
    %v49 = vsel %vm45, 1, 0
    %v50 = vsel %vm46, 1, 0
    %v51 = vsel %vm47, 1, 0
    %v52 = vsel %vm48, 1, 0
    %v53 = vcvt.s32.f32 %v49
    %v54 = vcvt.s32.f32 %v50
    %v55 = vcvt.s32.f32 %v51
    %v56 = vcvt.s32.f32 %v52
    %58 = vset.pattern.permute.xlu0 0
    %59 = vperm.xlu0 %58, %v53
    %v60 = vpop.permute.xlu0 %59
    %63 = vset.pattern.permute.xlu0 0
    %64 = vperm.xlu0 %63, %v54
    %v65 = vpop.permute.xlu0 %64
    %68 = vset.pattern.permute.xlu0 0
    %69 = vperm.xlu0 %68, %v55
    %v70 = vpop.permute.xlu0 %69
    %73 = vset.pattern.permute.xlu0 0
    %74 = vperm.xlu0 %73, %v56
    %v75 = vpop.permute.xlu0 %74
    %v77 = vmul.f32 %v60, %v25
    %v78 = vmul.f32 %v65, %v26
    %v79 = vmul.f32 %v70, %v27
    %v80 = vmul.f32 %v75, %v28
    %vm81 = vcmask 261120
    %v83 = vsel %vm81, %v33, 0
    %v86 = vsel %vm81, %v34, 0
    %v89 = vsel %vm81, %v35, 0
    %v92 = vsel %vm81, %v36, 0
    %94 = vmatprep.subr.mxu0 0.0
    %95 = vmatpush1.msra.mxu0 0.0
    %96 = vmatprep.subr.mxu0 0.0
    %97 = vmatpush1.msra.mxu0 0.0
    %98 = vmatprep.subr.mxu0 0.0
    %99 = vmatpush1.msra.mxu0 0.0
    %100 = vmatprep.subr.mxu0 0.0
    %101 = vmatpush1.msra.mxu0 0.0
    %102 = vmatprep.subr.mxu0 0.0
    %103 = vmatpush1.msra.mxu0 0.0
    %104 = vmatprep.subr.mxu0 0.0
    %105 = vmatpush1.msra.mxu0 0.0
    %106 = vmatprep.subr.mxu0 0.0
    %107 = vmatpush1.msra.mxu0 0.0
    %108 = vmatprep.subr.mxu0 0.0
    %109 = vmatpush1.msra.mxu0 0.0
    %110 = vmatprep.subr.mxu0 0.0
    %111 = vmatpush1.msra.mxu0 0.0
    %112 = vmatprep.subr.mxu0 0.0
    %113 = vmatpush1.msra.mxu0 0.0
    %114 = vmatprep.subr.mxu0 0.0
    %115 = vmatpush1.msra.mxu0 0.0
    %116 = vmatprep.subr.mxu0 0.0
    %117 = vmatpush1.msra.mxu0 0.0
    %118 = vmatprep.subr.mxu0 0.0
    %119 = vmatpush1.msra.mxu0 %v80
    %120 = vmatprep.subr.mxu0 0.0
    %121 = vmatpush1.msra.mxu0 %v79
    %122 = vmatprep.subr.mxu0 0.0
    %123 = vmatpush1.msra.mxu0 %v78
    %124 = vmatprep.subr.mxu0 0.0
    %125 = vmatpush1.msra.mxu0 %v77
    %126 = vmatprep.subr.mxu0 0.0
    %127 = vmatpush2.msra.mxu0 0.0
    %128 = vmatprep.subr.mxu0 0.0
    %129 = vmatpush2.msra.mxu0 0.0
    %130 = vmatprep.subr.mxu0 0.0
    %131 = vmatpush2.msra.mxu0 0.0
    %132 = vmatprep.subr.mxu0 0.0
    %133 = vmatpush2.msra.mxu0 0.0
    %134 = vmatprep.subr.mxu0 0.0
    %135 = vmatpush2.msra.mxu0 0.0
    %136 = vmatprep.subr.mxu0 0.0
    %137 = vmatpush2.msra.mxu0 0.0
    %138 = vmatprep.subr.mxu0 0.0
    %139 = vmatpush2.msra.mxu0 0.0
    %140 = vmatprep.subr.mxu0 0.0
    %141 = vmatpush2.msra.mxu0 0.0
    %142 = vmatprep.subr.mxu0 0.0
    %143 = vmatpush2.msra.mxu0 0.0
    %144 = vmatprep.subr.mxu0 0.0
    %145 = vmatpush2.msra.mxu0 0.0
    %146 = vmatprep.subr.mxu0 0.0
    %147 = vmatpush2.msra.mxu0 0.0
    %148 = vmatprep.subr.mxu0 0.0
    %149 = vmatpush2.msra.mxu0 0.0
    %150 = vmatprep.subr.mxu0 0.0
    %151 = vmatpush2.msra.mxu0 0.0
    %152 = vmatprep.subr.mxu0 0.0
    %153 = vmatpush2.msra.mxu0 0.0
    %154 = vmatprep.subr.mxu0 0.0
    %155 = vmatpush2.msra.mxu0 0.0
    %156 = vmatprep.subr.mxu0 0.0
    %157 = vmatpush2.msra.mxu0 0.0
    %158 = vmatprep.mubr.f32.mxu0 0.0
    %159 = vmatmul.mubr.f32.gmra.mxu0 %v83
    %v160 = vpop.f32.mrf.mxu0
    %v161 = vadd.f32 0.0, %v160
    %v162 = vpop.f32.mrf.mxu0
    %163 = vmatprep.mubr.f32.mxu0 0.0
    %164 = vmatmul.mubr.f32.gmra.mxu0 %v86
    %v165 = vpop.f32.mrf.mxu0
    %v166 = vadd.f32 0.0, %v165
    %v167 = vpop.f32.mrf.mxu0
    %168 = vmatprep.mubr.f32.mxu0 0.0
    %169 = vmatmul.mubr.f32.gmra.mxu0 %v89
    %v170 = vpop.f32.mrf.mxu0
    %v171 = vadd.f32 0.0, %v170
    %v172 = vpop.f32.mrf.mxu0
    %173 = vmatprep.mubr.f32.mxu0 0.0
    %174 = vmatmul.mubr.f32.gmra.mxu0 %v92
    %v175 = vpop.f32.mrf.mxu0
    %v176 = vadd.f32 0.0, %v175
    %v177 = vpop.f32.mrf.mxu0
    %178 = vdwg.mxu0
    %v179 = vmul.f32 %v60, %v161
    %v180 = vmul.f32 %v65, %v166
    %v181 = vmul.f32 %v70, %v171
    %v182 = vmul.f32 %v75, %v176
    %v183 = vadd.f32 %v179, 0.0
    %v184 = vadd.f32 %v180, 0.0
    %v185 = vadd.f32 %v181, 0.0
    %v186 = vadd.f32 %v182, 0.0
    %v187 = vsub.f32 %v25, %v161
    %v188 = vsub.f32 %v26, %v166
    %v189 = vsub.f32 %v27, %v171
    %v190 = vsub.f32 %v28, %v176
    %v191 = vmul.f32 %v187, %v187
    %v192 = vmul.f32 %v188, %v188
    %v193 = vmul.f32 %v189, %v189
    %v194 = vmul.f32 %v190, %v190
    %vm195 = vcmask 23552
    %v196 = vsel %vm195, %v191, 0.0
    %197 = vadd.xlane.f32.xlu0 %v196
    %v198 = vpop.xlane.xlu0 %197
    %v199 = vsel %vm195, %v192, 0.0
    %200 = vadd.xlane.f32.xlu0 %v199
    %v201 = vpop.xlane.xlu0 %200
    %v202 = vsel %vm195, %v193, 0.0
    %203 = vadd.xlane.f32.xlu0 %v202
    %v204 = vpop.xlane.xlu0 %203
    %v205 = vsel %vm195, %v194, 0.0
    %206 = vadd.xlane.f32.xlu0 %v205
    %v207 = vpop.xlane.xlu0 %206
    %v208 = vmin.f32 %v198, 1e+10
    %v209 = vmin.f32 %v201, 1e+10
    %v210 = vmin.f32 %v204, 1e+10
    %v211 = vmin.f32 %v207, 1e+10
    %vm212 = vcmp.gt.f32.partialorder %v37, 0.5
    %vm213 = vcmp.gt.f32.partialorder %v38, 0.5
    %vm214 = vcmp.gt.f32.partialorder %v39, 0.5
    %vm215 = vcmp.gt.f32.partialorder %v40, 0.5
    %v216 = vsel %vm212, %v208, -1e+30
    %v217 = vsel %vm213, %v209, -1e+30
    %v218 = vsel %vm214, %v210, -1e+30
    %v219 = vsel %vm215, %v211, -1e+30
    %vm220 = vcmask 15360
    %v221 = vsel %vm220, %v216, -inf
    %v222 = vsel %vm220, %v217, -inf
    %v223 = vsel %vm220, %v218, -inf
    %v224 = vsel %vm220, %v219, -inf
    %v225 = vmax.f32 %v221, %v222
    %v226 = vmax.f32 %v223, %v224
    %v227 = vmax.f32 %v225, %v226
    %v228 = vrot.slane %v227, 4
    %v229 = vmax.f32 %v227, %v228
    %v230 = vrot.slane %v229, 2
    %v231 = vmax.f32 %v229, %v230
    %v232 = vrot.slane %v231, 1
    %v233 = vmax.f32 %v231, %v232
    %v234 = vmul.f32 %v37, %v233
    %v235 = vmul.f32 %v38, %v233
    %v236 = vmul.f32 %v39, %v233
    %v237 = vmul.f32 %v40, %v233
    %v238 = vsel %vm220, %v234, 0.0
    %239 = vadd.xlane.f32.xlu0 %v238
    %v240 = vpop.xlane.xlu0 %239
    %v241 = vsel %vm220, %v235, 0.0
    %242 = vadd.xlane.f32.xlu0 %v241
    %v243 = vpop.xlane.xlu0 %242
    %v244 = vsel %vm220, %v236, 0.0
    %245 = vadd.xlane.f32.xlu0 %v244
    %v246 = vpop.xlane.xlu0 %245
    %v247 = vsel %vm220, %v237, 0.0
    %248 = vadd.xlane.f32.xlu0 %v247
    %v249 = vpop.xlane.xlu0 %248
    %vm250 = vcmp.ge.f32.partialorder %v208, %v240
    %vm251 = vcmp.ge.f32.partialorder %v209, %v243
    %vm252 = vcmp.ge.f32.partialorder %v210, %v246
    %vm253 = vcmp.ge.f32.partialorder %v211, %v249
    %v254 = vsel %vm250, %v41, 16.0
    %v255 = vsel %vm251, %v42, 16.0
    %v256 = vsel %vm252, %v43, 16.0
    %v257 = vsel %vm253, %v44, 16.0
    %259 = vset.pattern.permute.xlu0 0
    %260 = vperm.xlu0 %259, %v254
    %v261 = vpop.permute.xlu0 %260
    %264 = vset.pattern.permute.xlu0 0
    %265 = vperm.xlu0 %264, %v255
    %v266 = vpop.permute.xlu0 %265
    %269 = vset.pattern.permute.xlu0 0
    %270 = vperm.xlu0 %269, %v256
    %v271 = vpop.permute.xlu0 %270
    %274 = vset.pattern.permute.xlu0 0
    %275 = vperm.xlu0 %274, %v257
    %v276 = vpop.permute.xlu0 %275
    %v278 = vsel %vm212, %v261, 16.0
    %v279 = vsel %vm213, %v266, 16.0
    %v280 = vsel %vm214, %v271, 16.0
    %v281 = vsel %vm215, %v276, 16.0
    %v282 = vsel %vm220, %v278, inf
    %v283 = vsel %vm220, %v279, inf
    %v284 = vsel %vm220, %v280, inf
    %v285 = vsel %vm220, %v281, inf
    %v286 = vmin.f32 %v282, %v283
    %v287 = vmin.f32 %v284, %v285
    %v288 = vmin.f32 %v286, %v287
    %v289 = vrot.slane %v288, 4
    %v290 = vmin.f32 %v288, %v289
    %v291 = vrot.slane %v290, 2
    %v292 = vmin.f32 %v290, %v291
    %v293 = vrot.slane %v292, 1
    %v294 = vmin.f32 %v292, %v293
    %v295 = vmul.f32 %v37, %v294
    %v296 = vmul.f32 %v38, %v294
    %v297 = vmul.f32 %v39, %v294
    %v298 = vmul.f32 %v40, %v294
    %v299 = vsel %vm220, %v295, 0.0
    %300 = vadd.xlane.f32.xlu0 %v299
    %v301 = vpop.xlane.xlu0 %300
    %v302 = vsel %vm220, %v296, 0.0
    %303 = vadd.xlane.f32.xlu0 %v302
    %v304 = vpop.xlane.xlu0 %303
    %v305 = vsel %vm220, %v297, 0.0
    %306 = vadd.xlane.f32.xlu0 %v305
    %v307 = vpop.xlane.xlu0 %306
    %v308 = vsel %vm220, %v298, 0.0
    %309 = vadd.xlane.f32.xlu0 %v308
    %v310 = vpop.xlane.xlu0 %309
    %vm311 = vcmp.eq.f32.partialorder %v41, %v301
    %vm312 = vcmp.eq.f32.partialorder %v42, %v304
    %vm313 = vcmp.eq.f32.partialorder %v43, %v307
    %vm314 = vcmp.eq.f32.partialorder %v44, %v310
    %v315 = vsel %vm311, 1, 0
    %v316 = vsel %vm312, 1, 0
    %v317 = vsel %vm313, 1, 0
    %v318 = vsel %vm314, 1, 0
    %v319 = vcvt.s32.f32 %v315
    %v320 = vcvt.s32.f32 %v316
    %v321 = vcvt.s32.f32 %v317
    %v322 = vcvt.s32.f32 %v318
    %324 = vset.pattern.permute.xlu0 0
    %325 = vperm.xlu0 %324, %v319
    %v326 = vpop.permute.xlu0 %325
    %329 = vset.pattern.permute.xlu0 0
    %330 = vperm.xlu0 %329, %v320
    %v331 = vpop.permute.xlu0 %330
    %334 = vset.pattern.permute.xlu0 0
    %335 = vperm.xlu0 %334, %v321
    %v336 = vpop.permute.xlu0 %335
    %339 = vset.pattern.permute.xlu0 0
    %340 = vperm.xlu0 %339, %v322
    %v341 = vpop.permute.xlu0 %340
    %v343 = vmul.f32 %v326, %v25
    %v344 = vmul.f32 %v331, %v26
    %v345 = vmul.f32 %v336, %v27
    %v346 = vmul.f32 %v341, %v28
    %347 = vmatprep.subr.mxu0 0.0
    %348 = vmatpush1.msra.mxu0 0.0
    %349 = vmatprep.subr.mxu0 0.0
    %350 = vmatpush1.msra.mxu0 0.0
    %351 = vmatprep.subr.mxu0 0.0
    %352 = vmatpush1.msra.mxu0 0.0
    %353 = vmatprep.subr.mxu0 0.0
    %354 = vmatpush1.msra.mxu0 0.0
    %355 = vmatprep.subr.mxu0 0.0
    %356 = vmatpush1.msra.mxu0 0.0
    %357 = vmatprep.subr.mxu0 0.0
    %358 = vmatpush1.msra.mxu0 0.0
    %359 = vmatprep.subr.mxu0 0.0
    %360 = vmatpush1.msra.mxu0 0.0
    %361 = vmatprep.subr.mxu0 0.0
    %362 = vmatpush1.msra.mxu0 0.0
    %363 = vmatprep.subr.mxu0 0.0
    %364 = vmatpush1.msra.mxu0 0.0
    %365 = vmatprep.subr.mxu0 0.0
    %366 = vmatpush1.msra.mxu0 0.0
    %367 = vmatprep.subr.mxu0 0.0
    %368 = vmatpush1.msra.mxu0 0.0
    %369 = vmatprep.subr.mxu0 0.0
    %370 = vmatpush1.msra.mxu0 0.0
    %371 = vmatprep.subr.mxu0 0.0
    %372 = vmatpush1.msra.mxu0 %v346
    %373 = vmatprep.subr.mxu0 0.0
    %374 = vmatpush1.msra.mxu0 %v345
    %375 = vmatprep.subr.mxu0 0.0
    %376 = vmatpush1.msra.mxu0 %v344
    %377 = vmatprep.subr.mxu0 0.0
    %378 = vmatpush1.msra.mxu0 %v343
    %379 = vmatprep.subr.mxu0 0.0
    %380 = vmatpush2.msra.mxu0 0.0
    %381 = vmatprep.subr.mxu0 0.0
    %382 = vmatpush2.msra.mxu0 0.0
    %383 = vmatprep.subr.mxu0 0.0
    %384 = vmatpush2.msra.mxu0 0.0
    %385 = vmatprep.subr.mxu0 0.0
    %386 = vmatpush2.msra.mxu0 0.0
    %387 = vmatprep.subr.mxu0 0.0
    %388 = vmatpush2.msra.mxu0 0.0
    %389 = vmatprep.subr.mxu0 0.0
    %390 = vmatpush2.msra.mxu0 0.0
    %391 = vmatprep.subr.mxu0 0.0
    %392 = vmatpush2.msra.mxu0 0.0
    %393 = vmatprep.subr.mxu0 0.0
    %394 = vmatpush2.msra.mxu0 0.0
    %395 = vmatprep.subr.mxu0 0.0
    %396 = vmatpush2.msra.mxu0 0.0
    %397 = vmatprep.subr.mxu0 0.0
    %398 = vmatpush2.msra.mxu0 0.0
    %399 = vmatprep.subr.mxu0 0.0
    %400 = vmatpush2.msra.mxu0 0.0
    %401 = vmatprep.subr.mxu0 0.0
    %402 = vmatpush2.msra.mxu0 0.0
    %403 = vmatprep.subr.mxu0 0.0
    %404 = vmatpush2.msra.mxu0 0.0
    %405 = vmatprep.subr.mxu0 0.0
    %406 = vmatpush2.msra.mxu0 0.0
    %407 = vmatprep.subr.mxu0 0.0
    %408 = vmatpush2.msra.mxu0 0.0
    %409 = vmatprep.subr.mxu0 0.0
    %410 = vmatpush2.msra.mxu0 0.0
    %411 = vmatprep.mubr.f32.mxu0 0.0
    %412 = vmatmul.mubr.f32.gmra.mxu0 %v83
    %v413 = vpop.f32.mrf.mxu0
    %v414 = vadd.f32 0.0, %v413
    %v415 = vpop.f32.mrf.mxu0
    %416 = vmatprep.mubr.f32.mxu0 0.0
    %417 = vmatmul.mubr.f32.gmra.mxu0 %v86
    %v418 = vpop.f32.mrf.mxu0
    %v419 = vadd.f32 0.0, %v418
    %v420 = vpop.f32.mrf.mxu0
    %421 = vmatprep.mubr.f32.mxu0 0.0
    %422 = vmatmul.mubr.f32.gmra.mxu0 %v89
    %v423 = vpop.f32.mrf.mxu0
    %v424 = vadd.f32 0.0, %v423
    %v425 = vpop.f32.mrf.mxu0
    %426 = vmatprep.mubr.f32.mxu0 0.0
    %427 = vmatmul.mubr.f32.gmra.mxu0 %v92
    %v428 = vpop.f32.mrf.mxu0
    %v429 = vadd.f32 0.0, %v428
    %v430 = vpop.f32.mrf.mxu0
    %431 = vdwg.mxu0
    %vm432 = vcmp.eq.f32.partialorder %v41, 1.0
    %vm433 = vcmp.eq.f32.partialorder %v42, 1.0
    %vm434 = vcmp.eq.f32.partialorder %v43, 1.0
    %vm435 = vcmp.eq.f32.partialorder %v44, 1.0
    %v436 = vsel %vm432, 1, 0
    %v437 = vsel %vm433, 1, 0
    %v438 = vsel %vm434, 1, 0
    %v439 = vsel %vm435, 1, 0
    %v440 = vcvt.s32.f32 %v436
    %v441 = vcvt.s32.f32 %v437
    %v442 = vcvt.s32.f32 %v438
    %v443 = vcvt.s32.f32 %v439
    %445 = vset.pattern.permute.xlu0 0
    %446 = vperm.xlu0 %445, %v440
    %v447 = vpop.permute.xlu0 %446
    %450 = vset.pattern.permute.xlu0 0
    %451 = vperm.xlu0 %450, %v441
    %v452 = vpop.permute.xlu0 %451
    %455 = vset.pattern.permute.xlu0 0
    %456 = vperm.xlu0 %455, %v442
    %v457 = vpop.permute.xlu0 %456
    %460 = vset.pattern.permute.xlu0 0
    %461 = vperm.xlu0 %460, %v443
    %v462 = vpop.permute.xlu0 %461
    %v464 = vmul.f32 %v447, %v414
    %v465 = vmul.f32 %v452, %v419
    %v466 = vmul.f32 %v457, %v424
    %v467 = vmul.f32 %v462, %v429
    %v468 = vadd.f32 %v183, %v464
    %v469 = vadd.f32 %v184, %v465
    %v470 = vadd.f32 %v185, %v466
    %v471 = vadd.f32 %v186, %v467
    %v472 = vsub.f32 %v25, %v414
    %v473 = vsub.f32 %v26, %v419
    %v474 = vsub.f32 %v27, %v424
    %v475 = vsub.f32 %v28, %v429
    %v476 = vmul.f32 %v472, %v472
    %v477 = vmul.f32 %v473, %v473
    %v478 = vmul.f32 %v474, %v474
    %v479 = vmul.f32 %v475, %v475
    %v480 = vsel %vm195, %v476, 0.0
    %481 = vadd.xlane.f32.xlu0 %v480
    %v482 = vpop.xlane.xlu0 %481
    %v483 = vsel %vm195, %v477, 0.0
    %484 = vadd.xlane.f32.xlu0 %v483
    %v485 = vpop.xlane.xlu0 %484
    %v486 = vsel %vm195, %v478, 0.0
    %487 = vadd.xlane.f32.xlu0 %v486
    %v488 = vpop.xlane.xlu0 %487
    %v489 = vsel %vm195, %v479, 0.0
    %490 = vadd.xlane.f32.xlu0 %v489
    %v491 = vpop.xlane.xlu0 %490
    %v492 = vmin.f32 %v208, %v482
    %v493 = vmin.f32 %v209, %v485
    %v494 = vmin.f32 %v210, %v488
    %v495 = vmin.f32 %v211, %v491
    %v496 = vsel %vm212, %v492, -1e+30
    %v497 = vsel %vm213, %v493, -1e+30
    %v498 = vsel %vm214, %v494, -1e+30
    %v499 = vsel %vm215, %v495, -1e+30
    %v500 = vsel %vm220, %v496, -inf
    %v501 = vsel %vm220, %v497, -inf
    %v502 = vsel %vm220, %v498, -inf
    %v503 = vsel %vm220, %v499, -inf
    %v504 = vmax.f32 %v500, %v501
    %v505 = vmax.f32 %v502, %v503
    %v506 = vmax.f32 %v504, %v505
    %v507 = vrot.slane %v506, 4
    %v508 = vmax.f32 %v506, %v507
    %v509 = vrot.slane %v508, 2
    %v510 = vmax.f32 %v508, %v509
    %v511 = vrot.slane %v510, 1
    %v512 = vmax.f32 %v510, %v511
    %v513 = vmul.f32 %v37, %v512
    %v514 = vmul.f32 %v38, %v512
    %v515 = vmul.f32 %v39, %v512
    %v516 = vmul.f32 %v40, %v512
    %v517 = vsel %vm220, %v513, 0.0
    %518 = vadd.xlane.f32.xlu0 %v517
    %v519 = vpop.xlane.xlu0 %518
    %v520 = vsel %vm220, %v514, 0.0
    %521 = vadd.xlane.f32.xlu0 %v520
    %v522 = vpop.xlane.xlu0 %521
    %v523 = vsel %vm220, %v515, 0.0
    %524 = vadd.xlane.f32.xlu0 %v523
    %v525 = vpop.xlane.xlu0 %524
    %v526 = vsel %vm220, %v516, 0.0
    %527 = vadd.xlane.f32.xlu0 %v526
    %v528 = vpop.xlane.xlu0 %527
    %vm529 = vcmp.ge.f32.partialorder %v492, %v519
    %vm530 = vcmp.ge.f32.partialorder %v493, %v522
    %vm531 = vcmp.ge.f32.partialorder %v494, %v525
    %vm532 = vcmp.ge.f32.partialorder %v495, %v528
    %v533 = vsel %vm529, %v41, 16.0
    %v534 = vsel %vm530, %v42, 16.0
    %v535 = vsel %vm531, %v43, 16.0
    %v536 = vsel %vm532, %v44, 16.0
    %538 = vset.pattern.permute.xlu0 0
    %539 = vperm.xlu0 %538, %v533
    %v540 = vpop.permute.xlu0 %539
    %543 = vset.pattern.permute.xlu0 0
    %544 = vperm.xlu0 %543, %v534
    %v545 = vpop.permute.xlu0 %544
    %548 = vset.pattern.permute.xlu0 0
    %549 = vperm.xlu0 %548, %v535
    %v550 = vpop.permute.xlu0 %549
    %553 = vset.pattern.permute.xlu0 0
    %554 = vperm.xlu0 %553, %v536
    %v555 = vpop.permute.xlu0 %554
    %v557 = vsel %vm212, %v540, 16.0
    %v558 = vsel %vm213, %v545, 16.0
    %v559 = vsel %vm214, %v550, 16.0
    %v560 = vsel %vm215, %v555, 16.0
    %v561 = vsel %vm220, %v557, inf
    %v562 = vsel %vm220, %v558, inf
    %v563 = vsel %vm220, %v559, inf
    %v564 = vsel %vm220, %v560, inf
    %v565 = vmin.f32 %v561, %v562
    %v566 = vmin.f32 %v563, %v564
    %v567 = vmin.f32 %v565, %v566
    %v568 = vrot.slane %v567, 4
    %v569 = vmin.f32 %v567, %v568
    %v570 = vrot.slane %v569, 2
    %v571 = vmin.f32 %v569, %v570
    %v572 = vrot.slane %v571, 1
    %v573 = vmin.f32 %v571, %v572
    %v574 = vmul.f32 %v37, %v573
    %v575 = vmul.f32 %v38, %v573
    %v576 = vmul.f32 %v39, %v573
    %v577 = vmul.f32 %v40, %v573
    %v578 = vsel %vm220, %v574, 0.0
    %579 = vadd.xlane.f32.xlu0 %v578
    %v580 = vpop.xlane.xlu0 %579
    %v581 = vsel %vm220, %v575, 0.0
    %582 = vadd.xlane.f32.xlu0 %v581
    %v583 = vpop.xlane.xlu0 %582
    %v584 = vsel %vm220, %v576, 0.0
    %585 = vadd.xlane.f32.xlu0 %v584
    %v586 = vpop.xlane.xlu0 %585
    %v587 = vsel %vm220, %v577, 0.0
    %588 = vadd.xlane.f32.xlu0 %v587
    %v589 = vpop.xlane.xlu0 %588
    %vm590 = vcmp.eq.f32.partialorder %v41, %v580
    %vm591 = vcmp.eq.f32.partialorder %v42, %v583
    %vm592 = vcmp.eq.f32.partialorder %v43, %v586
    %vm593 = vcmp.eq.f32.partialorder %v44, %v589
    %v594 = vsel %vm590, 1, 0
    %v595 = vsel %vm591, 1, 0
    %v596 = vsel %vm592, 1, 0
    %v597 = vsel %vm593, 1, 0
    %v598 = vcvt.s32.f32 %v594
    %v599 = vcvt.s32.f32 %v595
    %v600 = vcvt.s32.f32 %v596
    %v601 = vcvt.s32.f32 %v597
    %603 = vset.pattern.permute.xlu0 0
    %604 = vperm.xlu0 %603, %v598
    %v605 = vpop.permute.xlu0 %604
    %608 = vset.pattern.permute.xlu0 0
    %609 = vperm.xlu0 %608, %v599
    %v610 = vpop.permute.xlu0 %609
    %613 = vset.pattern.permute.xlu0 0
    %614 = vperm.xlu0 %613, %v600
    %v615 = vpop.permute.xlu0 %614
    %618 = vset.pattern.permute.xlu0 0
    %619 = vperm.xlu0 %618, %v601
    %v620 = vpop.permute.xlu0 %619
    %v622 = vmul.f32 %v605, %v25
    %v623 = vmul.f32 %v610, %v26
    %v624 = vmul.f32 %v615, %v27
    %v625 = vmul.f32 %v620, %v28
    %626 = vmatprep.subr.mxu0 0.0
    %627 = vmatpush1.msra.mxu0 0.0
    %628 = vmatprep.subr.mxu0 0.0
    %629 = vmatpush1.msra.mxu0 0.0
    %630 = vmatprep.subr.mxu0 0.0
    %631 = vmatpush1.msra.mxu0 0.0
    %632 = vmatprep.subr.mxu0 0.0
    %633 = vmatpush1.msra.mxu0 0.0
    %634 = vmatprep.subr.mxu0 0.0
    %635 = vmatpush1.msra.mxu0 0.0
    %636 = vmatprep.subr.mxu0 0.0
    %637 = vmatpush1.msra.mxu0 0.0
    %638 = vmatprep.subr.mxu0 0.0
    %639 = vmatpush1.msra.mxu0 0.0
    %640 = vmatprep.subr.mxu0 0.0
    %641 = vmatpush1.msra.mxu0 0.0
    %642 = vmatprep.subr.mxu0 0.0
    %643 = vmatpush1.msra.mxu0 0.0
    %644 = vmatprep.subr.mxu0 0.0
    %645 = vmatpush1.msra.mxu0 0.0
    %646 = vmatprep.subr.mxu0 0.0
    %647 = vmatpush1.msra.mxu0 0.0
    %648 = vmatprep.subr.mxu0 0.0
    %649 = vmatpush1.msra.mxu0 0.0
    %650 = vmatprep.subr.mxu0 0.0
    %651 = vmatpush1.msra.mxu0 %v625
    %652 = vmatprep.subr.mxu0 0.0
    %653 = vmatpush1.msra.mxu0 %v624
    %654 = vmatprep.subr.mxu0 0.0
    %655 = vmatpush1.msra.mxu0 %v623
    %656 = vmatprep.subr.mxu0 0.0
    %657 = vmatpush1.msra.mxu0 %v622
    %658 = vmatprep.subr.mxu0 0.0
    %659 = vmatpush2.msra.mxu0 0.0
    %660 = vmatprep.subr.mxu0 0.0
    %661 = vmatpush2.msra.mxu0 0.0
    %662 = vmatprep.subr.mxu0 0.0
    %663 = vmatpush2.msra.mxu0 0.0
    %664 = vmatprep.subr.mxu0 0.0
    %665 = vmatpush2.msra.mxu0 0.0
    %666 = vmatprep.subr.mxu0 0.0
    %667 = vmatpush2.msra.mxu0 0.0
    %668 = vmatprep.subr.mxu0 0.0
    %669 = vmatpush2.msra.mxu0 0.0
    %670 = vmatprep.subr.mxu0 0.0
    %671 = vmatpush2.msra.mxu0 0.0
    %672 = vmatprep.subr.mxu0 0.0
    %673 = vmatpush2.msra.mxu0 0.0
    %674 = vmatprep.subr.mxu0 0.0
    %675 = vmatpush2.msra.mxu0 0.0
    %676 = vmatprep.subr.mxu0 0.0
    %677 = vmatpush2.msra.mxu0 0.0
    %678 = vmatprep.subr.mxu0 0.0
    %679 = vmatpush2.msra.mxu0 0.0
    %680 = vmatprep.subr.mxu0 0.0
    %681 = vmatpush2.msra.mxu0 0.0
    %682 = vmatprep.subr.mxu0 0.0
    %683 = vmatpush2.msra.mxu0 0.0
    %684 = vmatprep.subr.mxu0 0.0
    %685 = vmatpush2.msra.mxu0 0.0
    %686 = vmatprep.subr.mxu0 0.0
    %687 = vmatpush2.msra.mxu0 0.0
    %688 = vmatprep.subr.mxu0 0.0
    %689 = vmatpush2.msra.mxu0 0.0
    %690 = vmatprep.mubr.f32.mxu0 0.0
    %691 = vmatmul.mubr.f32.gmra.mxu0 %v83
    %v692 = vpop.f32.mrf.mxu0
    %v693 = vadd.f32 0.0, %v692
    %v694 = vpop.f32.mrf.mxu0
    %695 = vmatprep.mubr.f32.mxu0 0.0
    %696 = vmatmul.mubr.f32.gmra.mxu0 %v86
    %v697 = vpop.f32.mrf.mxu0
    %v698 = vadd.f32 0.0, %v697
    %v699 = vpop.f32.mrf.mxu0
    %700 = vmatprep.mubr.f32.mxu0 0.0
    %701 = vmatmul.mubr.f32.gmra.mxu0 %v89
    %v702 = vpop.f32.mrf.mxu0
    %v703 = vadd.f32 0.0, %v702
    %v704 = vpop.f32.mrf.mxu0
    %705 = vmatprep.mubr.f32.mxu0 0.0
    %706 = vmatmul.mubr.f32.gmra.mxu0 %v92
    %v707 = vpop.f32.mrf.mxu0
    %v708 = vadd.f32 0.0, %v707
    %v709 = vpop.f32.mrf.mxu0
    %710 = vdwg.mxu0
    %vm711 = vcmp.eq.f32.partialorder %v41, 2.0
    %vm712 = vcmp.eq.f32.partialorder %v42, 2.0
    %vm713 = vcmp.eq.f32.partialorder %v43, 2.0
    %vm714 = vcmp.eq.f32.partialorder %v44, 2.0
    %v715 = vsel %vm711, 1, 0
    %v716 = vsel %vm712, 1, 0
    %v717 = vsel %vm713, 1, 0
    %v718 = vsel %vm714, 1, 0
    %v719 = vcvt.s32.f32 %v715
    %v720 = vcvt.s32.f32 %v716
    %v721 = vcvt.s32.f32 %v717
    %v722 = vcvt.s32.f32 %v718
    %724 = vset.pattern.permute.xlu0 0
    %725 = vperm.xlu0 %724, %v719
    %v726 = vpop.permute.xlu0 %725
    %729 = vset.pattern.permute.xlu0 0
    %730 = vperm.xlu0 %729, %v720
    %v731 = vpop.permute.xlu0 %730
    %734 = vset.pattern.permute.xlu0 0
    %735 = vperm.xlu0 %734, %v721
    %v736 = vpop.permute.xlu0 %735
    %739 = vset.pattern.permute.xlu0 0
    %740 = vperm.xlu0 %739, %v722
    %v741 = vpop.permute.xlu0 %740
    %v743 = vmul.f32 %v726, %v693
    %v744 = vmul.f32 %v731, %v698
    %v745 = vmul.f32 %v736, %v703
    %v746 = vmul.f32 %v741, %v708
    %v747 = vadd.f32 %v468, %v743
    %v748 = vadd.f32 %v469, %v744
    %v749 = vadd.f32 %v470, %v745
    %v750 = vadd.f32 %v471, %v746
    %v751 = vsub.f32 %v25, %v693
    %v752 = vsub.f32 %v26, %v698
    %v753 = vsub.f32 %v27, %v703
    %v754 = vsub.f32 %v28, %v708
    %v755 = vmul.f32 %v751, %v751
    %v756 = vmul.f32 %v752, %v752
    %v757 = vmul.f32 %v753, %v753
    %v758 = vmul.f32 %v754, %v754
    %v759 = vsel %vm195, %v755, 0.0
    %760 = vadd.xlane.f32.xlu0 %v759
    %v761 = vpop.xlane.xlu0 %760
    %v762 = vsel %vm195, %v756, 0.0
    %763 = vadd.xlane.f32.xlu0 %v762
    %v764 = vpop.xlane.xlu0 %763
    %v765 = vsel %vm195, %v757, 0.0
    %766 = vadd.xlane.f32.xlu0 %v765
    %v767 = vpop.xlane.xlu0 %766
    %v768 = vsel %vm195, %v758, 0.0
    %769 = vadd.xlane.f32.xlu0 %v768
    %v770 = vpop.xlane.xlu0 %769
    %v771 = vmin.f32 %v492, %v761
    %v772 = vmin.f32 %v493, %v764
    %v773 = vmin.f32 %v494, %v767
    %v774 = vmin.f32 %v495, %v770
    %v775 = vsel %vm212, %v771, -1e+30
    %v776 = vsel %vm213, %v772, -1e+30
    %v777 = vsel %vm214, %v773, -1e+30
    %v778 = vsel %vm215, %v774, -1e+30
    %v779 = vsel %vm220, %v775, -inf
    %v780 = vsel %vm220, %v776, -inf
    %v781 = vsel %vm220, %v777, -inf
    %v782 = vsel %vm220, %v778, -inf
    %v783 = vmax.f32 %v779, %v780
    %v784 = vmax.f32 %v781, %v782
    %v785 = vmax.f32 %v783, %v784
    %v786 = vrot.slane %v785, 4
    %v787 = vmax.f32 %v785, %v786
    %v788 = vrot.slane %v787, 2
    %v789 = vmax.f32 %v787, %v788
    %v790 = vrot.slane %v789, 1
    %v791 = vmax.f32 %v789, %v790
    %v792 = vmul.f32 %v37, %v791
    %v793 = vmul.f32 %v38, %v791
    %v794 = vmul.f32 %v39, %v791
    %v795 = vmul.f32 %v40, %v791
    %v796 = vsel %vm220, %v792, 0.0
    %797 = vadd.xlane.f32.xlu0 %v796
    %v798 = vpop.xlane.xlu0 %797
    %v799 = vsel %vm220, %v793, 0.0
    %800 = vadd.xlane.f32.xlu0 %v799
    %v801 = vpop.xlane.xlu0 %800
    %v802 = vsel %vm220, %v794, 0.0
    %803 = vadd.xlane.f32.xlu0 %v802
    %v804 = vpop.xlane.xlu0 %803
    %v805 = vsel %vm220, %v795, 0.0
    %806 = vadd.xlane.f32.xlu0 %v805
    %v807 = vpop.xlane.xlu0 %806
    %vm808 = vcmp.ge.f32.partialorder %v771, %v798
    %vm809 = vcmp.ge.f32.partialorder %v772, %v801
    %vm810 = vcmp.ge.f32.partialorder %v773, %v804
    %vm811 = vcmp.ge.f32.partialorder %v774, %v807
    %v812 = vsel %vm808, %v41, 16.0
    %v813 = vsel %vm809, %v42, 16.0
    %v814 = vsel %vm810, %v43, 16.0
    %v815 = vsel %vm811, %v44, 16.0
    %817 = vset.pattern.permute.xlu0 0
    %818 = vperm.xlu0 %817, %v812
    %v819 = vpop.permute.xlu0 %818
    %822 = vset.pattern.permute.xlu0 0
    %823 = vperm.xlu0 %822, %v813
    %v824 = vpop.permute.xlu0 %823
    %827 = vset.pattern.permute.xlu0 0
    %828 = vperm.xlu0 %827, %v814
    %v829 = vpop.permute.xlu0 %828
    %832 = vset.pattern.permute.xlu0 0
    %833 = vperm.xlu0 %832, %v815
    %v834 = vpop.permute.xlu0 %833
    %v836 = vsel %vm212, %v819, 16.0
    %v837 = vsel %vm213, %v824, 16.0
    %v838 = vsel %vm214, %v829, 16.0
    %v839 = vsel %vm215, %v834, 16.0
    %v840 = vsel %vm220, %v836, inf
    %v841 = vsel %vm220, %v837, inf
    %v842 = vsel %vm220, %v838, inf
    %v843 = vsel %vm220, %v839, inf
    %v844 = vmin.f32 %v840, %v841
    %v845 = vmin.f32 %v842, %v843
    %v846 = vmin.f32 %v844, %v845
    %v847 = vrot.slane %v846, 4
    %v848 = vmin.f32 %v846, %v847
    %v849 = vrot.slane %v848, 2
    %v850 = vmin.f32 %v848, %v849
    %v851 = vrot.slane %v850, 1
    %v852 = vmin.f32 %v850, %v851
    %v853 = vmul.f32 %v37, %v852
    %v854 = vmul.f32 %v38, %v852
    %v855 = vmul.f32 %v39, %v852
    %v856 = vmul.f32 %v40, %v852
    %v857 = vsel %vm220, %v853, 0.0
    %858 = vadd.xlane.f32.xlu0 %v857
    %v859 = vpop.xlane.xlu0 %858
    %v860 = vsel %vm220, %v854, 0.0
    %861 = vadd.xlane.f32.xlu0 %v860
    %v862 = vpop.xlane.xlu0 %861
    %v863 = vsel %vm220, %v855, 0.0
    %864 = vadd.xlane.f32.xlu0 %v863
    %v865 = vpop.xlane.xlu0 %864
    %v866 = vsel %vm220, %v856, 0.0
    %867 = vadd.xlane.f32.xlu0 %v866
    %v868 = vpop.xlane.xlu0 %867
    %vm869 = vcmp.eq.f32.partialorder %v41, %v859
    %vm870 = vcmp.eq.f32.partialorder %v42, %v862
    %vm871 = vcmp.eq.f32.partialorder %v43, %v865
    %vm872 = vcmp.eq.f32.partialorder %v44, %v868
    %v873 = vsel %vm869, 1, 0
    %v874 = vsel %vm870, 1, 0
    %v875 = vsel %vm871, 1, 0
    %v876 = vsel %vm872, 1, 0
    %v877 = vcvt.s32.f32 %v873
    %v878 = vcvt.s32.f32 %v874
    %v879 = vcvt.s32.f32 %v875
    %v880 = vcvt.s32.f32 %v876
    %882 = vset.pattern.permute.xlu0 0
    %883 = vperm.xlu0 %882, %v877
    %v884 = vpop.permute.xlu0 %883
    %887 = vset.pattern.permute.xlu0 0
    %888 = vperm.xlu0 %887, %v878
    %v889 = vpop.permute.xlu0 %888
    %892 = vset.pattern.permute.xlu0 0
    %893 = vperm.xlu0 %892, %v879
    %v894 = vpop.permute.xlu0 %893
    %897 = vset.pattern.permute.xlu0 0
    %898 = vperm.xlu0 %897, %v880
    %v899 = vpop.permute.xlu0 %898
    %v901 = vmul.f32 %v884, %v25
    %v902 = vmul.f32 %v889, %v26
    %v903 = vmul.f32 %v894, %v27
    %v904 = vmul.f32 %v899, %v28
    %905 = vmatprep.subr.mxu0 0.0
    %906 = vmatpush1.msra.mxu0 0.0
    %907 = vmatprep.subr.mxu0 0.0
    %908 = vmatpush1.msra.mxu0 0.0
    %909 = vmatprep.subr.mxu0 0.0
    %910 = vmatpush1.msra.mxu0 0.0
    %911 = vmatprep.subr.mxu0 0.0
    %912 = vmatpush1.msra.mxu0 0.0
    %913 = vmatprep.subr.mxu0 0.0
    %914 = vmatpush1.msra.mxu0 0.0
    %915 = vmatprep.subr.mxu0 0.0
    %916 = vmatpush1.msra.mxu0 0.0
    %917 = vmatprep.subr.mxu0 0.0
    %918 = vmatpush1.msra.mxu0 0.0
    %919 = vmatprep.subr.mxu0 0.0
    %920 = vmatpush1.msra.mxu0 0.0
    %921 = vmatprep.subr.mxu0 0.0
    %922 = vmatpush1.msra.mxu0 0.0
    %923 = vmatprep.subr.mxu0 0.0
    %924 = vmatpush1.msra.mxu0 0.0
    %925 = vmatprep.subr.mxu0 0.0
    %926 = vmatpush1.msra.mxu0 0.0
    %927 = vmatprep.subr.mxu0 0.0
    %928 = vmatpush1.msra.mxu0 0.0
    %929 = vmatprep.subr.mxu0 0.0
    %930 = vmatpush1.msra.mxu0 %v904
    %931 = vmatprep.subr.mxu0 0.0
    %932 = vmatpush1.msra.mxu0 %v903
    %933 = vmatprep.subr.mxu0 0.0
    %934 = vmatpush1.msra.mxu0 %v902
    %935 = vmatprep.subr.mxu0 0.0
    %936 = vmatpush1.msra.mxu0 %v901
    %937 = vmatprep.subr.mxu0 0.0
    %938 = vmatpush2.msra.mxu0 0.0
    %939 = vmatprep.subr.mxu0 0.0
    %940 = vmatpush2.msra.mxu0 0.0
    %941 = vmatprep.subr.mxu0 0.0
    %942 = vmatpush2.msra.mxu0 0.0
    %943 = vmatprep.subr.mxu0 0.0
    %944 = vmatpush2.msra.mxu0 0.0
    %945 = vmatprep.subr.mxu0 0.0
    %946 = vmatpush2.msra.mxu0 0.0
    %947 = vmatprep.subr.mxu0 0.0
    %948 = vmatpush2.msra.mxu0 0.0
    %949 = vmatprep.subr.mxu0 0.0
    %950 = vmatpush2.msra.mxu0 0.0
    %951 = vmatprep.subr.mxu0 0.0
    %952 = vmatpush2.msra.mxu0 0.0
    %953 = vmatprep.subr.mxu0 0.0
    %954 = vmatpush2.msra.mxu0 0.0
    %955 = vmatprep.subr.mxu0 0.0
    %956 = vmatpush2.msra.mxu0 0.0
    %957 = vmatprep.subr.mxu0 0.0
    %958 = vmatpush2.msra.mxu0 0.0
    %959 = vmatprep.subr.mxu0 0.0
    %960 = vmatpush2.msra.mxu0 0.0
    %961 = vmatprep.subr.mxu0 0.0
    %962 = vmatpush2.msra.mxu0 0.0
    %963 = vmatprep.subr.mxu0 0.0
    %964 = vmatpush2.msra.mxu0 0.0
    %965 = vmatprep.subr.mxu0 0.0
    %966 = vmatpush2.msra.mxu0 0.0
    %967 = vmatprep.subr.mxu0 0.0
    %968 = vmatpush2.msra.mxu0 0.0
    %969 = vmatprep.mubr.f32.mxu0 0.0
    %970 = vmatmul.mubr.f32.gmra.mxu0 %v83
    %v971 = vpop.f32.mrf.mxu0
    %v972 = vadd.f32 0.0, %v971
    %v973 = vpop.f32.mrf.mxu0
    %974 = vmatprep.mubr.f32.mxu0 0.0
    %975 = vmatmul.mubr.f32.gmra.mxu0 %v86
    %v976 = vpop.f32.mrf.mxu0
    %v977 = vadd.f32 0.0, %v976
    %v978 = vpop.f32.mrf.mxu0
    %979 = vmatprep.mubr.f32.mxu0 0.0
    %980 = vmatmul.mubr.f32.gmra.mxu0 %v89
    %v981 = vpop.f32.mrf.mxu0
    %v982 = vadd.f32 0.0, %v981
    %v983 = vpop.f32.mrf.mxu0
    %984 = vmatprep.mubr.f32.mxu0 0.0
    %985 = vmatmul.mubr.f32.gmra.mxu0 %v92
    %v986 = vpop.f32.mrf.mxu0
    %v987 = vadd.f32 0.0, %v986
    %v988 = vpop.f32.mrf.mxu0
    %989 = vdwg.mxu0
    %vm990 = vcmp.eq.f32.partialorder %v41, 3.0
    %vm991 = vcmp.eq.f32.partialorder %v42, 3.0
    %vm992 = vcmp.eq.f32.partialorder %v43, 3.0
    %vm993 = vcmp.eq.f32.partialorder %v44, 3.0
    %v994 = vsel %vm990, 1, 0
    %v995 = vsel %vm991, 1, 0
    %v996 = vsel %vm992, 1, 0
    %v997 = vsel %vm993, 1, 0
    %v998 = vcvt.s32.f32 %v994
    %v999 = vcvt.s32.f32 %v995
    %v1000 = vcvt.s32.f32 %v996
    %v1001 = vcvt.s32.f32 %v997
    %1003 = vset.pattern.permute.xlu0 0
    %1004 = vperm.xlu0 %1003, %v998
    %v1005 = vpop.permute.xlu0 %1004
    %1008 = vset.pattern.permute.xlu0 0
    %1009 = vperm.xlu0 %1008, %v999
    %v1010 = vpop.permute.xlu0 %1009
    %1013 = vset.pattern.permute.xlu0 0
    %1014 = vperm.xlu0 %1013, %v1000
    %v1015 = vpop.permute.xlu0 %1014
    %1018 = vset.pattern.permute.xlu0 0
    %1019 = vperm.xlu0 %1018, %v1001
    %v1020 = vpop.permute.xlu0 %1019
    %v1022 = vmul.f32 %v1005, %v972
    %v1023 = vmul.f32 %v1010, %v977
    %v1024 = vmul.f32 %v1015, %v982
    %v1025 = vmul.f32 %v1020, %v987
    %v1026 = vadd.f32 %v747, %v1022
    %v1027 = vadd.f32 %v748, %v1023
    %v1028 = vadd.f32 %v749, %v1024
    %v1029 = vadd.f32 %v750, %v1025
    %v1030 = vsub.f32 %v25, %v972
    %v1031 = vsub.f32 %v26, %v977
    %v1032 = vsub.f32 %v27, %v982
    %v1033 = vsub.f32 %v28, %v987
    %v1034 = vmul.f32 %v1030, %v1030
    %v1035 = vmul.f32 %v1031, %v1031
    %v1036 = vmul.f32 %v1032, %v1032
    %v1037 = vmul.f32 %v1033, %v1033
    %v1038 = vsel %vm195, %v1034, 0.0
    %1039 = vadd.xlane.f32.xlu0 %v1038
    %v1040 = vpop.xlane.xlu0 %1039
    %v1041 = vsel %vm195, %v1035, 0.0
    %1042 = vadd.xlane.f32.xlu0 %v1041
    %v1043 = vpop.xlane.xlu0 %1042
    %v1044 = vsel %vm195, %v1036, 0.0
    %1045 = vadd.xlane.f32.xlu0 %v1044
    %v1046 = vpop.xlane.xlu0 %1045
    %v1047 = vsel %vm195, %v1037, 0.0
    %1048 = vadd.xlane.f32.xlu0 %v1047
    %v1049 = vpop.xlane.xlu0 %1048
    %v1050 = vmin.f32 %v771, %v1040
    %v1051 = vmin.f32 %v772, %v1043
    %v1052 = vmin.f32 %v773, %v1046
    %v1053 = vmin.f32 %v774, %v1049
    %v1054 = vsel %vm212, %v1050, -1e+30
    %v1055 = vsel %vm213, %v1051, -1e+30
    %v1056 = vsel %vm214, %v1052, -1e+30
    %v1057 = vsel %vm215, %v1053, -1e+30
    %v1058 = vsel %vm220, %v1054, -inf
    %v1059 = vsel %vm220, %v1055, -inf
    %v1060 = vsel %vm220, %v1056, -inf
    %v1061 = vsel %vm220, %v1057, -inf
    %v1062 = vmax.f32 %v1058, %v1059
    %v1063 = vmax.f32 %v1060, %v1061
    %v1064 = vmax.f32 %v1062, %v1063
    %v1065 = vrot.slane %v1064, 4
    %v1066 = vmax.f32 %v1064, %v1065
    %v1067 = vrot.slane %v1066, 2
    %v1068 = vmax.f32 %v1066, %v1067
    %v1069 = vrot.slane %v1068, 1
    %v1070 = vmax.f32 %v1068, %v1069
    %v1071 = vmul.f32 %v37, %v1070
    %v1072 = vmul.f32 %v38, %v1070
    %v1073 = vmul.f32 %v39, %v1070
    %v1074 = vmul.f32 %v40, %v1070
    %v1075 = vsel %vm220, %v1071, 0.0
    %1076 = vadd.xlane.f32.xlu0 %v1075
    %v1077 = vpop.xlane.xlu0 %1076
    %v1078 = vsel %vm220, %v1072, 0.0
    %1079 = vadd.xlane.f32.xlu0 %v1078
    %v1080 = vpop.xlane.xlu0 %1079
    %v1081 = vsel %vm220, %v1073, 0.0
    %1082 = vadd.xlane.f32.xlu0 %v1081
    %v1083 = vpop.xlane.xlu0 %1082
    %v1084 = vsel %vm220, %v1074, 0.0
    %1085 = vadd.xlane.f32.xlu0 %v1084
    %v1086 = vpop.xlane.xlu0 %1085
    %vm1087 = vcmp.ge.f32.partialorder %v1050, %v1077
    %vm1088 = vcmp.ge.f32.partialorder %v1051, %v1080
    %vm1089 = vcmp.ge.f32.partialorder %v1052, %v1083
    %vm1090 = vcmp.ge.f32.partialorder %v1053, %v1086
    %v1091 = vsel %vm1087, %v41, 16.0
    %v1092 = vsel %vm1088, %v42, 16.0
    %v1093 = vsel %vm1089, %v43, 16.0
    %v1094 = vsel %vm1090, %v44, 16.0
    %1096 = vset.pattern.permute.xlu0 0
    %1097 = vperm.xlu0 %1096, %v1091
    %v1098 = vpop.permute.xlu0 %1097
    %1101 = vset.pattern.permute.xlu0 0
    %1102 = vperm.xlu0 %1101, %v1092
    %v1103 = vpop.permute.xlu0 %1102
    %1106 = vset.pattern.permute.xlu0 0
    %1107 = vperm.xlu0 %1106, %v1093
    %v1108 = vpop.permute.xlu0 %1107
    %1111 = vset.pattern.permute.xlu0 0
    %1112 = vperm.xlu0 %1111, %v1094
    %v1113 = vpop.permute.xlu0 %1112
    %v1115 = vsel %vm212, %v1098, 16.0
    %v1116 = vsel %vm213, %v1103, 16.0
    %v1117 = vsel %vm214, %v1108, 16.0
    %v1118 = vsel %vm215, %v1113, 16.0
    %v1119 = vsel %vm220, %v1115, inf
    %v1120 = vsel %vm220, %v1116, inf
    %v1121 = vsel %vm220, %v1117, inf
    %v1122 = vsel %vm220, %v1118, inf
    %v1123 = vmin.f32 %v1119, %v1120
    %v1124 = vmin.f32 %v1121, %v1122
    %v1125 = vmin.f32 %v1123, %v1124
    %v1126 = vrot.slane %v1125, 4
    %v1127 = vmin.f32 %v1125, %v1126
    %v1128 = vrot.slane %v1127, 2
    %v1129 = vmin.f32 %v1127, %v1128
    %v1130 = vrot.slane %v1129, 1
    %v1131 = vmin.f32 %v1129, %v1130
    %v1132 = vmul.f32 %v37, %v1131
    %v1133 = vmul.f32 %v38, %v1131
    %v1134 = vmul.f32 %v39, %v1131
    %v1135 = vmul.f32 %v40, %v1131
    %v1136 = vsel %vm220, %v1132, 0.0
    %1137 = vadd.xlane.f32.xlu0 %v1136
    %v1138 = vpop.xlane.xlu0 %1137
    %v1139 = vsel %vm220, %v1133, 0.0
    %1140 = vadd.xlane.f32.xlu0 %v1139
    %v1141 = vpop.xlane.xlu0 %1140
    %v1142 = vsel %vm220, %v1134, 0.0
    %1143 = vadd.xlane.f32.xlu0 %v1142
    %v1144 = vpop.xlane.xlu0 %1143
    %v1145 = vsel %vm220, %v1135, 0.0
    %1146 = vadd.xlane.f32.xlu0 %v1145
    %v1147 = vpop.xlane.xlu0 %1146
    %vm1148 = vcmp.eq.f32.partialorder %v41, %v1138
    %vm1149 = vcmp.eq.f32.partialorder %v42, %v1141
    %vm1150 = vcmp.eq.f32.partialorder %v43, %v1144
    %vm1151 = vcmp.eq.f32.partialorder %v44, %v1147
    %v1152 = vsel %vm1148, 1, 0
    %v1153 = vsel %vm1149, 1, 0
    %v1154 = vsel %vm1150, 1, 0
    %v1155 = vsel %vm1151, 1, 0
    %v1156 = vcvt.s32.f32 %v1152
    %v1157 = vcvt.s32.f32 %v1153
    %v1158 = vcvt.s32.f32 %v1154
    %v1159 = vcvt.s32.f32 %v1155
    %1161 = vset.pattern.permute.xlu0 0
    %1162 = vperm.xlu0 %1161, %v1156
    %v1163 = vpop.permute.xlu0 %1162
    %1166 = vset.pattern.permute.xlu0 0
    %1167 = vperm.xlu0 %1166, %v1157
    %v1168 = vpop.permute.xlu0 %1167
    %1171 = vset.pattern.permute.xlu0 0
    %1172 = vperm.xlu0 %1171, %v1158
    %v1173 = vpop.permute.xlu0 %1172
    %1176 = vset.pattern.permute.xlu0 0
    %1177 = vperm.xlu0 %1176, %v1159
    %v1178 = vpop.permute.xlu0 %1177
    %v1180 = vmul.f32 %v1163, %v25
    %v1181 = vmul.f32 %v1168, %v26
    %v1182 = vmul.f32 %v1173, %v27
    %v1183 = vmul.f32 %v1178, %v28
    %1184 = vmatprep.subr.mxu0 0.0
    %1185 = vmatpush1.msra.mxu0 0.0
    %1186 = vmatprep.subr.mxu0 0.0
    %1187 = vmatpush1.msra.mxu0 0.0
    %1188 = vmatprep.subr.mxu0 0.0
    %1189 = vmatpush1.msra.mxu0 0.0
    %1190 = vmatprep.subr.mxu0 0.0
    %1191 = vmatpush1.msra.mxu0 0.0
    %1192 = vmatprep.subr.mxu0 0.0
    %1193 = vmatpush1.msra.mxu0 0.0
    %1194 = vmatprep.subr.mxu0 0.0
    %1195 = vmatpush1.msra.mxu0 0.0
    %1196 = vmatprep.subr.mxu0 0.0
    %1197 = vmatpush1.msra.mxu0 0.0
    %1198 = vmatprep.subr.mxu0 0.0
    %1199 = vmatpush1.msra.mxu0 0.0
    %1200 = vmatprep.subr.mxu0 0.0
    %1201 = vmatpush1.msra.mxu0 0.0
    %1202 = vmatprep.subr.mxu0 0.0
    %1203 = vmatpush1.msra.mxu0 0.0
    %1204 = vmatprep.subr.mxu0 0.0
    %1205 = vmatpush1.msra.mxu0 0.0
    %1206 = vmatprep.subr.mxu0 0.0
    %1207 = vmatpush1.msra.mxu0 0.0
    %1208 = vmatprep.subr.mxu0 0.0
    %1209 = vmatpush1.msra.mxu0 %v1183
    %1210 = vmatprep.subr.mxu0 0.0
    %1211 = vmatpush1.msra.mxu0 %v1182
    %1212 = vmatprep.subr.mxu0 0.0
    %1213 = vmatpush1.msra.mxu0 %v1181
    %1214 = vmatprep.subr.mxu0 0.0
    %1215 = vmatpush1.msra.mxu0 %v1180
    %1216 = vmatprep.subr.mxu0 0.0
    %1217 = vmatpush2.msra.mxu0 0.0
    %1218 = vmatprep.subr.mxu0 0.0
    %1219 = vmatpush2.msra.mxu0 0.0
    %1220 = vmatprep.subr.mxu0 0.0
    %1221 = vmatpush2.msra.mxu0 0.0
    %1222 = vmatprep.subr.mxu0 0.0
    %1223 = vmatpush2.msra.mxu0 0.0
    %1224 = vmatprep.subr.mxu0 0.0
    %1225 = vmatpush2.msra.mxu0 0.0
    %1226 = vmatprep.subr.mxu0 0.0
    %1227 = vmatpush2.msra.mxu0 0.0
    %1228 = vmatprep.subr.mxu0 0.0
    %1229 = vmatpush2.msra.mxu0 0.0
    %1230 = vmatprep.subr.mxu0 0.0
    %1231 = vmatpush2.msra.mxu0 0.0
    %1232 = vmatprep.subr.mxu0 0.0
    %1233 = vmatpush2.msra.mxu0 0.0
    %1234 = vmatprep.subr.mxu0 0.0
    %1235 = vmatpush2.msra.mxu0 0.0
    %1236 = vmatprep.subr.mxu0 0.0
    %1237 = vmatpush2.msra.mxu0 0.0
    %1238 = vmatprep.subr.mxu0 0.0
    %1239 = vmatpush2.msra.mxu0 0.0
    %1240 = vmatprep.subr.mxu0 0.0
    %1241 = vmatpush2.msra.mxu0 0.0
    %1242 = vmatprep.subr.mxu0 0.0
    %1243 = vmatpush2.msra.mxu0 0.0
    %1244 = vmatprep.subr.mxu0 0.0
    %1245 = vmatpush2.msra.mxu0 0.0
    %1246 = vmatprep.subr.mxu0 0.0
    %1247 = vmatpush2.msra.mxu0 0.0
    %1248 = vmatprep.mubr.f32.mxu0 0.0
    %1249 = vmatmul.mubr.f32.gmra.mxu0 %v83
    %v1250 = vpop.f32.mrf.mxu0
    %v1251 = vadd.f32 0.0, %v1250
    %v1252 = vpop.f32.mrf.mxu0
    %1253 = vmatprep.mubr.f32.mxu0 0.0
    %1254 = vmatmul.mubr.f32.gmra.mxu0 %v86
    %v1255 = vpop.f32.mrf.mxu0
    %v1256 = vadd.f32 0.0, %v1255
    %v1257 = vpop.f32.mrf.mxu0
    %1258 = vmatprep.mubr.f32.mxu0 0.0
    %1259 = vmatmul.mubr.f32.gmra.mxu0 %v89
    %v1260 = vpop.f32.mrf.mxu0
    %v1261 = vadd.f32 0.0, %v1260
    %v1262 = vpop.f32.mrf.mxu0
    %1263 = vmatprep.mubr.f32.mxu0 0.0
    %1264 = vmatmul.mubr.f32.gmra.mxu0 %v92
    %v1265 = vpop.f32.mrf.mxu0
    %v1266 = vadd.f32 0.0, %v1265
    %v1267 = vpop.f32.mrf.mxu0
    %1268 = vdwg.mxu0
    %vm1269 = vcmp.eq.f32.partialorder %v41, 4.0
    %vm1270 = vcmp.eq.f32.partialorder %v42, 4.0
    %vm1271 = vcmp.eq.f32.partialorder %v43, 4.0
    %vm1272 = vcmp.eq.f32.partialorder %v44, 4.0
    %v1273 = vsel %vm1269, 1, 0
    %v1274 = vsel %vm1270, 1, 0
    %v1275 = vsel %vm1271, 1, 0
    %v1276 = vsel %vm1272, 1, 0
    %v1277 = vcvt.s32.f32 %v1273
    %v1278 = vcvt.s32.f32 %v1274
    %v1279 = vcvt.s32.f32 %v1275
    %v1280 = vcvt.s32.f32 %v1276
    %1282 = vset.pattern.permute.xlu0 0
    %1283 = vperm.xlu0 %1282, %v1277
    %v1284 = vpop.permute.xlu0 %1283
    %1287 = vset.pattern.permute.xlu0 0
    %1288 = vperm.xlu0 %1287, %v1278
    %v1289 = vpop.permute.xlu0 %1288
    %1292 = vset.pattern.permute.xlu0 0
    %1293 = vperm.xlu0 %1292, %v1279
    %v1294 = vpop.permute.xlu0 %1293
    %1297 = vset.pattern.permute.xlu0 0
    %1298 = vperm.xlu0 %1297, %v1280
    %v1299 = vpop.permute.xlu0 %1298
    %v1301 = vmul.f32 %v1284, %v1251
    %v1302 = vmul.f32 %v1289, %v1256
    %v1303 = vmul.f32 %v1294, %v1261
    %v1304 = vmul.f32 %v1299, %v1266
    %v1305 = vadd.f32 %v1026, %v1301
    %v1306 = vadd.f32 %v1027, %v1302
    %v1307 = vadd.f32 %v1028, %v1303
    %v1308 = vadd.f32 %v1029, %v1304
    %v1309 = vsub.f32 %v25, %v1251
    %v1310 = vsub.f32 %v26, %v1256
    %v1311 = vsub.f32 %v27, %v1261
    %v1312 = vsub.f32 %v28, %v1266
    %v1313 = vmul.f32 %v1309, %v1309
    %v1314 = vmul.f32 %v1310, %v1310
    %v1315 = vmul.f32 %v1311, %v1311
    %v1316 = vmul.f32 %v1312, %v1312
    %v1317 = vsel %vm195, %v1313, 0.0
    %1318 = vadd.xlane.f32.xlu0 %v1317
    %v1319 = vpop.xlane.xlu0 %1318
    %v1320 = vsel %vm195, %v1314, 0.0
    %1321 = vadd.xlane.f32.xlu0 %v1320
    %v1322 = vpop.xlane.xlu0 %1321
    %v1323 = vsel %vm195, %v1315, 0.0
    %1324 = vadd.xlane.f32.xlu0 %v1323
    %v1325 = vpop.xlane.xlu0 %1324
    %v1326 = vsel %vm195, %v1316, 0.0
    %1327 = vadd.xlane.f32.xlu0 %v1326
    %v1328 = vpop.xlane.xlu0 %1327
    %v1329 = vmin.f32 %v1050, %v1319
    %v1330 = vmin.f32 %v1051, %v1322
    %v1331 = vmin.f32 %v1052, %v1325
    %v1332 = vmin.f32 %v1053, %v1328
    %v1333 = vsel %vm212, %v1329, -1e+30
    %v1334 = vsel %vm213, %v1330, -1e+30
    %v1335 = vsel %vm214, %v1331, -1e+30
    %v1336 = vsel %vm215, %v1332, -1e+30
    %v1337 = vsel %vm220, %v1333, -inf
    %v1338 = vsel %vm220, %v1334, -inf
    %v1339 = vsel %vm220, %v1335, -inf
    %v1340 = vsel %vm220, %v1336, -inf
    %v1341 = vmax.f32 %v1337, %v1338
    %v1342 = vmax.f32 %v1339, %v1340
    %v1343 = vmax.f32 %v1341, %v1342
    %v1344 = vrot.slane %v1343, 4
    %v1345 = vmax.f32 %v1343, %v1344
    %v1346 = vrot.slane %v1345, 2
    %v1347 = vmax.f32 %v1345, %v1346
    %v1348 = vrot.slane %v1347, 1
    %v1349 = vmax.f32 %v1347, %v1348
    %v1350 = vmul.f32 %v37, %v1349
    %v1351 = vmul.f32 %v38, %v1349
    %v1352 = vmul.f32 %v39, %v1349
    %v1353 = vmul.f32 %v40, %v1349
    %v1354 = vsel %vm220, %v1350, 0.0
    %1355 = vadd.xlane.f32.xlu0 %v1354
    %v1356 = vpop.xlane.xlu0 %1355
    %v1357 = vsel %vm220, %v1351, 0.0
    %1358 = vadd.xlane.f32.xlu0 %v1357
    %v1359 = vpop.xlane.xlu0 %1358
    %v1360 = vsel %vm220, %v1352, 0.0
    %1361 = vadd.xlane.f32.xlu0 %v1360
    %v1362 = vpop.xlane.xlu0 %1361
    %v1363 = vsel %vm220, %v1353, 0.0
    %1364 = vadd.xlane.f32.xlu0 %v1363
    %v1365 = vpop.xlane.xlu0 %1364
    %vm1366 = vcmp.ge.f32.partialorder %v1329, %v1356
    %vm1367 = vcmp.ge.f32.partialorder %v1330, %v1359
    %vm1368 = vcmp.ge.f32.partialorder %v1331, %v1362
    %vm1369 = vcmp.ge.f32.partialorder %v1332, %v1365
    %v1370 = vsel %vm1366, %v41, 16.0
    %v1371 = vsel %vm1367, %v42, 16.0
    %v1372 = vsel %vm1368, %v43, 16.0
    %v1373 = vsel %vm1369, %v44, 16.0
    %1375 = vset.pattern.permute.xlu0 0
    %1376 = vperm.xlu0 %1375, %v1370
    %v1377 = vpop.permute.xlu0 %1376
    %1380 = vset.pattern.permute.xlu0 0
    %1381 = vperm.xlu0 %1380, %v1371
    %v1382 = vpop.permute.xlu0 %1381
    %1385 = vset.pattern.permute.xlu0 0
    %1386 = vperm.xlu0 %1385, %v1372
    %v1387 = vpop.permute.xlu0 %1386
    %1390 = vset.pattern.permute.xlu0 0
    %1391 = vperm.xlu0 %1390, %v1373
    %v1392 = vpop.permute.xlu0 %1391
    %v1394 = vsel %vm212, %v1377, 16.0
    %v1395 = vsel %vm213, %v1382, 16.0
    %v1396 = vsel %vm214, %v1387, 16.0
    %v1397 = vsel %vm215, %v1392, 16.0
    %v1398 = vsel %vm220, %v1394, inf
    %v1399 = vsel %vm220, %v1395, inf
    %v1400 = vsel %vm220, %v1396, inf
    %v1401 = vsel %vm220, %v1397, inf
    %v1402 = vmin.f32 %v1398, %v1399
    %v1403 = vmin.f32 %v1400, %v1401
    %v1404 = vmin.f32 %v1402, %v1403
    %v1405 = vrot.slane %v1404, 4
    %v1406 = vmin.f32 %v1404, %v1405
    %v1407 = vrot.slane %v1406, 2
    %v1408 = vmin.f32 %v1406, %v1407
    %v1409 = vrot.slane %v1408, 1
    %v1410 = vmin.f32 %v1408, %v1409
    %v1411 = vmul.f32 %v37, %v1410
    %v1412 = vmul.f32 %v38, %v1410
    %v1413 = vmul.f32 %v39, %v1410
    %v1414 = vmul.f32 %v40, %v1410
    %v1415 = vsel %vm220, %v1411, 0.0
    %1416 = vadd.xlane.f32.xlu0 %v1415
    %v1417 = vpop.xlane.xlu0 %1416
    %v1418 = vsel %vm220, %v1412, 0.0
    %1419 = vadd.xlane.f32.xlu0 %v1418
    %v1420 = vpop.xlane.xlu0 %1419
    %v1421 = vsel %vm220, %v1413, 0.0
    %1422 = vadd.xlane.f32.xlu0 %v1421
    %v1423 = vpop.xlane.xlu0 %1422
    %v1424 = vsel %vm220, %v1414, 0.0
    %1425 = vadd.xlane.f32.xlu0 %v1424
    %v1426 = vpop.xlane.xlu0 %1425
    %vm1427 = vcmp.eq.f32.partialorder %v41, %v1417
    %vm1428 = vcmp.eq.f32.partialorder %v42, %v1420
    %vm1429 = vcmp.eq.f32.partialorder %v43, %v1423
    %vm1430 = vcmp.eq.f32.partialorder %v44, %v1426
    %v1431 = vsel %vm1427, 1, 0
    %v1432 = vsel %vm1428, 1, 0
    %v1433 = vsel %vm1429, 1, 0
    %v1434 = vsel %vm1430, 1, 0
    %v1435 = vcvt.s32.f32 %v1431
    %v1436 = vcvt.s32.f32 %v1432
    %v1437 = vcvt.s32.f32 %v1433
    %v1438 = vcvt.s32.f32 %v1434
    %1440 = vset.pattern.permute.xlu0 0
    %1441 = vperm.xlu0 %1440, %v1435
    %v1442 = vpop.permute.xlu0 %1441
    %1445 = vset.pattern.permute.xlu0 0
    %1446 = vperm.xlu0 %1445, %v1436
    %v1447 = vpop.permute.xlu0 %1446
    %1450 = vset.pattern.permute.xlu0 0
    %1451 = vperm.xlu0 %1450, %v1437
    %v1452 = vpop.permute.xlu0 %1451
    %1455 = vset.pattern.permute.xlu0 0
    %1456 = vperm.xlu0 %1455, %v1438
    %v1457 = vpop.permute.xlu0 %1456
    %v1459 = vmul.f32 %v1442, %v25
    %v1460 = vmul.f32 %v1447, %v26
    %v1461 = vmul.f32 %v1452, %v27
    %v1462 = vmul.f32 %v1457, %v28
    %1463 = vmatprep.subr.mxu0 0.0
    %1464 = vmatpush1.msra.mxu0 0.0
    %1465 = vmatprep.subr.mxu0 0.0
    %1466 = vmatpush1.msra.mxu0 0.0
    %1467 = vmatprep.subr.mxu0 0.0
    %1468 = vmatpush1.msra.mxu0 0.0
    %1469 = vmatprep.subr.mxu0 0.0
    %1470 = vmatpush1.msra.mxu0 0.0
    %1471 = vmatprep.subr.mxu0 0.0
    %1472 = vmatpush1.msra.mxu0 0.0
    %1473 = vmatprep.subr.mxu0 0.0
    %1474 = vmatpush1.msra.mxu0 0.0
    %1475 = vmatprep.subr.mxu0 0.0
    %1476 = vmatpush1.msra.mxu0 0.0
    %1477 = vmatprep.subr.mxu0 0.0
    %1478 = vmatpush1.msra.mxu0 0.0
    %1479 = vmatprep.subr.mxu0 0.0
    %1480 = vmatpush1.msra.mxu0 0.0
    %1481 = vmatprep.subr.mxu0 0.0
    %1482 = vmatpush1.msra.mxu0 0.0
    %1483 = vmatprep.subr.mxu0 0.0
    %1484 = vmatpush1.msra.mxu0 0.0
    %1485 = vmatprep.subr.mxu0 0.0
    %1486 = vmatpush1.msra.mxu0 0.0
    %1487 = vmatprep.subr.mxu0 0.0
    %1488 = vmatpush1.msra.mxu0 %v1462
    %1489 = vmatprep.subr.mxu0 0.0
    %1490 = vmatpush1.msra.mxu0 %v1461
    %1491 = vmatprep.subr.mxu0 0.0
    %1492 = vmatpush1.msra.mxu0 %v1460
    %1493 = vmatprep.subr.mxu0 0.0
    %1494 = vmatpush1.msra.mxu0 %v1459
    %1495 = vmatprep.subr.mxu0 0.0
    %1496 = vmatpush2.msra.mxu0 0.0
    %1497 = vmatprep.subr.mxu0 0.0
    %1498 = vmatpush2.msra.mxu0 0.0
    %1499 = vmatprep.subr.mxu0 0.0
    %1500 = vmatpush2.msra.mxu0 0.0
    %1501 = vmatprep.subr.mxu0 0.0
    %1502 = vmatpush2.msra.mxu0 0.0
    %1503 = vmatprep.subr.mxu0 0.0
    %1504 = vmatpush2.msra.mxu0 0.0
    %1505 = vmatprep.subr.mxu0 0.0
    %1506 = vmatpush2.msra.mxu0 0.0
    %1507 = vmatprep.subr.mxu0 0.0
    %1508 = vmatpush2.msra.mxu0 0.0
    %1509 = vmatprep.subr.mxu0 0.0
    %1510 = vmatpush2.msra.mxu0 0.0
    %1511 = vmatprep.subr.mxu0 0.0
    %1512 = vmatpush2.msra.mxu0 0.0
    %1513 = vmatprep.subr.mxu0 0.0
    %1514 = vmatpush2.msra.mxu0 0.0
    %1515 = vmatprep.subr.mxu0 0.0
    %1516 = vmatpush2.msra.mxu0 0.0
    %1517 = vmatprep.subr.mxu0 0.0
    %1518 = vmatpush2.msra.mxu0 0.0
    %1519 = vmatprep.subr.mxu0 0.0
    %1520 = vmatpush2.msra.mxu0 0.0
    %1521 = vmatprep.subr.mxu0 0.0
    %1522 = vmatpush2.msra.mxu0 0.0
    %1523 = vmatprep.subr.mxu0 0.0
    %1524 = vmatpush2.msra.mxu0 0.0
    %1525 = vmatprep.subr.mxu0 0.0
    %1526 = vmatpush2.msra.mxu0 0.0
    %1527 = vmatprep.mubr.f32.mxu0 0.0
    %1528 = vmatmul.mubr.f32.gmra.mxu0 %v83
    %v1529 = vpop.f32.mrf.mxu0
    %v1530 = vadd.f32 0.0, %v1529
    %v1531 = vpop.f32.mrf.mxu0
    %1532 = vmatprep.mubr.f32.mxu0 0.0
    %1533 = vmatmul.mubr.f32.gmra.mxu0 %v86
    %v1534 = vpop.f32.mrf.mxu0
    %v1535 = vadd.f32 0.0, %v1534
    %v1536 = vpop.f32.mrf.mxu0
    %1537 = vmatprep.mubr.f32.mxu0 0.0
    %1538 = vmatmul.mubr.f32.gmra.mxu0 %v89
    %v1539 = vpop.f32.mrf.mxu0
    %v1540 = vadd.f32 0.0, %v1539
    %v1541 = vpop.f32.mrf.mxu0
    %1542 = vmatprep.mubr.f32.mxu0 0.0
    %1543 = vmatmul.mubr.f32.gmra.mxu0 %v92
    %v1544 = vpop.f32.mrf.mxu0
    %v1545 = vadd.f32 0.0, %v1544
    %v1546 = vpop.f32.mrf.mxu0
    %1547 = vdwg.mxu0
    %vm1548 = vcmp.eq.f32.partialorder %v41, 5.0
    %vm1549 = vcmp.eq.f32.partialorder %v42, 5.0
    %vm1550 = vcmp.eq.f32.partialorder %v43, 5.0
    %vm1551 = vcmp.eq.f32.partialorder %v44, 5.0
    %v1552 = vsel %vm1548, 1, 0
    %v1553 = vsel %vm1549, 1, 0
    %v1554 = vsel %vm1550, 1, 0
    %v1555 = vsel %vm1551, 1, 0
    %v1556 = vcvt.s32.f32 %v1552
    %v1557 = vcvt.s32.f32 %v1553
    %v1558 = vcvt.s32.f32 %v1554
    %v1559 = vcvt.s32.f32 %v1555
    %1561 = vset.pattern.permute.xlu0 0
    %1562 = vperm.xlu0 %1561, %v1556
    %v1563 = vpop.permute.xlu0 %1562
    %1566 = vset.pattern.permute.xlu0 0
    %1567 = vperm.xlu0 %1566, %v1557
    %v1568 = vpop.permute.xlu0 %1567
    %1571 = vset.pattern.permute.xlu0 0
    %1572 = vperm.xlu0 %1571, %v1558
    %v1573 = vpop.permute.xlu0 %1572
    %1576 = vset.pattern.permute.xlu0 0
    %1577 = vperm.xlu0 %1576, %v1559
    %v1578 = vpop.permute.xlu0 %1577
    %v1580 = vmul.f32 %v1563, %v1530
    %v1581 = vmul.f32 %v1568, %v1535
    %v1582 = vmul.f32 %v1573, %v1540
    %v1583 = vmul.f32 %v1578, %v1545
    %v1584 = vadd.f32 %v1305, %v1580
    %v1585 = vadd.f32 %v1306, %v1581
    %v1586 = vadd.f32 %v1307, %v1582
    %v1587 = vadd.f32 %v1308, %v1583
    %v1588 = vsub.f32 %v25, %v1530
    %v1589 = vsub.f32 %v26, %v1535
    %v1590 = vsub.f32 %v27, %v1540
    %v1591 = vsub.f32 %v28, %v1545
    %v1592 = vmul.f32 %v1588, %v1588
    %v1593 = vmul.f32 %v1589, %v1589
    %v1594 = vmul.f32 %v1590, %v1590
    %v1595 = vmul.f32 %v1591, %v1591
    %v1596 = vsel %vm195, %v1592, 0.0
    %1597 = vadd.xlane.f32.xlu0 %v1596
    %v1598 = vpop.xlane.xlu0 %1597
    %v1599 = vsel %vm195, %v1593, 0.0
    %1600 = vadd.xlane.f32.xlu0 %v1599
    %v1601 = vpop.xlane.xlu0 %1600
    %v1602 = vsel %vm195, %v1594, 0.0
    %1603 = vadd.xlane.f32.xlu0 %v1602
    %v1604 = vpop.xlane.xlu0 %1603
    %v1605 = vsel %vm195, %v1595, 0.0
    %1606 = vadd.xlane.f32.xlu0 %v1605
    %v1607 = vpop.xlane.xlu0 %1606
    %v1608 = vmin.f32 %v1329, %v1598
    %v1609 = vmin.f32 %v1330, %v1601
    %v1610 = vmin.f32 %v1331, %v1604
    %v1611 = vmin.f32 %v1332, %v1607
    %v1612 = vsel %vm212, %v1608, -1e+30
    %v1613 = vsel %vm213, %v1609, -1e+30
    %v1614 = vsel %vm214, %v1610, -1e+30
    %v1615 = vsel %vm215, %v1611, -1e+30
    %v1616 = vsel %vm220, %v1612, -inf
    %v1617 = vsel %vm220, %v1613, -inf
    %v1618 = vsel %vm220, %v1614, -inf
    %v1619 = vsel %vm220, %v1615, -inf
    %v1620 = vmax.f32 %v1616, %v1617
    %v1621 = vmax.f32 %v1618, %v1619
    %v1622 = vmax.f32 %v1620, %v1621
    %v1623 = vrot.slane %v1622, 4
    %v1624 = vmax.f32 %v1622, %v1623
    %v1625 = vrot.slane %v1624, 2
    %v1626 = vmax.f32 %v1624, %v1625
    %v1627 = vrot.slane %v1626, 1
    %v1628 = vmax.f32 %v1626, %v1627
    %v1629 = vmul.f32 %v37, %v1628
    %v1630 = vmul.f32 %v38, %v1628
    %v1631 = vmul.f32 %v39, %v1628
    %v1632 = vmul.f32 %v40, %v1628
    %v1633 = vsel %vm220, %v1629, 0.0
    %1634 = vadd.xlane.f32.xlu0 %v1633
    %v1635 = vpop.xlane.xlu0 %1634
    %v1636 = vsel %vm220, %v1630, 0.0
    %1637 = vadd.xlane.f32.xlu0 %v1636
    %v1638 = vpop.xlane.xlu0 %1637
    %v1639 = vsel %vm220, %v1631, 0.0
    %1640 = vadd.xlane.f32.xlu0 %v1639
    %v1641 = vpop.xlane.xlu0 %1640
    %v1642 = vsel %vm220, %v1632, 0.0
    %1643 = vadd.xlane.f32.xlu0 %v1642
    %v1644 = vpop.xlane.xlu0 %1643
    %vm1645 = vcmp.ge.f32.partialorder %v1608, %v1635
    %vm1646 = vcmp.ge.f32.partialorder %v1609, %v1638
    %vm1647 = vcmp.ge.f32.partialorder %v1610, %v1641
    %vm1648 = vcmp.ge.f32.partialorder %v1611, %v1644
    %v1649 = vsel %vm1645, %v41, 16.0
    %v1650 = vsel %vm1646, %v42, 16.0
    %v1651 = vsel %vm1647, %v43, 16.0
    %v1652 = vsel %vm1648, %v44, 16.0
    %1654 = vset.pattern.permute.xlu0 0
    %1655 = vperm.xlu0 %1654, %v1649
    %v1656 = vpop.permute.xlu0 %1655
    %1659 = vset.pattern.permute.xlu0 0
    %1660 = vperm.xlu0 %1659, %v1650
    %v1661 = vpop.permute.xlu0 %1660
    %1664 = vset.pattern.permute.xlu0 0
    %1665 = vperm.xlu0 %1664, %v1651
    %v1666 = vpop.permute.xlu0 %1665
    %1669 = vset.pattern.permute.xlu0 0
    %1670 = vperm.xlu0 %1669, %v1652
    %v1671 = vpop.permute.xlu0 %1670
    %v1673 = vsel %vm212, %v1656, 16.0
    %v1674 = vsel %vm213, %v1661, 16.0
    %v1675 = vsel %vm214, %v1666, 16.0
    %v1676 = vsel %vm215, %v1671, 16.0
    %v1677 = vsel %vm220, %v1673, inf
    %v1678 = vsel %vm220, %v1674, inf
    %v1679 = vsel %vm220, %v1675, inf
    %v1680 = vsel %vm220, %v1676, inf
    %v1681 = vmin.f32 %v1677, %v1678
    %v1682 = vmin.f32 %v1679, %v1680
    %v1683 = vmin.f32 %v1681, %v1682
    %v1684 = vrot.slane %v1683, 4
    %v1685 = vmin.f32 %v1683, %v1684
    %v1686 = vrot.slane %v1685, 2
    %v1687 = vmin.f32 %v1685, %v1686
    %v1688 = vrot.slane %v1687, 1
    %v1689 = vmin.f32 %v1687, %v1688
    %v1690 = vmul.f32 %v37, %v1689
    %v1691 = vmul.f32 %v38, %v1689
    %v1692 = vmul.f32 %v39, %v1689
    %v1693 = vmul.f32 %v40, %v1689
    %v1694 = vsel %vm220, %v1690, 0.0
    %1695 = vadd.xlane.f32.xlu0 %v1694
    %v1696 = vpop.xlane.xlu0 %1695
    %v1697 = vsel %vm220, %v1691, 0.0
    %1698 = vadd.xlane.f32.xlu0 %v1697
    %v1699 = vpop.xlane.xlu0 %1698
    %v1700 = vsel %vm220, %v1692, 0.0
    %1701 = vadd.xlane.f32.xlu0 %v1700
    %v1702 = vpop.xlane.xlu0 %1701
    %v1703 = vsel %vm220, %v1693, 0.0
    %1704 = vadd.xlane.f32.xlu0 %v1703
    %v1705 = vpop.xlane.xlu0 %1704
    %vm1706 = vcmp.eq.f32.partialorder %v41, %v1696
    %vm1707 = vcmp.eq.f32.partialorder %v42, %v1699
    %vm1708 = vcmp.eq.f32.partialorder %v43, %v1702
    %vm1709 = vcmp.eq.f32.partialorder %v44, %v1705
    %v1710 = vsel %vm1706, 1, 0
    %v1711 = vsel %vm1707, 1, 0
    %v1712 = vsel %vm1708, 1, 0
    %v1713 = vsel %vm1709, 1, 0
    %v1714 = vcvt.s32.f32 %v1710
    %v1715 = vcvt.s32.f32 %v1711
    %v1716 = vcvt.s32.f32 %v1712
    %v1717 = vcvt.s32.f32 %v1713
    %1719 = vset.pattern.permute.xlu0 0
    %1720 = vperm.xlu0 %1719, %v1714
    %v1721 = vpop.permute.xlu0 %1720
    %1724 = vset.pattern.permute.xlu0 0
    %1725 = vperm.xlu0 %1724, %v1715
    %v1726 = vpop.permute.xlu0 %1725
    %1729 = vset.pattern.permute.xlu0 0
    %1730 = vperm.xlu0 %1729, %v1716
    %v1731 = vpop.permute.xlu0 %1730
    %1734 = vset.pattern.permute.xlu0 0
    %1735 = vperm.xlu0 %1734, %v1717
    %v1736 = vpop.permute.xlu0 %1735
    %v1738 = vmul.f32 %v1721, %v25
    %v1739 = vmul.f32 %v1726, %v26
    %v1740 = vmul.f32 %v1731, %v27
    %v1741 = vmul.f32 %v1736, %v28
    %1742 = vmatprep.subr.mxu0 0.0
    %1743 = vmatpush1.msra.mxu0 0.0
    %1744 = vmatprep.subr.mxu0 0.0
    %1745 = vmatpush1.msra.mxu0 0.0
    %1746 = vmatprep.subr.mxu0 0.0
    %1747 = vmatpush1.msra.mxu0 0.0
    %1748 = vmatprep.subr.mxu0 0.0
    %1749 = vmatpush1.msra.mxu0 0.0
    %1750 = vmatprep.subr.mxu0 0.0
    %1751 = vmatpush1.msra.mxu0 0.0
    %1752 = vmatprep.subr.mxu0 0.0
    %1753 = vmatpush1.msra.mxu0 0.0
    %1754 = vmatprep.subr.mxu0 0.0
    %1755 = vmatpush1.msra.mxu0 0.0
    %1756 = vmatprep.subr.mxu0 0.0
    %1757 = vmatpush1.msra.mxu0 0.0
    %1758 = vmatprep.subr.mxu0 0.0
    %1759 = vmatpush1.msra.mxu0 0.0
    %1760 = vmatprep.subr.mxu0 0.0
    %1761 = vmatpush1.msra.mxu0 0.0
    %1762 = vmatprep.subr.mxu0 0.0
    %1763 = vmatpush1.msra.mxu0 0.0
    %1764 = vmatprep.subr.mxu0 0.0
    %1765 = vmatpush1.msra.mxu0 0.0
    %1766 = vmatprep.subr.mxu0 0.0
    %1767 = vmatpush1.msra.mxu0 %v1741
    %1768 = vmatprep.subr.mxu0 0.0
    %1769 = vmatpush1.msra.mxu0 %v1740
    %1770 = vmatprep.subr.mxu0 0.0
    %1771 = vmatpush1.msra.mxu0 %v1739
    %1772 = vmatprep.subr.mxu0 0.0
    %1773 = vmatpush1.msra.mxu0 %v1738
    %1774 = vmatprep.subr.mxu0 0.0
    %1775 = vmatpush2.msra.mxu0 0.0
    %1776 = vmatprep.subr.mxu0 0.0
    %1777 = vmatpush2.msra.mxu0 0.0
    %1778 = vmatprep.subr.mxu0 0.0
    %1779 = vmatpush2.msra.mxu0 0.0
    %1780 = vmatprep.subr.mxu0 0.0
    %1781 = vmatpush2.msra.mxu0 0.0
    %1782 = vmatprep.subr.mxu0 0.0
    %1783 = vmatpush2.msra.mxu0 0.0
    %1784 = vmatprep.subr.mxu0 0.0
    %1785 = vmatpush2.msra.mxu0 0.0
    %1786 = vmatprep.subr.mxu0 0.0
    %1787 = vmatpush2.msra.mxu0 0.0
    %1788 = vmatprep.subr.mxu0 0.0
    %1789 = vmatpush2.msra.mxu0 0.0
    %1790 = vmatprep.subr.mxu0 0.0
    %1791 = vmatpush2.msra.mxu0 0.0
    %1792 = vmatprep.subr.mxu0 0.0
    %1793 = vmatpush2.msra.mxu0 0.0
    %1794 = vmatprep.subr.mxu0 0.0
    %1795 = vmatpush2.msra.mxu0 0.0
    %1796 = vmatprep.subr.mxu0 0.0
    %1797 = vmatpush2.msra.mxu0 0.0
    %1798 = vmatprep.subr.mxu0 0.0
    %1799 = vmatpush2.msra.mxu0 0.0
    %1800 = vmatprep.subr.mxu0 0.0
    %1801 = vmatpush2.msra.mxu0 0.0
    %1802 = vmatprep.subr.mxu0 0.0
    %1803 = vmatpush2.msra.mxu0 0.0
    %1804 = vmatprep.subr.mxu0 0.0
    %1805 = vmatpush2.msra.mxu0 0.0
    %1806 = vmatprep.mubr.f32.mxu0 0.0
    %1807 = vmatmul.mubr.f32.gmra.mxu0 %v83
    %v1808 = vpop.f32.mrf.mxu0
    %v1809 = vadd.f32 0.0, %v1808
    %v1810 = vpop.f32.mrf.mxu0
    %1811 = vmatprep.mubr.f32.mxu0 0.0
    %1812 = vmatmul.mubr.f32.gmra.mxu0 %v86
    %v1813 = vpop.f32.mrf.mxu0
    %v1814 = vadd.f32 0.0, %v1813
    %v1815 = vpop.f32.mrf.mxu0
    %1816 = vmatprep.mubr.f32.mxu0 0.0
    %1817 = vmatmul.mubr.f32.gmra.mxu0 %v89
    %v1818 = vpop.f32.mrf.mxu0
    %v1819 = vadd.f32 0.0, %v1818
    %v1820 = vpop.f32.mrf.mxu0
    %1821 = vmatprep.mubr.f32.mxu0 0.0
    %1822 = vmatmul.mubr.f32.gmra.mxu0 %v92
    %v1823 = vpop.f32.mrf.mxu0
    %v1824 = vadd.f32 0.0, %v1823
    %v1825 = vpop.f32.mrf.mxu0
    %1826 = vdwg.mxu0
    %vm1827 = vcmp.eq.f32.partialorder %v41, 6.0
    %vm1828 = vcmp.eq.f32.partialorder %v42, 6.0
    %vm1829 = vcmp.eq.f32.partialorder %v43, 6.0
    %vm1830 = vcmp.eq.f32.partialorder %v44, 6.0
    %v1831 = vsel %vm1827, 1, 0
    %v1832 = vsel %vm1828, 1, 0
    %v1833 = vsel %vm1829, 1, 0
    %v1834 = vsel %vm1830, 1, 0
    %v1835 = vcvt.s32.f32 %v1831
    %v1836 = vcvt.s32.f32 %v1832
    %v1837 = vcvt.s32.f32 %v1833
    %v1838 = vcvt.s32.f32 %v1834
    %1840 = vset.pattern.permute.xlu0 0
    %1841 = vperm.xlu0 %1840, %v1835
    %v1842 = vpop.permute.xlu0 %1841
    %1845 = vset.pattern.permute.xlu0 0
    %1846 = vperm.xlu0 %1845, %v1836
    %v1847 = vpop.permute.xlu0 %1846
    %1850 = vset.pattern.permute.xlu0 0
    %1851 = vperm.xlu0 %1850, %v1837
    %v1852 = vpop.permute.xlu0 %1851
    %1855 = vset.pattern.permute.xlu0 0
    %1856 = vperm.xlu0 %1855, %v1838
    %v1857 = vpop.permute.xlu0 %1856
    %v1859 = vmul.f32 %v1842, %v1809
    %v1860 = vmul.f32 %v1847, %v1814
    %v1861 = vmul.f32 %v1852, %v1819
    %v1862 = vmul.f32 %v1857, %v1824
    %v1863 = vadd.f32 %v1584, %v1859
    %v1864 = vadd.f32 %v1585, %v1860
    %v1865 = vadd.f32 %v1586, %v1861
    %v1866 = vadd.f32 %v1587, %v1862
    %v1867 = vsub.f32 %v25, %v1809
    %v1868 = vsub.f32 %v26, %v1814
    %v1869 = vsub.f32 %v27, %v1819
    %v1870 = vsub.f32 %v28, %v1824
    %v1871 = vmul.f32 %v1867, %v1867
    %v1872 = vmul.f32 %v1868, %v1868
    %v1873 = vmul.f32 %v1869, %v1869
    %v1874 = vmul.f32 %v1870, %v1870
    %v1875 = vsel %vm195, %v1871, 0.0
    %1876 = vadd.xlane.f32.xlu0 %v1875
    %v1877 = vpop.xlane.xlu0 %1876
    %v1878 = vsel %vm195, %v1872, 0.0
    %1879 = vadd.xlane.f32.xlu0 %v1878
    %v1880 = vpop.xlane.xlu0 %1879
    %v1881 = vsel %vm195, %v1873, 0.0
    %1882 = vadd.xlane.f32.xlu0 %v1881
    %v1883 = vpop.xlane.xlu0 %1882
    %v1884 = vsel %vm195, %v1874, 0.0
    %1885 = vadd.xlane.f32.xlu0 %v1884
    %v1886 = vpop.xlane.xlu0 %1885
    %v1887 = vmin.f32 %v1608, %v1877
    %v1888 = vmin.f32 %v1609, %v1880
    %v1889 = vmin.f32 %v1610, %v1883
    %v1890 = vmin.f32 %v1611, %v1886
    %v1891 = vsel %vm212, %v1887, -1e+30
    %v1892 = vsel %vm213, %v1888, -1e+30
    %v1893 = vsel %vm214, %v1889, -1e+30
    %v1894 = vsel %vm215, %v1890, -1e+30
    %v1895 = vsel %vm220, %v1891, -inf
    %v1896 = vsel %vm220, %v1892, -inf
    %v1897 = vsel %vm220, %v1893, -inf
    %v1898 = vsel %vm220, %v1894, -inf
    %v1899 = vmax.f32 %v1895, %v1896
    %v1900 = vmax.f32 %v1897, %v1898
    %v1901 = vmax.f32 %v1899, %v1900
    %v1902 = vrot.slane %v1901, 4
    %v1903 = vmax.f32 %v1901, %v1902
    %v1904 = vrot.slane %v1903, 2
    %v1905 = vmax.f32 %v1903, %v1904
    %v1906 = vrot.slane %v1905, 1
    %v1907 = vmax.f32 %v1905, %v1906
    %v1908 = vmul.f32 %v37, %v1907
    %v1909 = vmul.f32 %v38, %v1907
    %v1910 = vmul.f32 %v39, %v1907
    %v1911 = vmul.f32 %v40, %v1907
    %v1912 = vsel %vm220, %v1908, 0.0
    %1913 = vadd.xlane.f32.xlu0 %v1912
    %v1914 = vpop.xlane.xlu0 %1913
    %v1915 = vsel %vm220, %v1909, 0.0
    %1916 = vadd.xlane.f32.xlu0 %v1915
    %v1917 = vpop.xlane.xlu0 %1916
    %v1918 = vsel %vm220, %v1910, 0.0
    %1919 = vadd.xlane.f32.xlu0 %v1918
    %v1920 = vpop.xlane.xlu0 %1919
    %v1921 = vsel %vm220, %v1911, 0.0
    %1922 = vadd.xlane.f32.xlu0 %v1921
    %v1923 = vpop.xlane.xlu0 %1922
    %vm1924 = vcmp.ge.f32.partialorder %v1887, %v1914
    %vm1925 = vcmp.ge.f32.partialorder %v1888, %v1917
    %vm1926 = vcmp.ge.f32.partialorder %v1889, %v1920
    %vm1927 = vcmp.ge.f32.partialorder %v1890, %v1923
    %v1928 = vsel %vm1924, %v41, 16.0
    %v1929 = vsel %vm1925, %v42, 16.0
    %v1930 = vsel %vm1926, %v43, 16.0
    %v1931 = vsel %vm1927, %v44, 16.0
    %1933 = vset.pattern.permute.xlu0 0
    %1934 = vperm.xlu0 %1933, %v1928
    %v1935 = vpop.permute.xlu0 %1934
    %1938 = vset.pattern.permute.xlu0 0
    %1939 = vperm.xlu0 %1938, %v1929
    %v1940 = vpop.permute.xlu0 %1939
    %1943 = vset.pattern.permute.xlu0 0
    %1944 = vperm.xlu0 %1943, %v1930
    %v1945 = vpop.permute.xlu0 %1944
    %1948 = vset.pattern.permute.xlu0 0
    %1949 = vperm.xlu0 %1948, %v1931
    %v1950 = vpop.permute.xlu0 %1949
    %v1952 = vsel %vm212, %v1935, 16.0
    %v1953 = vsel %vm213, %v1940, 16.0
    %v1954 = vsel %vm214, %v1945, 16.0
    %v1955 = vsel %vm215, %v1950, 16.0
    %v1956 = vsel %vm220, %v1952, inf
    %v1957 = vsel %vm220, %v1953, inf
    %v1958 = vsel %vm220, %v1954, inf
    %v1959 = vsel %vm220, %v1955, inf
    %v1960 = vmin.f32 %v1956, %v1957
    %v1961 = vmin.f32 %v1958, %v1959
    %v1962 = vmin.f32 %v1960, %v1961
    %v1963 = vrot.slane %v1962, 4
    %v1964 = vmin.f32 %v1962, %v1963
    %v1965 = vrot.slane %v1964, 2
    %v1966 = vmin.f32 %v1964, %v1965
    %v1967 = vrot.slane %v1966, 1
    %v1968 = vmin.f32 %v1966, %v1967
    %v1969 = vmul.f32 %v37, %v1968
    %v1970 = vmul.f32 %v38, %v1968
    %v1971 = vmul.f32 %v39, %v1968
    %v1972 = vmul.f32 %v40, %v1968
    %v1973 = vsel %vm220, %v1969, 0.0
    %1974 = vadd.xlane.f32.xlu0 %v1973
    %v1975 = vpop.xlane.xlu0 %1974
    %v1976 = vsel %vm220, %v1970, 0.0
    %1977 = vadd.xlane.f32.xlu0 %v1976
    %v1978 = vpop.xlane.xlu0 %1977
    %v1979 = vsel %vm220, %v1971, 0.0
    %1980 = vadd.xlane.f32.xlu0 %v1979
    %v1981 = vpop.xlane.xlu0 %1980
    %v1982 = vsel %vm220, %v1972, 0.0
    %1983 = vadd.xlane.f32.xlu0 %v1982
    %v1984 = vpop.xlane.xlu0 %1983
    %vm1985 = vcmp.eq.f32.partialorder %v41, %v1975
    %vm1986 = vcmp.eq.f32.partialorder %v42, %v1978
    %vm1987 = vcmp.eq.f32.partialorder %v43, %v1981
    %vm1988 = vcmp.eq.f32.partialorder %v44, %v1984
    %v1989 = vsel %vm1985, 1, 0
    %v1990 = vsel %vm1986, 1, 0
    %v1991 = vsel %vm1987, 1, 0
    %v1992 = vsel %vm1988, 1, 0
    %v1993 = vcvt.s32.f32 %v1989
    %v1994 = vcvt.s32.f32 %v1990
    %v1995 = vcvt.s32.f32 %v1991
    %v1996 = vcvt.s32.f32 %v1992
    %1998 = vset.pattern.permute.xlu0 0
    %1999 = vperm.xlu0 %1998, %v1993
    %v2000 = vpop.permute.xlu0 %1999
    %2003 = vset.pattern.permute.xlu0 0
    %2004 = vperm.xlu0 %2003, %v1994
    %v2005 = vpop.permute.xlu0 %2004
    %2008 = vset.pattern.permute.xlu0 0
    %2009 = vperm.xlu0 %2008, %v1995
    %v2010 = vpop.permute.xlu0 %2009
    %2013 = vset.pattern.permute.xlu0 0
    %2014 = vperm.xlu0 %2013, %v1996
    %v2015 = vpop.permute.xlu0 %2014
    %v2017 = vmul.f32 %v2000, %v25
    %v2018 = vmul.f32 %v2005, %v26
    %v2019 = vmul.f32 %v2010, %v27
    %v2020 = vmul.f32 %v2015, %v28
    %2021 = vmatprep.subr.mxu0 0.0
    %2022 = vmatpush1.msra.mxu0 0.0
    %2023 = vmatprep.subr.mxu0 0.0
    %2024 = vmatpush1.msra.mxu0 0.0
    %2025 = vmatprep.subr.mxu0 0.0
    %2026 = vmatpush1.msra.mxu0 0.0
    %2027 = vmatprep.subr.mxu0 0.0
    %2028 = vmatpush1.msra.mxu0 0.0
    %2029 = vmatprep.subr.mxu0 0.0
    %2030 = vmatpush1.msra.mxu0 0.0
    %2031 = vmatprep.subr.mxu0 0.0
    %2032 = vmatpush1.msra.mxu0 0.0
    %2033 = vmatprep.subr.mxu0 0.0
    %2034 = vmatpush1.msra.mxu0 0.0
    %2035 = vmatprep.subr.mxu0 0.0
    %2036 = vmatpush1.msra.mxu0 0.0
    %2037 = vmatprep.subr.mxu0 0.0
    %2038 = vmatpush1.msra.mxu0 0.0
    %2039 = vmatprep.subr.mxu0 0.0
    %2040 = vmatpush1.msra.mxu0 0.0
    %2041 = vmatprep.subr.mxu0 0.0
    %2042 = vmatpush1.msra.mxu0 0.0
    %2043 = vmatprep.subr.mxu0 0.0
    %2044 = vmatpush1.msra.mxu0 0.0
    %2045 = vmatprep.subr.mxu0 0.0
    %2046 = vmatpush1.msra.mxu0 %v2020
    %2047 = vmatprep.subr.mxu0 0.0
    %2048 = vmatpush1.msra.mxu0 %v2019
    %2049 = vmatprep.subr.mxu0 0.0
    %2050 = vmatpush1.msra.mxu0 %v2018
    %2051 = vmatprep.subr.mxu0 0.0
    %2052 = vmatpush1.msra.mxu0 %v2017
    %2053 = vmatprep.subr.mxu0 0.0
    %2054 = vmatpush2.msra.mxu0 0.0
    %2055 = vmatprep.subr.mxu0 0.0
    %2056 = vmatpush2.msra.mxu0 0.0
    %2057 = vmatprep.subr.mxu0 0.0
    %2058 = vmatpush2.msra.mxu0 0.0
    %2059 = vmatprep.subr.mxu0 0.0
    %2060 = vmatpush2.msra.mxu0 0.0
    %2061 = vmatprep.subr.mxu0 0.0
    %2062 = vmatpush2.msra.mxu0 0.0
    %2063 = vmatprep.subr.mxu0 0.0
    %2064 = vmatpush2.msra.mxu0 0.0
    %2065 = vmatprep.subr.mxu0 0.0
    %2066 = vmatpush2.msra.mxu0 0.0
    %2067 = vmatprep.subr.mxu0 0.0
    %2068 = vmatpush2.msra.mxu0 0.0
    %2069 = vmatprep.subr.mxu0 0.0
    %2070 = vmatpush2.msra.mxu0 0.0
    %2071 = vmatprep.subr.mxu0 0.0
    %2072 = vmatpush2.msra.mxu0 0.0
    %2073 = vmatprep.subr.mxu0 0.0
    %2074 = vmatpush2.msra.mxu0 0.0
    %2075 = vmatprep.subr.mxu0 0.0
    %2076 = vmatpush2.msra.mxu0 0.0
    %2077 = vmatprep.subr.mxu0 0.0
    %2078 = vmatpush2.msra.mxu0 0.0
    %2079 = vmatprep.subr.mxu0 0.0
    %2080 = vmatpush2.msra.mxu0 0.0
    %2081 = vmatprep.subr.mxu0 0.0
    %2082 = vmatpush2.msra.mxu0 0.0
    %2083 = vmatprep.subr.mxu0 0.0
    %2084 = vmatpush2.msra.mxu0 0.0
    %2085 = vmatprep.mubr.f32.mxu0 0.0
    %2086 = vmatmul.mubr.f32.gmra.mxu0 %v83
    %v2087 = vpop.f32.mrf.mxu0
    %v2088 = vadd.f32 0.0, %v2087
    %v2089 = vpop.f32.mrf.mxu0
    %2090 = vmatprep.mubr.f32.mxu0 0.0
    %2091 = vmatmul.mubr.f32.gmra.mxu0 %v86
    %v2092 = vpop.f32.mrf.mxu0
    %v2093 = vadd.f32 0.0, %v2092
    %v2094 = vpop.f32.mrf.mxu0
    %2095 = vmatprep.mubr.f32.mxu0 0.0
    %2096 = vmatmul.mubr.f32.gmra.mxu0 %v89
    %v2097 = vpop.f32.mrf.mxu0
    %v2098 = vadd.f32 0.0, %v2097
    %v2099 = vpop.f32.mrf.mxu0
    %2100 = vmatprep.mubr.f32.mxu0 0.0
    %2101 = vmatmul.mubr.f32.gmra.mxu0 %v92
    %v2102 = vpop.f32.mrf.mxu0
    %v2103 = vadd.f32 0.0, %v2102
    %v2104 = vpop.f32.mrf.mxu0
    %2105 = vdwg.mxu0
    %vm2106 = vcmp.eq.f32.partialorder %v41, 7.0
    %vm2107 = vcmp.eq.f32.partialorder %v42, 7.0
    %vm2108 = vcmp.eq.f32.partialorder %v43, 7.0
    %vm2109 = vcmp.eq.f32.partialorder %v44, 7.0
    %v2110 = vsel %vm2106, 1, 0
    %v2111 = vsel %vm2107, 1, 0
    %v2112 = vsel %vm2108, 1, 0
    %v2113 = vsel %vm2109, 1, 0
    %v2114 = vcvt.s32.f32 %v2110
    %v2115 = vcvt.s32.f32 %v2111
    %v2116 = vcvt.s32.f32 %v2112
    %v2117 = vcvt.s32.f32 %v2113
    %2119 = vset.pattern.permute.xlu0 0
    %2120 = vperm.xlu0 %2119, %v2114
    %v2121 = vpop.permute.xlu0 %2120
    %2124 = vset.pattern.permute.xlu0 0
    %2125 = vperm.xlu0 %2124, %v2115
    %v2126 = vpop.permute.xlu0 %2125
    %2129 = vset.pattern.permute.xlu0 0
    %2130 = vperm.xlu0 %2129, %v2116
    %v2131 = vpop.permute.xlu0 %2130
    %2134 = vset.pattern.permute.xlu0 0
    %2135 = vperm.xlu0 %2134, %v2117
    %v2136 = vpop.permute.xlu0 %2135
    %v2138 = vmul.f32 %v2121, %v2088
    %v2139 = vmul.f32 %v2126, %v2093
    %v2140 = vmul.f32 %v2131, %v2098
    %v2141 = vmul.f32 %v2136, %v2103
    %v2142 = vadd.f32 %v1863, %v2138
    %v2143 = vadd.f32 %v1864, %v2139
    %v2144 = vadd.f32 %v1865, %v2140
    %v2145 = vadd.f32 %v1866, %v2141
    %v2146 = vsub.f32 %v25, %v2088
    %v2147 = vsub.f32 %v26, %v2093
    %v2148 = vsub.f32 %v27, %v2098
    %v2149 = vsub.f32 %v28, %v2103
    %v2150 = vmul.f32 %v2146, %v2146
    %v2151 = vmul.f32 %v2147, %v2147
    %v2152 = vmul.f32 %v2148, %v2148
    %v2153 = vmul.f32 %v2149, %v2149
    %v2154 = vsel %vm195, %v2150, 0.0
    %2155 = vadd.xlane.f32.xlu0 %v2154
    %v2156 = vpop.xlane.xlu0 %2155
    %v2157 = vsel %vm195, %v2151, 0.0
    %2158 = vadd.xlane.f32.xlu0 %v2157
    %v2159 = vpop.xlane.xlu0 %2158
    %v2160 = vsel %vm195, %v2152, 0.0
    %2161 = vadd.xlane.f32.xlu0 %v2160
    %v2162 = vpop.xlane.xlu0 %2161
    %v2163 = vsel %vm195, %v2153, 0.0
    %2164 = vadd.xlane.f32.xlu0 %v2163
    %v2165 = vpop.xlane.xlu0 %2164
    %v2166 = vmin.f32 %v1887, %v2156
    %v2167 = vmin.f32 %v1888, %v2159
    %v2168 = vmin.f32 %v1889, %v2162
    %v2169 = vmin.f32 %v1890, %v2165
    %v2170 = vsel %vm212, %v2166, -1e+30
    %v2171 = vsel %vm213, %v2167, -1e+30
    %v2172 = vsel %vm214, %v2168, -1e+30
    %v2173 = vsel %vm215, %v2169, -1e+30
    %v2174 = vsel %vm220, %v2170, -inf
    %v2175 = vsel %vm220, %v2171, -inf
    %v2176 = vsel %vm220, %v2172, -inf
    %v2177 = vsel %vm220, %v2173, -inf
    %v2178 = vmax.f32 %v2174, %v2175
    %v2179 = vmax.f32 %v2176, %v2177
    %v2180 = vmax.f32 %v2178, %v2179
    %v2181 = vrot.slane %v2180, 4
    %v2182 = vmax.f32 %v2180, %v2181
    %v2183 = vrot.slane %v2182, 2
    %v2184 = vmax.f32 %v2182, %v2183
    %v2185 = vrot.slane %v2184, 1
    %v2186 = vmax.f32 %v2184, %v2185
    %v2187 = vmul.f32 %v37, %v2186
    %v2188 = vmul.f32 %v38, %v2186
    %v2189 = vmul.f32 %v39, %v2186
    %v2190 = vmul.f32 %v40, %v2186
    %v2191 = vsel %vm220, %v2187, 0.0
    %2192 = vadd.xlane.f32.xlu0 %v2191
    %v2193 = vpop.xlane.xlu0 %2192
    %v2194 = vsel %vm220, %v2188, 0.0
    %2195 = vadd.xlane.f32.xlu0 %v2194
    %v2196 = vpop.xlane.xlu0 %2195
    %v2197 = vsel %vm220, %v2189, 0.0
    %2198 = vadd.xlane.f32.xlu0 %v2197
    %v2199 = vpop.xlane.xlu0 %2198
    %v2200 = vsel %vm220, %v2190, 0.0
    %2201 = vadd.xlane.f32.xlu0 %v2200
    %v2202 = vpop.xlane.xlu0 %2201
    %vm2203 = vcmp.ge.f32.partialorder %v2166, %v2193
    %vm2204 = vcmp.ge.f32.partialorder %v2167, %v2196
    %vm2205 = vcmp.ge.f32.partialorder %v2168, %v2199
    %vm2206 = vcmp.ge.f32.partialorder %v2169, %v2202
    %v2207 = vsel %vm2203, %v41, 16.0
    %v2208 = vsel %vm2204, %v42, 16.0
    %v2209 = vsel %vm2205, %v43, 16.0
    %v2210 = vsel %vm2206, %v44, 16.0
    %2212 = vset.pattern.permute.xlu0 0
    %2213 = vperm.xlu0 %2212, %v2207
    %v2214 = vpop.permute.xlu0 %2213
    %2217 = vset.pattern.permute.xlu0 0
    %2218 = vperm.xlu0 %2217, %v2208
    %v2219 = vpop.permute.xlu0 %2218
    %2222 = vset.pattern.permute.xlu0 0
    %2223 = vperm.xlu0 %2222, %v2209
    %v2224 = vpop.permute.xlu0 %2223
    %2227 = vset.pattern.permute.xlu0 0
    %2228 = vperm.xlu0 %2227, %v2210
    %v2229 = vpop.permute.xlu0 %2228
    %v2231 = vsel %vm212, %v2214, 16.0
    %v2232 = vsel %vm213, %v2219, 16.0
    %v2233 = vsel %vm214, %v2224, 16.0
    %v2234 = vsel %vm215, %v2229, 16.0
    %v2235 = vsel %vm220, %v2231, inf
    %v2236 = vsel %vm220, %v2232, inf
    %v2237 = vsel %vm220, %v2233, inf
    %v2238 = vsel %vm220, %v2234, inf
    %v2239 = vmin.f32 %v2235, %v2236
    %v2240 = vmin.f32 %v2237, %v2238
    %v2241 = vmin.f32 %v2239, %v2240
    %v2242 = vrot.slane %v2241, 4
    %v2243 = vmin.f32 %v2241, %v2242
    %v2244 = vrot.slane %v2243, 2
    %v2245 = vmin.f32 %v2243, %v2244
    %v2246 = vrot.slane %v2245, 1
    %v2247 = vmin.f32 %v2245, %v2246
    %v2248 = vmul.f32 %v37, %v2247
    %v2249 = vmul.f32 %v38, %v2247
    %v2250 = vmul.f32 %v39, %v2247
    %v2251 = vmul.f32 %v40, %v2247
    %v2252 = vsel %vm220, %v2248, 0.0
    %2253 = vadd.xlane.f32.xlu0 %v2252
    %v2254 = vpop.xlane.xlu0 %2253
    %v2255 = vsel %vm220, %v2249, 0.0
    %2256 = vadd.xlane.f32.xlu0 %v2255
    %v2257 = vpop.xlane.xlu0 %2256
    %v2258 = vsel %vm220, %v2250, 0.0
    %2259 = vadd.xlane.f32.xlu0 %v2258
    %v2260 = vpop.xlane.xlu0 %2259
    %v2261 = vsel %vm220, %v2251, 0.0
    %2262 = vadd.xlane.f32.xlu0 %v2261
    %v2263 = vpop.xlane.xlu0 %2262
    %vm2264 = vcmp.eq.f32.partialorder %v41, %v2254
    %vm2265 = vcmp.eq.f32.partialorder %v42, %v2257
    %vm2266 = vcmp.eq.f32.partialorder %v43, %v2260
    %vm2267 = vcmp.eq.f32.partialorder %v44, %v2263
    %v2268 = vsel %vm2264, 1, 0
    %v2269 = vsel %vm2265, 1, 0
    %v2270 = vsel %vm2266, 1, 0
    %v2271 = vsel %vm2267, 1, 0
    %v2272 = vcvt.s32.f32 %v2268
    %v2273 = vcvt.s32.f32 %v2269
    %v2274 = vcvt.s32.f32 %v2270
    %v2275 = vcvt.s32.f32 %v2271
    %2277 = vset.pattern.permute.xlu0 0
    %2278 = vperm.xlu0 %2277, %v2272
    %v2279 = vpop.permute.xlu0 %2278
    %2282 = vset.pattern.permute.xlu0 0
    %2283 = vperm.xlu0 %2282, %v2273
    %v2284 = vpop.permute.xlu0 %2283
    %2287 = vset.pattern.permute.xlu0 0
    %2288 = vperm.xlu0 %2287, %v2274
    %v2289 = vpop.permute.xlu0 %2288
    %2292 = vset.pattern.permute.xlu0 0
    %2293 = vperm.xlu0 %2292, %v2275
    %v2294 = vpop.permute.xlu0 %2293
    %v2296 = vmul.f32 %v2279, %v25
    %v2297 = vmul.f32 %v2284, %v26
    %v2298 = vmul.f32 %v2289, %v27
    %v2299 = vmul.f32 %v2294, %v28
    %2300 = vmatprep.subr.mxu0 0.0
    %2301 = vmatpush1.msra.mxu0 0.0
    %2302 = vmatprep.subr.mxu0 0.0
    %2303 = vmatpush1.msra.mxu0 0.0
    %2304 = vmatprep.subr.mxu0 0.0
    %2305 = vmatpush1.msra.mxu0 0.0
    %2306 = vmatprep.subr.mxu0 0.0
    %2307 = vmatpush1.msra.mxu0 0.0
    %2308 = vmatprep.subr.mxu0 0.0
    %2309 = vmatpush1.msra.mxu0 0.0
    %2310 = vmatprep.subr.mxu0 0.0
    %2311 = vmatpush1.msra.mxu0 0.0
    %2312 = vmatprep.subr.mxu0 0.0
    %2313 = vmatpush1.msra.mxu0 0.0
    %2314 = vmatprep.subr.mxu0 0.0
    %2315 = vmatpush1.msra.mxu0 0.0
    %2316 = vmatprep.subr.mxu0 0.0
    %2317 = vmatpush1.msra.mxu0 0.0
    %2318 = vmatprep.subr.mxu0 0.0
    %2319 = vmatpush1.msra.mxu0 0.0
    %2320 = vmatprep.subr.mxu0 0.0
    %2321 = vmatpush1.msra.mxu0 0.0
    %2322 = vmatprep.subr.mxu0 0.0
    %2323 = vmatpush1.msra.mxu0 0.0
    %2324 = vmatprep.subr.mxu0 0.0
    %2325 = vmatpush1.msra.mxu0 %v2299
    %2326 = vmatprep.subr.mxu0 0.0
    %2327 = vmatpush1.msra.mxu0 %v2298
    %2328 = vmatprep.subr.mxu0 0.0
    %2329 = vmatpush1.msra.mxu0 %v2297
    %2330 = vmatprep.subr.mxu0 0.0
    %2331 = vmatpush1.msra.mxu0 %v2296
    %2332 = vmatprep.subr.mxu0 0.0
    %2333 = vmatpush2.msra.mxu0 0.0
    %2334 = vmatprep.subr.mxu0 0.0
    %2335 = vmatpush2.msra.mxu0 0.0
    %2336 = vmatprep.subr.mxu0 0.0
    %2337 = vmatpush2.msra.mxu0 0.0
    %2338 = vmatprep.subr.mxu0 0.0
    %2339 = vmatpush2.msra.mxu0 0.0
    %2340 = vmatprep.subr.mxu0 0.0
    %2341 = vmatpush2.msra.mxu0 0.0
    %2342 = vmatprep.subr.mxu0 0.0
    %2343 = vmatpush2.msra.mxu0 0.0
    %2344 = vmatprep.subr.mxu0 0.0
    %2345 = vmatpush2.msra.mxu0 0.0
    %2346 = vmatprep.subr.mxu0 0.0
    %2347 = vmatpush2.msra.mxu0 0.0
    %2348 = vmatprep.subr.mxu0 0.0
    %2349 = vmatpush2.msra.mxu0 0.0
    %2350 = vmatprep.subr.mxu0 0.0
    %2351 = vmatpush2.msra.mxu0 0.0
    %2352 = vmatprep.subr.mxu0 0.0
    %2353 = vmatpush2.msra.mxu0 0.0
    %2354 = vmatprep.subr.mxu0 0.0
    %2355 = vmatpush2.msra.mxu0 0.0
    %2356 = vmatprep.subr.mxu0 0.0
    %2357 = vmatpush2.msra.mxu0 0.0
    %2358 = vmatprep.subr.mxu0 0.0
    %2359 = vmatpush2.msra.mxu0 0.0
    %2360 = vmatprep.subr.mxu0 0.0
    %2361 = vmatpush2.msra.mxu0 0.0
    %2362 = vmatprep.subr.mxu0 0.0
    %2363 = vmatpush2.msra.mxu0 0.0
    %2364 = vmatprep.mubr.f32.mxu0 0.0
    %2365 = vmatmul.mubr.f32.gmra.mxu0 %v83
    %v2366 = vpop.f32.mrf.mxu0
    %v2367 = vadd.f32 0.0, %v2366
    %v2368 = vpop.f32.mrf.mxu0
    %2369 = vmatprep.mubr.f32.mxu0 0.0
    %2370 = vmatmul.mubr.f32.gmra.mxu0 %v86
    %v2371 = vpop.f32.mrf.mxu0
    %v2372 = vadd.f32 0.0, %v2371
    %v2373 = vpop.f32.mrf.mxu0
    %2374 = vmatprep.mubr.f32.mxu0 0.0
    %2375 = vmatmul.mubr.f32.gmra.mxu0 %v89
    %v2376 = vpop.f32.mrf.mxu0
    %v2377 = vadd.f32 0.0, %v2376
    %v2378 = vpop.f32.mrf.mxu0
    %2379 = vmatprep.mubr.f32.mxu0 0.0
    %2380 = vmatmul.mubr.f32.gmra.mxu0 %v92
    %v2381 = vpop.f32.mrf.mxu0
    %v2382 = vadd.f32 0.0, %v2381
    %v2383 = vpop.f32.mrf.mxu0
    %2384 = vdwg.mxu0
    %vm2385 = vcmp.eq.f32.partialorder %v41, 8.0
    %vm2386 = vcmp.eq.f32.partialorder %v42, 8.0
    %vm2387 = vcmp.eq.f32.partialorder %v43, 8.0
    %vm2388 = vcmp.eq.f32.partialorder %v44, 8.0
    %v2389 = vsel %vm2385, 1, 0
    %v2390 = vsel %vm2386, 1, 0
    %v2391 = vsel %vm2387, 1, 0
    %v2392 = vsel %vm2388, 1, 0
    %v2393 = vcvt.s32.f32 %v2389
    %v2394 = vcvt.s32.f32 %v2390
    %v2395 = vcvt.s32.f32 %v2391
    %v2396 = vcvt.s32.f32 %v2392
    %2398 = vset.pattern.permute.xlu0 0
    %2399 = vperm.xlu0 %2398, %v2393
    %v2400 = vpop.permute.xlu0 %2399
    %2403 = vset.pattern.permute.xlu0 0
    %2404 = vperm.xlu0 %2403, %v2394
    %v2405 = vpop.permute.xlu0 %2404
    %2408 = vset.pattern.permute.xlu0 0
    %2409 = vperm.xlu0 %2408, %v2395
    %v2410 = vpop.permute.xlu0 %2409
    %2413 = vset.pattern.permute.xlu0 0
    %2414 = vperm.xlu0 %2413, %v2396
    %v2415 = vpop.permute.xlu0 %2414
    %v2417 = vmul.f32 %v2400, %v2367
    %v2418 = vmul.f32 %v2405, %v2372
    %v2419 = vmul.f32 %v2410, %v2377
    %v2420 = vmul.f32 %v2415, %v2382
    %v2421 = vadd.f32 %v2142, %v2417
    %v2422 = vadd.f32 %v2143, %v2418
    %v2423 = vadd.f32 %v2144, %v2419
    %v2424 = vadd.f32 %v2145, %v2420
    %v2425 = vsub.f32 %v25, %v2367
    %v2426 = vsub.f32 %v26, %v2372
    %v2427 = vsub.f32 %v27, %v2377
    %v2428 = vsub.f32 %v28, %v2382
    %v2429 = vmul.f32 %v2425, %v2425
    %v2430 = vmul.f32 %v2426, %v2426
    %v2431 = vmul.f32 %v2427, %v2427
    %v2432 = vmul.f32 %v2428, %v2428
    %v2433 = vsel %vm195, %v2429, 0.0
    %2434 = vadd.xlane.f32.xlu0 %v2433
    %v2435 = vpop.xlane.xlu0 %2434
    %v2436 = vsel %vm195, %v2430, 0.0
    %2437 = vadd.xlane.f32.xlu0 %v2436
    %v2438 = vpop.xlane.xlu0 %2437
    %v2439 = vsel %vm195, %v2431, 0.0
    %2440 = vadd.xlane.f32.xlu0 %v2439
    %v2441 = vpop.xlane.xlu0 %2440
    %v2442 = vsel %vm195, %v2432, 0.0
    %2443 = vadd.xlane.f32.xlu0 %v2442
    %v2444 = vpop.xlane.xlu0 %2443
    %v2445 = vmin.f32 %v2166, %v2435
    %v2446 = vmin.f32 %v2167, %v2438
    %v2447 = vmin.f32 %v2168, %v2441
    %v2448 = vmin.f32 %v2169, %v2444
    %v2449 = vsel %vm212, %v2445, -1e+30
    %v2450 = vsel %vm213, %v2446, -1e+30
    %v2451 = vsel %vm214, %v2447, -1e+30
    %v2452 = vsel %vm215, %v2448, -1e+30
    %v2453 = vsel %vm220, %v2449, -inf
    %v2454 = vsel %vm220, %v2450, -inf
    %v2455 = vsel %vm220, %v2451, -inf
    %v2456 = vsel %vm220, %v2452, -inf
    %v2457 = vmax.f32 %v2453, %v2454
    %v2458 = vmax.f32 %v2455, %v2456
    %v2459 = vmax.f32 %v2457, %v2458
    %v2460 = vrot.slane %v2459, 4
    %v2461 = vmax.f32 %v2459, %v2460
    %v2462 = vrot.slane %v2461, 2
    %v2463 = vmax.f32 %v2461, %v2462
    %v2464 = vrot.slane %v2463, 1
    %v2465 = vmax.f32 %v2463, %v2464
    %v2466 = vmul.f32 %v37, %v2465
    %v2467 = vmul.f32 %v38, %v2465
    %v2468 = vmul.f32 %v39, %v2465
    %v2469 = vmul.f32 %v40, %v2465
    %v2470 = vsel %vm220, %v2466, 0.0
    %2471 = vadd.xlane.f32.xlu0 %v2470
    %v2472 = vpop.xlane.xlu0 %2471
    %v2473 = vsel %vm220, %v2467, 0.0
    %2474 = vadd.xlane.f32.xlu0 %v2473
    %v2475 = vpop.xlane.xlu0 %2474
    %v2476 = vsel %vm220, %v2468, 0.0
    %2477 = vadd.xlane.f32.xlu0 %v2476
    %v2478 = vpop.xlane.xlu0 %2477
    %v2479 = vsel %vm220, %v2469, 0.0
    %2480 = vadd.xlane.f32.xlu0 %v2479
    %v2481 = vpop.xlane.xlu0 %2480
    %vm2482 = vcmp.ge.f32.partialorder %v2445, %v2472
    %vm2483 = vcmp.ge.f32.partialorder %v2446, %v2475
    %vm2484 = vcmp.ge.f32.partialorder %v2447, %v2478
    %vm2485 = vcmp.ge.f32.partialorder %v2448, %v2481
    %v2486 = vsel %vm2482, %v41, 16.0
    %v2487 = vsel %vm2483, %v42, 16.0
    %v2488 = vsel %vm2484, %v43, 16.0
    %v2489 = vsel %vm2485, %v44, 16.0
    %2491 = vset.pattern.permute.xlu0 0
    %2492 = vperm.xlu0 %2491, %v2486
    %v2493 = vpop.permute.xlu0 %2492
    %2496 = vset.pattern.permute.xlu0 0
    %2497 = vperm.xlu0 %2496, %v2487
    %v2498 = vpop.permute.xlu0 %2497
    %2501 = vset.pattern.permute.xlu0 0
    %2502 = vperm.xlu0 %2501, %v2488
    %v2503 = vpop.permute.xlu0 %2502
    %2506 = vset.pattern.permute.xlu0 0
    %2507 = vperm.xlu0 %2506, %v2489
    %v2508 = vpop.permute.xlu0 %2507
    %v2510 = vsel %vm212, %v2493, 16.0
    %v2511 = vsel %vm213, %v2498, 16.0
    %v2512 = vsel %vm214, %v2503, 16.0
    %v2513 = vsel %vm215, %v2508, 16.0
    %v2514 = vsel %vm220, %v2510, inf
    %v2515 = vsel %vm220, %v2511, inf
    %v2516 = vsel %vm220, %v2512, inf
    %v2517 = vsel %vm220, %v2513, inf
    %v2518 = vmin.f32 %v2514, %v2515
    %v2519 = vmin.f32 %v2516, %v2517
    %v2520 = vmin.f32 %v2518, %v2519
    %v2521 = vrot.slane %v2520, 4
    %v2522 = vmin.f32 %v2520, %v2521
    %v2523 = vrot.slane %v2522, 2
    %v2524 = vmin.f32 %v2522, %v2523
    %v2525 = vrot.slane %v2524, 1
    %v2526 = vmin.f32 %v2524, %v2525
    %v2527 = vmul.f32 %v37, %v2526
    %v2528 = vmul.f32 %v38, %v2526
    %v2529 = vmul.f32 %v39, %v2526
    %v2530 = vmul.f32 %v40, %v2526
    %v2531 = vsel %vm220, %v2527, 0.0
    %2532 = vadd.xlane.f32.xlu0 %v2531
    %v2533 = vpop.xlane.xlu0 %2532
    %v2534 = vsel %vm220, %v2528, 0.0
    %2535 = vadd.xlane.f32.xlu0 %v2534
    %v2536 = vpop.xlane.xlu0 %2535
    %v2537 = vsel %vm220, %v2529, 0.0
    %2538 = vadd.xlane.f32.xlu0 %v2537
    %v2539 = vpop.xlane.xlu0 %2538
    %v2540 = vsel %vm220, %v2530, 0.0
    %2541 = vadd.xlane.f32.xlu0 %v2540
    %v2542 = vpop.xlane.xlu0 %2541
    %vm2543 = vcmp.eq.f32.partialorder %v41, %v2533
    %vm2544 = vcmp.eq.f32.partialorder %v42, %v2536
    %vm2545 = vcmp.eq.f32.partialorder %v43, %v2539
    %vm2546 = vcmp.eq.f32.partialorder %v44, %v2542
    %v2547 = vsel %vm2543, 1, 0
    %v2548 = vsel %vm2544, 1, 0
    %v2549 = vsel %vm2545, 1, 0
    %v2550 = vsel %vm2546, 1, 0
    %v2551 = vcvt.s32.f32 %v2547
    %v2552 = vcvt.s32.f32 %v2548
    %v2553 = vcvt.s32.f32 %v2549
    %v2554 = vcvt.s32.f32 %v2550
    %2556 = vset.pattern.permute.xlu0 0
    %2557 = vperm.xlu0 %2556, %v2551
    %v2558 = vpop.permute.xlu0 %2557
    %2561 = vset.pattern.permute.xlu0 0
    %2562 = vperm.xlu0 %2561, %v2552
    %v2563 = vpop.permute.xlu0 %2562
    %2566 = vset.pattern.permute.xlu0 0
    %2567 = vperm.xlu0 %2566, %v2553
    %v2568 = vpop.permute.xlu0 %2567
    %2571 = vset.pattern.permute.xlu0 0
    %2572 = vperm.xlu0 %2571, %v2554
    %v2573 = vpop.permute.xlu0 %2572
    %v2575 = vmul.f32 %v2558, %v25
    %v2576 = vmul.f32 %v2563, %v26
    %v2577 = vmul.f32 %v2568, %v27
    %v2578 = vmul.f32 %v2573, %v28
    %2579 = vmatprep.subr.mxu0 0.0
    %2580 = vmatpush1.msra.mxu0 0.0
    %2581 = vmatprep.subr.mxu0 0.0
    %2582 = vmatpush1.msra.mxu0 0.0
    %2583 = vmatprep.subr.mxu0 0.0
    %2584 = vmatpush1.msra.mxu0 0.0
    %2585 = vmatprep.subr.mxu0 0.0
    %2586 = vmatpush1.msra.mxu0 0.0
    %2587 = vmatprep.subr.mxu0 0.0
    %2588 = vmatpush1.msra.mxu0 0.0
    %2589 = vmatprep.subr.mxu0 0.0
    %2590 = vmatpush1.msra.mxu0 0.0
    %2591 = vmatprep.subr.mxu0 0.0
    %2592 = vmatpush1.msra.mxu0 0.0
    %2593 = vmatprep.subr.mxu0 0.0
    %2594 = vmatpush1.msra.mxu0 0.0
    %2595 = vmatprep.subr.mxu0 0.0
    %2596 = vmatpush1.msra.mxu0 0.0
    %2597 = vmatprep.subr.mxu0 0.0
    %2598 = vmatpush1.msra.mxu0 0.0
    %2599 = vmatprep.subr.mxu0 0.0
    %2600 = vmatpush1.msra.mxu0 0.0
    %2601 = vmatprep.subr.mxu0 0.0
    %2602 = vmatpush1.msra.mxu0 0.0
    %2603 = vmatprep.subr.mxu0 0.0
    %2604 = vmatpush1.msra.mxu0 %v2578
    %2605 = vmatprep.subr.mxu0 0.0
    %2606 = vmatpush1.msra.mxu0 %v2577
    %2607 = vmatprep.subr.mxu0 0.0
    %2608 = vmatpush1.msra.mxu0 %v2576
    %2609 = vmatprep.subr.mxu0 0.0
    %2610 = vmatpush1.msra.mxu0 %v2575
    %2611 = vmatprep.subr.mxu0 0.0
    %2612 = vmatpush2.msra.mxu0 0.0
    %2613 = vmatprep.subr.mxu0 0.0
    %2614 = vmatpush2.msra.mxu0 0.0
    %2615 = vmatprep.subr.mxu0 0.0
    %2616 = vmatpush2.msra.mxu0 0.0
    %2617 = vmatprep.subr.mxu0 0.0
    %2618 = vmatpush2.msra.mxu0 0.0
    %2619 = vmatprep.subr.mxu0 0.0
    %2620 = vmatpush2.msra.mxu0 0.0
    %2621 = vmatprep.subr.mxu0 0.0
    %2622 = vmatpush2.msra.mxu0 0.0
    %2623 = vmatprep.subr.mxu0 0.0
    %2624 = vmatpush2.msra.mxu0 0.0
    %2625 = vmatprep.subr.mxu0 0.0
    %2626 = vmatpush2.msra.mxu0 0.0
    %2627 = vmatprep.subr.mxu0 0.0
    %2628 = vmatpush2.msra.mxu0 0.0
    %2629 = vmatprep.subr.mxu0 0.0
    %2630 = vmatpush2.msra.mxu0 0.0
    %2631 = vmatprep.subr.mxu0 0.0
    %2632 = vmatpush2.msra.mxu0 0.0
    %2633 = vmatprep.subr.mxu0 0.0
    %2634 = vmatpush2.msra.mxu0 0.0
    %2635 = vmatprep.subr.mxu0 0.0
    %2636 = vmatpush2.msra.mxu0 0.0
    %2637 = vmatprep.subr.mxu0 0.0
    %2638 = vmatpush2.msra.mxu0 0.0
    %2639 = vmatprep.subr.mxu0 0.0
    %2640 = vmatpush2.msra.mxu0 0.0
    %2641 = vmatprep.subr.mxu0 0.0
    %2642 = vmatpush2.msra.mxu0 0.0
    %2643 = vmatprep.mubr.f32.mxu0 0.0
    %2644 = vmatmul.mubr.f32.gmra.mxu0 %v83
    %v2645 = vpop.f32.mrf.mxu0
    %v2646 = vadd.f32 0.0, %v2645
    %v2647 = vpop.f32.mrf.mxu0
    %2648 = vmatprep.mubr.f32.mxu0 0.0
    %2649 = vmatmul.mubr.f32.gmra.mxu0 %v86
    %v2650 = vpop.f32.mrf.mxu0
    %v2651 = vadd.f32 0.0, %v2650
    %v2652 = vpop.f32.mrf.mxu0
    %2653 = vmatprep.mubr.f32.mxu0 0.0
    %2654 = vmatmul.mubr.f32.gmra.mxu0 %v89
    %v2655 = vpop.f32.mrf.mxu0
    %v2656 = vadd.f32 0.0, %v2655
    %v2657 = vpop.f32.mrf.mxu0
    %2658 = vmatprep.mubr.f32.mxu0 0.0
    %2659 = vmatmul.mubr.f32.gmra.mxu0 %v92
    %v2660 = vpop.f32.mrf.mxu0
    %v2661 = vadd.f32 0.0, %v2660
    %v2662 = vpop.f32.mrf.mxu0
    %2663 = vdwg.mxu0
    %vm2664 = vcmp.eq.f32.partialorder %v41, 9.0
    %vm2665 = vcmp.eq.f32.partialorder %v42, 9.0
    %vm2666 = vcmp.eq.f32.partialorder %v43, 9.0
    %vm2667 = vcmp.eq.f32.partialorder %v44, 9.0
    %v2668 = vsel %vm2664, 1, 0
    %v2669 = vsel %vm2665, 1, 0
    %v2670 = vsel %vm2666, 1, 0
    %v2671 = vsel %vm2667, 1, 0
    %v2672 = vcvt.s32.f32 %v2668
    %v2673 = vcvt.s32.f32 %v2669
    %v2674 = vcvt.s32.f32 %v2670
    %v2675 = vcvt.s32.f32 %v2671
    %2677 = vset.pattern.permute.xlu0 0
    %2678 = vperm.xlu0 %2677, %v2672
    %v2679 = vpop.permute.xlu0 %2678
    %2682 = vset.pattern.permute.xlu0 0
    %2683 = vperm.xlu0 %2682, %v2673
    %v2684 = vpop.permute.xlu0 %2683
    %2687 = vset.pattern.permute.xlu0 0
    %2688 = vperm.xlu0 %2687, %v2674
    %v2689 = vpop.permute.xlu0 %2688
    %2692 = vset.pattern.permute.xlu0 0
    %2693 = vperm.xlu0 %2692, %v2675
    %v2694 = vpop.permute.xlu0 %2693
    %v2696 = vmul.f32 %v2679, %v2646
    %v2697 = vmul.f32 %v2684, %v2651
    %v2698 = vmul.f32 %v2689, %v2656
    %v2699 = vmul.f32 %v2694, %v2661
    %v2700 = vadd.f32 %v2421, %v2696
    %v2701 = vadd.f32 %v2422, %v2697
    %v2702 = vadd.f32 %v2423, %v2698
    %v2703 = vadd.f32 %v2424, %v2699
    %v2704 = vsub.f32 %v25, %v2646
    %v2705 = vsub.f32 %v26, %v2651
    %v2706 = vsub.f32 %v27, %v2656
    %v2707 = vsub.f32 %v28, %v2661
    %v2708 = vmul.f32 %v2704, %v2704
    %v2709 = vmul.f32 %v2705, %v2705
    %v2710 = vmul.f32 %v2706, %v2706
    %v2711 = vmul.f32 %v2707, %v2707
    %v2712 = vsel %vm195, %v2708, 0.0
    %2713 = vadd.xlane.f32.xlu0 %v2712
    %v2714 = vpop.xlane.xlu0 %2713
    %v2715 = vsel %vm195, %v2709, 0.0
    %2716 = vadd.xlane.f32.xlu0 %v2715
    %v2717 = vpop.xlane.xlu0 %2716
    %v2718 = vsel %vm195, %v2710, 0.0
    %2719 = vadd.xlane.f32.xlu0 %v2718
    %v2720 = vpop.xlane.xlu0 %2719
    %v2721 = vsel %vm195, %v2711, 0.0
    %2722 = vadd.xlane.f32.xlu0 %v2721
    %v2723 = vpop.xlane.xlu0 %2722
    %v2724 = vmin.f32 %v2445, %v2714
    %v2725 = vmin.f32 %v2446, %v2717
    %v2726 = vmin.f32 %v2447, %v2720
    %v2727 = vmin.f32 %v2448, %v2723
    %v2728 = vsel %vm212, %v2724, -1e+30
    %v2729 = vsel %vm213, %v2725, -1e+30
    %v2730 = vsel %vm214, %v2726, -1e+30
    %v2731 = vsel %vm215, %v2727, -1e+30
    %v2732 = vsel %vm220, %v2728, -inf
    %v2733 = vsel %vm220, %v2729, -inf
    %v2734 = vsel %vm220, %v2730, -inf
    %v2735 = vsel %vm220, %v2731, -inf
    %v2736 = vmax.f32 %v2732, %v2733
    %v2737 = vmax.f32 %v2734, %v2735
    %v2738 = vmax.f32 %v2736, %v2737
    %v2739 = vrot.slane %v2738, 4
    %v2740 = vmax.f32 %v2738, %v2739
    %v2741 = vrot.slane %v2740, 2
    %v2742 = vmax.f32 %v2740, %v2741
    %v2743 = vrot.slane %v2742, 1
    %v2744 = vmax.f32 %v2742, %v2743
    %v2745 = vmul.f32 %v37, %v2744
    %v2746 = vmul.f32 %v38, %v2744
    %v2747 = vmul.f32 %v39, %v2744
    %v2748 = vmul.f32 %v40, %v2744
    %v2749 = vsel %vm220, %v2745, 0.0
    %2750 = vadd.xlane.f32.xlu0 %v2749
    %v2751 = vpop.xlane.xlu0 %2750
    %v2752 = vsel %vm220, %v2746, 0.0
    %2753 = vadd.xlane.f32.xlu0 %v2752
    %v2754 = vpop.xlane.xlu0 %2753
    %v2755 = vsel %vm220, %v2747, 0.0
    %2756 = vadd.xlane.f32.xlu0 %v2755
    %v2757 = vpop.xlane.xlu0 %2756
    %v2758 = vsel %vm220, %v2748, 0.0
    %2759 = vadd.xlane.f32.xlu0 %v2758
    %v2760 = vpop.xlane.xlu0 %2759
    %vm2761 = vcmp.ge.f32.partialorder %v2724, %v2751
    %vm2762 = vcmp.ge.f32.partialorder %v2725, %v2754
    %vm2763 = vcmp.ge.f32.partialorder %v2726, %v2757
    %vm2764 = vcmp.ge.f32.partialorder %v2727, %v2760
    %v2765 = vsel %vm2761, %v41, 16.0
    %v2766 = vsel %vm2762, %v42, 16.0
    %v2767 = vsel %vm2763, %v43, 16.0
    %v2768 = vsel %vm2764, %v44, 16.0
    %2770 = vset.pattern.permute.xlu0 0
    %2771 = vperm.xlu0 %2770, %v2765
    %v2772 = vpop.permute.xlu0 %2771
    %2775 = vset.pattern.permute.xlu0 0
    %2776 = vperm.xlu0 %2775, %v2766
    %v2777 = vpop.permute.xlu0 %2776
    %2780 = vset.pattern.permute.xlu0 0
    %2781 = vperm.xlu0 %2780, %v2767
    %v2782 = vpop.permute.xlu0 %2781
    %2785 = vset.pattern.permute.xlu0 0
    %2786 = vperm.xlu0 %2785, %v2768
    %v2787 = vpop.permute.xlu0 %2786
    %v2789 = vsel %vm212, %v2772, 16.0
    %v2790 = vsel %vm213, %v2777, 16.0
    %v2791 = vsel %vm214, %v2782, 16.0
    %v2792 = vsel %vm215, %v2787, 16.0
    %v2793 = vsel %vm220, %v2789, inf
    %v2794 = vsel %vm220, %v2790, inf
    %v2795 = vsel %vm220, %v2791, inf
    %v2796 = vsel %vm220, %v2792, inf
    %v2797 = vmin.f32 %v2793, %v2794
    %v2798 = vmin.f32 %v2795, %v2796
    %v2799 = vmin.f32 %v2797, %v2798
    %v2800 = vrot.slane %v2799, 4
    %v2801 = vmin.f32 %v2799, %v2800
    %v2802 = vrot.slane %v2801, 2
    %v2803 = vmin.f32 %v2801, %v2802
    %v2804 = vrot.slane %v2803, 1
    %v2805 = vmin.f32 %v2803, %v2804
    %v2806 = vmul.f32 %v37, %v2805
    %v2807 = vmul.f32 %v38, %v2805
    %v2808 = vmul.f32 %v39, %v2805
    %v2809 = vmul.f32 %v40, %v2805
    %v2810 = vsel %vm220, %v2806, 0.0
    %2811 = vadd.xlane.f32.xlu0 %v2810
    %v2812 = vpop.xlane.xlu0 %2811
    %v2813 = vsel %vm220, %v2807, 0.0
    %2814 = vadd.xlane.f32.xlu0 %v2813
    %v2815 = vpop.xlane.xlu0 %2814
    %v2816 = vsel %vm220, %v2808, 0.0
    %2817 = vadd.xlane.f32.xlu0 %v2816
    %v2818 = vpop.xlane.xlu0 %2817
    %v2819 = vsel %vm220, %v2809, 0.0
    %2820 = vadd.xlane.f32.xlu0 %v2819
    %v2821 = vpop.xlane.xlu0 %2820
    %vm2822 = vcmp.eq.f32.partialorder %v41, %v2812
    %vm2823 = vcmp.eq.f32.partialorder %v42, %v2815
    %vm2824 = vcmp.eq.f32.partialorder %v43, %v2818
    %vm2825 = vcmp.eq.f32.partialorder %v44, %v2821
    %v2826 = vsel %vm2822, 1, 0
    %v2827 = vsel %vm2823, 1, 0
    %v2828 = vsel %vm2824, 1, 0
    %v2829 = vsel %vm2825, 1, 0
    %v2830 = vcvt.s32.f32 %v2826
    %v2831 = vcvt.s32.f32 %v2827
    %v2832 = vcvt.s32.f32 %v2828
    %v2833 = vcvt.s32.f32 %v2829
    %2835 = vset.pattern.permute.xlu0 0
    %2836 = vperm.xlu0 %2835, %v2830
    %v2837 = vpop.permute.xlu0 %2836
    %2840 = vset.pattern.permute.xlu0 0
    %2841 = vperm.xlu0 %2840, %v2831
    %v2842 = vpop.permute.xlu0 %2841
    %2845 = vset.pattern.permute.xlu0 0
    %2846 = vperm.xlu0 %2845, %v2832
    %v2847 = vpop.permute.xlu0 %2846
    %2850 = vset.pattern.permute.xlu0 0
    %2851 = vperm.xlu0 %2850, %v2833
    %v2852 = vpop.permute.xlu0 %2851
    %v2854 = vmul.f32 %v2837, %v25
    %v2855 = vmul.f32 %v2842, %v26
    %v2856 = vmul.f32 %v2847, %v27
    %v2857 = vmul.f32 %v2852, %v28
    %2858 = vmatprep.subr.mxu0 0.0
    %2859 = vmatpush1.msra.mxu0 0.0
    %2860 = vmatprep.subr.mxu0 0.0
    %2861 = vmatpush1.msra.mxu0 0.0
    %2862 = vmatprep.subr.mxu0 0.0
    %2863 = vmatpush1.msra.mxu0 0.0
    %2864 = vmatprep.subr.mxu0 0.0
    %2865 = vmatpush1.msra.mxu0 0.0
    %2866 = vmatprep.subr.mxu0 0.0
    %2867 = vmatpush1.msra.mxu0 0.0
    %2868 = vmatprep.subr.mxu0 0.0
    %2869 = vmatpush1.msra.mxu0 0.0
    %2870 = vmatprep.subr.mxu0 0.0
    %2871 = vmatpush1.msra.mxu0 0.0
    %2872 = vmatprep.subr.mxu0 0.0
    %2873 = vmatpush1.msra.mxu0 0.0
    %2874 = vmatprep.subr.mxu0 0.0
    %2875 = vmatpush1.msra.mxu0 0.0
    %2876 = vmatprep.subr.mxu0 0.0
    %2877 = vmatpush1.msra.mxu0 0.0
    %2878 = vmatprep.subr.mxu0 0.0
    %2879 = vmatpush1.msra.mxu0 0.0
    %2880 = vmatprep.subr.mxu0 0.0
    %2881 = vmatpush1.msra.mxu0 0.0
    %2882 = vmatprep.subr.mxu0 0.0
    %2883 = vmatpush1.msra.mxu0 %v2857
    %2884 = vmatprep.subr.mxu0 0.0
    %2885 = vmatpush1.msra.mxu0 %v2856
    %2886 = vmatprep.subr.mxu0 0.0
    %2887 = vmatpush1.msra.mxu0 %v2855
    %2888 = vmatprep.subr.mxu0 0.0
    %2889 = vmatpush1.msra.mxu0 %v2854
    %2890 = vmatprep.subr.mxu0 0.0
    %2891 = vmatpush2.msra.mxu0 0.0
    %2892 = vmatprep.subr.mxu0 0.0
    %2893 = vmatpush2.msra.mxu0 0.0
    %2894 = vmatprep.subr.mxu0 0.0
    %2895 = vmatpush2.msra.mxu0 0.0
    %2896 = vmatprep.subr.mxu0 0.0
    %2897 = vmatpush2.msra.mxu0 0.0
    %2898 = vmatprep.subr.mxu0 0.0
    %2899 = vmatpush2.msra.mxu0 0.0
    %2900 = vmatprep.subr.mxu0 0.0
    %2901 = vmatpush2.msra.mxu0 0.0
    %2902 = vmatprep.subr.mxu0 0.0
    %2903 = vmatpush2.msra.mxu0 0.0
    %2904 = vmatprep.subr.mxu0 0.0
    %2905 = vmatpush2.msra.mxu0 0.0
    %2906 = vmatprep.subr.mxu0 0.0
    %2907 = vmatpush2.msra.mxu0 0.0
    %2908 = vmatprep.subr.mxu0 0.0
    %2909 = vmatpush2.msra.mxu0 0.0
    %2910 = vmatprep.subr.mxu0 0.0
    %2911 = vmatpush2.msra.mxu0 0.0
    %2912 = vmatprep.subr.mxu0 0.0
    %2913 = vmatpush2.msra.mxu0 0.0
    %2914 = vmatprep.subr.mxu0 0.0
    %2915 = vmatpush2.msra.mxu0 0.0
    %2916 = vmatprep.subr.mxu0 0.0
    %2917 = vmatpush2.msra.mxu0 0.0
    %2918 = vmatprep.subr.mxu0 0.0
    %2919 = vmatpush2.msra.mxu0 0.0
    %2920 = vmatprep.subr.mxu0 0.0
    %2921 = vmatpush2.msra.mxu0 0.0
    %2922 = vmatprep.mubr.f32.mxu0 0.0
    %2923 = vmatmul.mubr.f32.gmra.mxu0 %v83
    %v2924 = vpop.f32.mrf.mxu0
    %v2925 = vadd.f32 0.0, %v2924
    %v2926 = vpop.f32.mrf.mxu0
    %2927 = vmatprep.mubr.f32.mxu0 0.0
    %2928 = vmatmul.mubr.f32.gmra.mxu0 %v86
    %v2929 = vpop.f32.mrf.mxu0
    %v2930 = vadd.f32 0.0, %v2929
    %v2931 = vpop.f32.mrf.mxu0
    %2932 = vmatprep.mubr.f32.mxu0 0.0
    %2933 = vmatmul.mubr.f32.gmra.mxu0 %v89
    %v2934 = vpop.f32.mrf.mxu0
    %v2935 = vadd.f32 0.0, %v2934
    %v2936 = vpop.f32.mrf.mxu0
    %2937 = vmatprep.mubr.f32.mxu0 0.0
    %2938 = vmatmul.mubr.f32.gmra.mxu0 %v92
    %v2939 = vpop.f32.mrf.mxu0
    %v2940 = vadd.f32 0.0, %v2939
    %v2941 = vpop.f32.mrf.mxu0
    %2942 = vdwg.mxu0
    %vm2943 = vcmp.eq.f32.partialorder %v41, 10.0
    %vm2944 = vcmp.eq.f32.partialorder %v42, 10.0
    %vm2945 = vcmp.eq.f32.partialorder %v43, 10.0
    %vm2946 = vcmp.eq.f32.partialorder %v44, 10.0
    %v2947 = vsel %vm2943, 1, 0
    %v2948 = vsel %vm2944, 1, 0
    %v2949 = vsel %vm2945, 1, 0
    %v2950 = vsel %vm2946, 1, 0
    %v2951 = vcvt.s32.f32 %v2947
    %v2952 = vcvt.s32.f32 %v2948
    %v2953 = vcvt.s32.f32 %v2949
    %v2954 = vcvt.s32.f32 %v2950
    %2956 = vset.pattern.permute.xlu0 0
    %2957 = vperm.xlu0 %2956, %v2951
    %v2958 = vpop.permute.xlu0 %2957
    %2961 = vset.pattern.permute.xlu0 0
    %2962 = vperm.xlu0 %2961, %v2952
    %v2963 = vpop.permute.xlu0 %2962
    %2966 = vset.pattern.permute.xlu0 0
    %2967 = vperm.xlu0 %2966, %v2953
    %v2968 = vpop.permute.xlu0 %2967
    %2971 = vset.pattern.permute.xlu0 0
    %2972 = vperm.xlu0 %2971, %v2954
    %v2973 = vpop.permute.xlu0 %2972
    %v2975 = vmul.f32 %v2958, %v2925
    %v2976 = vmul.f32 %v2963, %v2930
    %v2977 = vmul.f32 %v2968, %v2935
    %v2978 = vmul.f32 %v2973, %v2940
    %v2979 = vadd.f32 %v2700, %v2975
    %v2980 = vadd.f32 %v2701, %v2976
    %v2981 = vadd.f32 %v2702, %v2977
    %v2982 = vadd.f32 %v2703, %v2978
    %v2983 = vsub.f32 %v25, %v2925
    %v2984 = vsub.f32 %v26, %v2930
    %v2985 = vsub.f32 %v27, %v2935
    %v2986 = vsub.f32 %v28, %v2940
    %v2987 = vmul.f32 %v2983, %v2983
    %v2988 = vmul.f32 %v2984, %v2984
    %v2989 = vmul.f32 %v2985, %v2985
    %v2990 = vmul.f32 %v2986, %v2986
    %v2991 = vsel %vm195, %v2987, 0.0
    %2992 = vadd.xlane.f32.xlu0 %v2991
    %v2993 = vpop.xlane.xlu0 %2992
    %v2994 = vsel %vm195, %v2988, 0.0
    %2995 = vadd.xlane.f32.xlu0 %v2994
    %v2996 = vpop.xlane.xlu0 %2995
    %v2997 = vsel %vm195, %v2989, 0.0
    %2998 = vadd.xlane.f32.xlu0 %v2997
    %v2999 = vpop.xlane.xlu0 %2998
    %v3000 = vsel %vm195, %v2990, 0.0
    %3001 = vadd.xlane.f32.xlu0 %v3000
    %v3002 = vpop.xlane.xlu0 %3001
    %v3003 = vmin.f32 %v2724, %v2993
    %v3004 = vmin.f32 %v2725, %v2996
    %v3005 = vmin.f32 %v2726, %v2999
    %v3006 = vmin.f32 %v2727, %v3002
    %v3007 = vsel %vm212, %v3003, -1e+30
    %v3008 = vsel %vm213, %v3004, -1e+30
    %v3009 = vsel %vm214, %v3005, -1e+30
    %v3010 = vsel %vm215, %v3006, -1e+30
    %v3011 = vsel %vm220, %v3007, -inf
    %v3012 = vsel %vm220, %v3008, -inf
    %v3013 = vsel %vm220, %v3009, -inf
    %v3014 = vsel %vm220, %v3010, -inf
    %v3015 = vmax.f32 %v3011, %v3012
    %v3016 = vmax.f32 %v3013, %v3014
    %v3017 = vmax.f32 %v3015, %v3016
    %v3018 = vrot.slane %v3017, 4
    %v3019 = vmax.f32 %v3017, %v3018
    %v3020 = vrot.slane %v3019, 2
    %v3021 = vmax.f32 %v3019, %v3020
    %v3022 = vrot.slane %v3021, 1
    %v3023 = vmax.f32 %v3021, %v3022
    %v3024 = vmul.f32 %v37, %v3023
    %v3025 = vmul.f32 %v38, %v3023
    %v3026 = vmul.f32 %v39, %v3023
    %v3027 = vmul.f32 %v40, %v3023
    %v3028 = vsel %vm220, %v3024, 0.0
    %3029 = vadd.xlane.f32.xlu0 %v3028
    %v3030 = vpop.xlane.xlu0 %3029
    %v3031 = vsel %vm220, %v3025, 0.0
    %3032 = vadd.xlane.f32.xlu0 %v3031
    %v3033 = vpop.xlane.xlu0 %3032
    %v3034 = vsel %vm220, %v3026, 0.0
    %3035 = vadd.xlane.f32.xlu0 %v3034
    %v3036 = vpop.xlane.xlu0 %3035
    %v3037 = vsel %vm220, %v3027, 0.0
    %3038 = vadd.xlane.f32.xlu0 %v3037
    %v3039 = vpop.xlane.xlu0 %3038
    %vm3040 = vcmp.ge.f32.partialorder %v3003, %v3030
    %vm3041 = vcmp.ge.f32.partialorder %v3004, %v3033
    %vm3042 = vcmp.ge.f32.partialorder %v3005, %v3036
    %vm3043 = vcmp.ge.f32.partialorder %v3006, %v3039
    %v3044 = vsel %vm3040, %v41, 16.0
    %v3045 = vsel %vm3041, %v42, 16.0
    %v3046 = vsel %vm3042, %v43, 16.0
    %v3047 = vsel %vm3043, %v44, 16.0
    %3049 = vset.pattern.permute.xlu0 0
    %3050 = vperm.xlu0 %3049, %v3044
    %v3051 = vpop.permute.xlu0 %3050
    %3054 = vset.pattern.permute.xlu0 0
    %3055 = vperm.xlu0 %3054, %v3045
    %v3056 = vpop.permute.xlu0 %3055
    %3059 = vset.pattern.permute.xlu0 0
    %3060 = vperm.xlu0 %3059, %v3046
    %v3061 = vpop.permute.xlu0 %3060
    %3064 = vset.pattern.permute.xlu0 0
    %3065 = vperm.xlu0 %3064, %v3047
    %v3066 = vpop.permute.xlu0 %3065
    %v3068 = vsel %vm212, %v3051, 16.0
    %v3069 = vsel %vm213, %v3056, 16.0
    %v3070 = vsel %vm214, %v3061, 16.0
    %v3071 = vsel %vm215, %v3066, 16.0
    %v3072 = vsel %vm220, %v3068, inf
    %v3073 = vsel %vm220, %v3069, inf
    %v3074 = vsel %vm220, %v3070, inf
    %v3075 = vsel %vm220, %v3071, inf
    %v3076 = vmin.f32 %v3072, %v3073
    %v3077 = vmin.f32 %v3074, %v3075
    %v3078 = vmin.f32 %v3076, %v3077
    %v3079 = vrot.slane %v3078, 4
    %v3080 = vmin.f32 %v3078, %v3079
    %v3081 = vrot.slane %v3080, 2
    %v3082 = vmin.f32 %v3080, %v3081
    %v3083 = vrot.slane %v3082, 1
    %v3084 = vmin.f32 %v3082, %v3083
    %v3085 = vmul.f32 %v37, %v3084
    %v3086 = vmul.f32 %v38, %v3084
    %v3087 = vmul.f32 %v39, %v3084
    %v3088 = vmul.f32 %v40, %v3084
    %v3089 = vsel %vm220, %v3085, 0.0
    %3090 = vadd.xlane.f32.xlu0 %v3089
    %v3091 = vpop.xlane.xlu0 %3090
    %v3092 = vsel %vm220, %v3086, 0.0
    %3093 = vadd.xlane.f32.xlu0 %v3092
    %v3094 = vpop.xlane.xlu0 %3093
    %v3095 = vsel %vm220, %v3087, 0.0
    %3096 = vadd.xlane.f32.xlu0 %v3095
    %v3097 = vpop.xlane.xlu0 %3096
    %v3098 = vsel %vm220, %v3088, 0.0
    %3099 = vadd.xlane.f32.xlu0 %v3098
    %v3100 = vpop.xlane.xlu0 %3099
    %vm3101 = vcmp.eq.f32.partialorder %v41, %v3091
    %vm3102 = vcmp.eq.f32.partialorder %v42, %v3094
    %vm3103 = vcmp.eq.f32.partialorder %v43, %v3097
    %vm3104 = vcmp.eq.f32.partialorder %v44, %v3100
    %v3105 = vsel %vm3101, 1, 0
    %v3106 = vsel %vm3102, 1, 0
    %v3107 = vsel %vm3103, 1, 0
    %v3108 = vsel %vm3104, 1, 0
    %v3109 = vcvt.s32.f32 %v3105
    %v3110 = vcvt.s32.f32 %v3106
    %v3111 = vcvt.s32.f32 %v3107
    %v3112 = vcvt.s32.f32 %v3108
    %3114 = vset.pattern.permute.xlu0 0
    %3115 = vperm.xlu0 %3114, %v3109
    %v3116 = vpop.permute.xlu0 %3115
    %3119 = vset.pattern.permute.xlu0 0
    %3120 = vperm.xlu0 %3119, %v3110
    %v3121 = vpop.permute.xlu0 %3120
    %3124 = vset.pattern.permute.xlu0 0
    %3125 = vperm.xlu0 %3124, %v3111
    %v3126 = vpop.permute.xlu0 %3125
    %3129 = vset.pattern.permute.xlu0 0
    %3130 = vperm.xlu0 %3129, %v3112
    %v3131 = vpop.permute.xlu0 %3130
    %v3133 = vmul.f32 %v3116, %v25
    %v3134 = vmul.f32 %v3121, %v26
    %v3135 = vmul.f32 %v3126, %v27
    %v3136 = vmul.f32 %v3131, %v28
    %3137 = vmatprep.subr.mxu0 0.0
    %3138 = vmatpush1.msra.mxu0 0.0
    %3139 = vmatprep.subr.mxu0 0.0
    %3140 = vmatpush1.msra.mxu0 0.0
    %3141 = vmatprep.subr.mxu0 0.0
    %3142 = vmatpush1.msra.mxu0 0.0
    %3143 = vmatprep.subr.mxu0 0.0
    %3144 = vmatpush1.msra.mxu0 0.0
    %3145 = vmatprep.subr.mxu0 0.0
    %3146 = vmatpush1.msra.mxu0 0.0
    %3147 = vmatprep.subr.mxu0 0.0
    %3148 = vmatpush1.msra.mxu0 0.0
    %3149 = vmatprep.subr.mxu0 0.0
    %3150 = vmatpush1.msra.mxu0 0.0
    %3151 = vmatprep.subr.mxu0 0.0
    %3152 = vmatpush1.msra.mxu0 0.0
    %3153 = vmatprep.subr.mxu0 0.0
    %3154 = vmatpush1.msra.mxu0 0.0
    %3155 = vmatprep.subr.mxu0 0.0
    %3156 = vmatpush1.msra.mxu0 0.0
    %3157 = vmatprep.subr.mxu0 0.0
    %3158 = vmatpush1.msra.mxu0 0.0
    %3159 = vmatprep.subr.mxu0 0.0
    %3160 = vmatpush1.msra.mxu0 0.0
    %3161 = vmatprep.subr.mxu0 0.0
    %3162 = vmatpush1.msra.mxu0 %v3136
    %3163 = vmatprep.subr.mxu0 0.0
    %3164 = vmatpush1.msra.mxu0 %v3135
    %3165 = vmatprep.subr.mxu0 0.0
    %3166 = vmatpush1.msra.mxu0 %v3134
    %3167 = vmatprep.subr.mxu0 0.0
    %3168 = vmatpush1.msra.mxu0 %v3133
    %3169 = vmatprep.subr.mxu0 0.0
    %3170 = vmatpush2.msra.mxu0 0.0
    %3171 = vmatprep.subr.mxu0 0.0
    %3172 = vmatpush2.msra.mxu0 0.0
    %3173 = vmatprep.subr.mxu0 0.0
    %3174 = vmatpush2.msra.mxu0 0.0
    %3175 = vmatprep.subr.mxu0 0.0
    %3176 = vmatpush2.msra.mxu0 0.0
    %3177 = vmatprep.subr.mxu0 0.0
    %3178 = vmatpush2.msra.mxu0 0.0
    %3179 = vmatprep.subr.mxu0 0.0
    %3180 = vmatpush2.msra.mxu0 0.0
    %3181 = vmatprep.subr.mxu0 0.0
    %3182 = vmatpush2.msra.mxu0 0.0
    %3183 = vmatprep.subr.mxu0 0.0
    %3184 = vmatpush2.msra.mxu0 0.0
    %3185 = vmatprep.subr.mxu0 0.0
    %3186 = vmatpush2.msra.mxu0 0.0
    %3187 = vmatprep.subr.mxu0 0.0
    %3188 = vmatpush2.msra.mxu0 0.0
    %3189 = vmatprep.subr.mxu0 0.0
    %3190 = vmatpush2.msra.mxu0 0.0
    %3191 = vmatprep.subr.mxu0 0.0
    %3192 = vmatpush2.msra.mxu0 0.0
    %3193 = vmatprep.subr.mxu0 0.0
    %3194 = vmatpush2.msra.mxu0 0.0
    %3195 = vmatprep.subr.mxu0 0.0
    %3196 = vmatpush2.msra.mxu0 0.0
    %3197 = vmatprep.subr.mxu0 0.0
    %3198 = vmatpush2.msra.mxu0 0.0
    %3199 = vmatprep.subr.mxu0 0.0
    %3200 = vmatpush2.msra.mxu0 0.0
    %3201 = vmatprep.mubr.f32.mxu0 0.0
    %3202 = vmatmul.mubr.f32.gmra.mxu0 %v83
    %v3203 = vpop.f32.mrf.mxu0
    %v3204 = vadd.f32 0.0, %v3203
    %v3205 = vpop.f32.mrf.mxu0
    %3206 = vmatprep.mubr.f32.mxu0 0.0
    %3207 = vmatmul.mubr.f32.gmra.mxu0 %v86
    %v3208 = vpop.f32.mrf.mxu0
    %v3209 = vadd.f32 0.0, %v3208
    %v3210 = vpop.f32.mrf.mxu0
    %3211 = vmatprep.mubr.f32.mxu0 0.0
    %3212 = vmatmul.mubr.f32.gmra.mxu0 %v89
    %v3213 = vpop.f32.mrf.mxu0
    %v3214 = vadd.f32 0.0, %v3213
    %v3215 = vpop.f32.mrf.mxu0
    %3216 = vmatprep.mubr.f32.mxu0 0.0
    %3217 = vmatmul.mubr.f32.gmra.mxu0 %v92
    %v3218 = vpop.f32.mrf.mxu0
    %v3219 = vadd.f32 0.0, %v3218
    %v3220 = vpop.f32.mrf.mxu0
    %3221 = vdwg.mxu0
    %vm3222 = vcmp.eq.f32.partialorder %v41, 11.0
    %vm3223 = vcmp.eq.f32.partialorder %v42, 11.0
    %vm3224 = vcmp.eq.f32.partialorder %v43, 11.0
    %vm3225 = vcmp.eq.f32.partialorder %v44, 11.0
    %v3226 = vsel %vm3222, 1, 0
    %v3227 = vsel %vm3223, 1, 0
    %v3228 = vsel %vm3224, 1, 0
    %v3229 = vsel %vm3225, 1, 0
    %v3230 = vcvt.s32.f32 %v3226
    %v3231 = vcvt.s32.f32 %v3227
    %v3232 = vcvt.s32.f32 %v3228
    %v3233 = vcvt.s32.f32 %v3229
    %3235 = vset.pattern.permute.xlu0 0
    %3236 = vperm.xlu0 %3235, %v3230
    %v3237 = vpop.permute.xlu0 %3236
    %3240 = vset.pattern.permute.xlu0 0
    %3241 = vperm.xlu0 %3240, %v3231
    %v3242 = vpop.permute.xlu0 %3241
    %3245 = vset.pattern.permute.xlu0 0
    %3246 = vperm.xlu0 %3245, %v3232
    %v3247 = vpop.permute.xlu0 %3246
    %3250 = vset.pattern.permute.xlu0 0
    %3251 = vperm.xlu0 %3250, %v3233
    %v3252 = vpop.permute.xlu0 %3251
    %v3254 = vmul.f32 %v3237, %v3204
    %v3255 = vmul.f32 %v3242, %v3209
    %v3256 = vmul.f32 %v3247, %v3214
    %v3257 = vmul.f32 %v3252, %v3219
    %v3258 = vadd.f32 %v2979, %v3254
    %v3259 = vadd.f32 %v2980, %v3255
    %v3260 = vadd.f32 %v2981, %v3256
    %v3261 = vadd.f32 %v2982, %v3257
    %v3262 = vsub.f32 %v25, %v3204
    %v3263 = vsub.f32 %v26, %v3209
    %v3264 = vsub.f32 %v27, %v3214
    %v3265 = vsub.f32 %v28, %v3219
    %v3266 = vmul.f32 %v3262, %v3262
    %v3267 = vmul.f32 %v3263, %v3263
    %v3268 = vmul.f32 %v3264, %v3264
    %v3269 = vmul.f32 %v3265, %v3265
    %v3270 = vsel %vm195, %v3266, 0.0
    %3271 = vadd.xlane.f32.xlu0 %v3270
    %v3272 = vpop.xlane.xlu0 %3271
    %v3273 = vsel %vm195, %v3267, 0.0
    %3274 = vadd.xlane.f32.xlu0 %v3273
    %v3275 = vpop.xlane.xlu0 %3274
    %v3276 = vsel %vm195, %v3268, 0.0
    %3277 = vadd.xlane.f32.xlu0 %v3276
    %v3278 = vpop.xlane.xlu0 %3277
    %v3279 = vsel %vm195, %v3269, 0.0
    %3280 = vadd.xlane.f32.xlu0 %v3279
    %v3281 = vpop.xlane.xlu0 %3280
    %v3282 = vmin.f32 %v3003, %v3272
    %v3283 = vmin.f32 %v3004, %v3275
    %v3284 = vmin.f32 %v3005, %v3278
    %v3285 = vmin.f32 %v3006, %v3281
    %v3286 = vsel %vm212, %v3282, -1e+30
    %v3287 = vsel %vm213, %v3283, -1e+30
    %v3288 = vsel %vm214, %v3284, -1e+30
    %v3289 = vsel %vm215, %v3285, -1e+30
    %v3290 = vsel %vm220, %v3286, -inf
    %v3291 = vsel %vm220, %v3287, -inf
    %v3292 = vsel %vm220, %v3288, -inf
    %v3293 = vsel %vm220, %v3289, -inf
    %v3294 = vmax.f32 %v3290, %v3291
    %v3295 = vmax.f32 %v3292, %v3293
    %v3296 = vmax.f32 %v3294, %v3295
    %v3297 = vrot.slane %v3296, 4
    %v3298 = vmax.f32 %v3296, %v3297
    %v3299 = vrot.slane %v3298, 2
    %v3300 = vmax.f32 %v3298, %v3299
    %v3301 = vrot.slane %v3300, 1
    %v3302 = vmax.f32 %v3300, %v3301
    %v3303 = vmul.f32 %v37, %v3302
    %v3304 = vmul.f32 %v38, %v3302
    %v3305 = vmul.f32 %v39, %v3302
    %v3306 = vmul.f32 %v40, %v3302
    %v3307 = vsel %vm220, %v3303, 0.0
    %3308 = vadd.xlane.f32.xlu0 %v3307
    %v3309 = vpop.xlane.xlu0 %3308
    %v3310 = vsel %vm220, %v3304, 0.0
    %3311 = vadd.xlane.f32.xlu0 %v3310
    %v3312 = vpop.xlane.xlu0 %3311
    %v3313 = vsel %vm220, %v3305, 0.0
    %3314 = vadd.xlane.f32.xlu0 %v3313
    %v3315 = vpop.xlane.xlu0 %3314
    %v3316 = vsel %vm220, %v3306, 0.0
    %3317 = vadd.xlane.f32.xlu0 %v3316
    %v3318 = vpop.xlane.xlu0 %3317
    %vm3319 = vcmp.ge.f32.partialorder %v3282, %v3309
    %vm3320 = vcmp.ge.f32.partialorder %v3283, %v3312
    %vm3321 = vcmp.ge.f32.partialorder %v3284, %v3315
    %vm3322 = vcmp.ge.f32.partialorder %v3285, %v3318
    %v3323 = vsel %vm3319, %v41, 16.0
    %v3324 = vsel %vm3320, %v42, 16.0
    %v3325 = vsel %vm3321, %v43, 16.0
    %v3326 = vsel %vm3322, %v44, 16.0
    %3328 = vset.pattern.permute.xlu0 0
    %3329 = vperm.xlu0 %3328, %v3323
    %v3330 = vpop.permute.xlu0 %3329
    %3333 = vset.pattern.permute.xlu0 0
    %3334 = vperm.xlu0 %3333, %v3324
    %v3335 = vpop.permute.xlu0 %3334
    %3338 = vset.pattern.permute.xlu0 0
    %3339 = vperm.xlu0 %3338, %v3325
    %v3340 = vpop.permute.xlu0 %3339
    %3343 = vset.pattern.permute.xlu0 0
    %3344 = vperm.xlu0 %3343, %v3326
    %v3345 = vpop.permute.xlu0 %3344
    %v3347 = vsel %vm212, %v3330, 16.0
    %v3348 = vsel %vm213, %v3335, 16.0
    %v3349 = vsel %vm214, %v3340, 16.0
    %v3350 = vsel %vm215, %v3345, 16.0
    %v3351 = vsel %vm220, %v3347, inf
    %v3352 = vsel %vm220, %v3348, inf
    %v3353 = vsel %vm220, %v3349, inf
    %v3354 = vsel %vm220, %v3350, inf
    %v3355 = vmin.f32 %v3351, %v3352
    %v3356 = vmin.f32 %v3353, %v3354
    %v3357 = vmin.f32 %v3355, %v3356
    %v3358 = vrot.slane %v3357, 4
    %v3359 = vmin.f32 %v3357, %v3358
    %v3360 = vrot.slane %v3359, 2
    %v3361 = vmin.f32 %v3359, %v3360
    %v3362 = vrot.slane %v3361, 1
    %v3363 = vmin.f32 %v3361, %v3362
    %v3364 = vmul.f32 %v37, %v3363
    %v3365 = vmul.f32 %v38, %v3363
    %v3366 = vmul.f32 %v39, %v3363
    %v3367 = vmul.f32 %v40, %v3363
    %v3368 = vsel %vm220, %v3364, 0.0
    %3369 = vadd.xlane.f32.xlu0 %v3368
    %v3370 = vpop.xlane.xlu0 %3369
    %v3371 = vsel %vm220, %v3365, 0.0
    %3372 = vadd.xlane.f32.xlu0 %v3371
    %v3373 = vpop.xlane.xlu0 %3372
    %v3374 = vsel %vm220, %v3366, 0.0
    %3375 = vadd.xlane.f32.xlu0 %v3374
    %v3376 = vpop.xlane.xlu0 %3375
    %v3377 = vsel %vm220, %v3367, 0.0
    %3378 = vadd.xlane.f32.xlu0 %v3377
    %v3379 = vpop.xlane.xlu0 %3378
    %vm3380 = vcmp.eq.f32.partialorder %v41, %v3370
    %vm3381 = vcmp.eq.f32.partialorder %v42, %v3373
    %vm3382 = vcmp.eq.f32.partialorder %v43, %v3376
    %vm3383 = vcmp.eq.f32.partialorder %v44, %v3379
    %v3384 = vsel %vm3380, 1, 0
    %v3385 = vsel %vm3381, 1, 0
    %v3386 = vsel %vm3382, 1, 0
    %v3387 = vsel %vm3383, 1, 0
    %v3388 = vcvt.s32.f32 %v3384
    %v3389 = vcvt.s32.f32 %v3385
    %v3390 = vcvt.s32.f32 %v3386
    %v3391 = vcvt.s32.f32 %v3387
    %3393 = vset.pattern.permute.xlu0 0
    %3394 = vperm.xlu0 %3393, %v3388
    %v3395 = vpop.permute.xlu0 %3394
    %3398 = vset.pattern.permute.xlu0 0
    %3399 = vperm.xlu0 %3398, %v3389
    %v3400 = vpop.permute.xlu0 %3399
    %3403 = vset.pattern.permute.xlu0 0
    %3404 = vperm.xlu0 %3403, %v3390
    %v3405 = vpop.permute.xlu0 %3404
    %3408 = vset.pattern.permute.xlu0 0
    %3409 = vperm.xlu0 %3408, %v3391
    %v3410 = vpop.permute.xlu0 %3409
    %v3412 = vmul.f32 %v3395, %v25
    %v3413 = vmul.f32 %v3400, %v26
    %v3414 = vmul.f32 %v3405, %v27
    %v3415 = vmul.f32 %v3410, %v28
    %3416 = vmatprep.subr.mxu0 0.0
    %3417 = vmatpush1.msra.mxu0 0.0
    %3418 = vmatprep.subr.mxu0 0.0
    %3419 = vmatpush1.msra.mxu0 0.0
    %3420 = vmatprep.subr.mxu0 0.0
    %3421 = vmatpush1.msra.mxu0 0.0
    %3422 = vmatprep.subr.mxu0 0.0
    %3423 = vmatpush1.msra.mxu0 0.0
    %3424 = vmatprep.subr.mxu0 0.0
    %3425 = vmatpush1.msra.mxu0 0.0
    %3426 = vmatprep.subr.mxu0 0.0
    %3427 = vmatpush1.msra.mxu0 0.0
    %3428 = vmatprep.subr.mxu0 0.0
    %3429 = vmatpush1.msra.mxu0 0.0
    %3430 = vmatprep.subr.mxu0 0.0
    %3431 = vmatpush1.msra.mxu0 0.0
    %3432 = vmatprep.subr.mxu0 0.0
    %3433 = vmatpush1.msra.mxu0 0.0
    %3434 = vmatprep.subr.mxu0 0.0
    %3435 = vmatpush1.msra.mxu0 0.0
    %3436 = vmatprep.subr.mxu0 0.0
    %3437 = vmatpush1.msra.mxu0 0.0
    %3438 = vmatprep.subr.mxu0 0.0
    %3439 = vmatpush1.msra.mxu0 0.0
    %3440 = vmatprep.subr.mxu0 0.0
    %3441 = vmatpush1.msra.mxu0 %v3415
    %3442 = vmatprep.subr.mxu0 0.0
    %3443 = vmatpush1.msra.mxu0 %v3414
    %3444 = vmatprep.subr.mxu0 0.0
    %3445 = vmatpush1.msra.mxu0 %v3413
    %3446 = vmatprep.subr.mxu0 0.0
    %3447 = vmatpush1.msra.mxu0 %v3412
    %3448 = vmatprep.subr.mxu0 0.0
    %3449 = vmatpush2.msra.mxu0 0.0
    %3450 = vmatprep.subr.mxu0 0.0
    %3451 = vmatpush2.msra.mxu0 0.0
    %3452 = vmatprep.subr.mxu0 0.0
    %3453 = vmatpush2.msra.mxu0 0.0
    %3454 = vmatprep.subr.mxu0 0.0
    %3455 = vmatpush2.msra.mxu0 0.0
    %3456 = vmatprep.subr.mxu0 0.0
    %3457 = vmatpush2.msra.mxu0 0.0
    %3458 = vmatprep.subr.mxu0 0.0
    %3459 = vmatpush2.msra.mxu0 0.0
    %3460 = vmatprep.subr.mxu0 0.0
    %3461 = vmatpush2.msra.mxu0 0.0
    %3462 = vmatprep.subr.mxu0 0.0
    %3463 = vmatpush2.msra.mxu0 0.0
    %3464 = vmatprep.subr.mxu0 0.0
    %3465 = vmatpush2.msra.mxu0 0.0
    %3466 = vmatprep.subr.mxu0 0.0
    %3467 = vmatpush2.msra.mxu0 0.0
    %3468 = vmatprep.subr.mxu0 0.0
    %3469 = vmatpush2.msra.mxu0 0.0
    %3470 = vmatprep.subr.mxu0 0.0
    %3471 = vmatpush2.msra.mxu0 0.0
    %3472 = vmatprep.subr.mxu0 0.0
    %3473 = vmatpush2.msra.mxu0 0.0
    %3474 = vmatprep.subr.mxu0 0.0
    %3475 = vmatpush2.msra.mxu0 0.0
    %3476 = vmatprep.subr.mxu0 0.0
    %3477 = vmatpush2.msra.mxu0 0.0
    %3478 = vmatprep.subr.mxu0 0.0
    %3479 = vmatpush2.msra.mxu0 0.0
    %3480 = vmatprep.mubr.f32.mxu0 0.0
    %3481 = vmatmul.mubr.f32.gmra.mxu0 %v83
    %v3482 = vpop.f32.mrf.mxu0
    %v3483 = vadd.f32 0.0, %v3482
    %v3484 = vpop.f32.mrf.mxu0
    %3485 = vmatprep.mubr.f32.mxu0 0.0
    %3486 = vmatmul.mubr.f32.gmra.mxu0 %v86
    %v3487 = vpop.f32.mrf.mxu0
    %v3488 = vadd.f32 0.0, %v3487
    %v3489 = vpop.f32.mrf.mxu0
    %3490 = vmatprep.mubr.f32.mxu0 0.0
    %3491 = vmatmul.mubr.f32.gmra.mxu0 %v89
    %v3492 = vpop.f32.mrf.mxu0
    %v3493 = vadd.f32 0.0, %v3492
    %v3494 = vpop.f32.mrf.mxu0
    %3495 = vmatprep.mubr.f32.mxu0 0.0
    %3496 = vmatmul.mubr.f32.gmra.mxu0 %v92
    %v3497 = vpop.f32.mrf.mxu0
    %v3498 = vadd.f32 0.0, %v3497
    %v3499 = vpop.f32.mrf.mxu0
    %3500 = vdwg.mxu0
    %vm3501 = vcmp.eq.f32.partialorder %v41, 12.0
    %vm3502 = vcmp.eq.f32.partialorder %v42, 12.0
    %vm3503 = vcmp.eq.f32.partialorder %v43, 12.0
    %vm3504 = vcmp.eq.f32.partialorder %v44, 12.0
    %v3505 = vsel %vm3501, 1, 0
    %v3506 = vsel %vm3502, 1, 0
    %v3507 = vsel %vm3503, 1, 0
    %v3508 = vsel %vm3504, 1, 0
    %v3509 = vcvt.s32.f32 %v3505
    %v3510 = vcvt.s32.f32 %v3506
    %v3511 = vcvt.s32.f32 %v3507
    %v3512 = vcvt.s32.f32 %v3508
    %3514 = vset.pattern.permute.xlu0 0
    %3515 = vperm.xlu0 %3514, %v3509
    %v3516 = vpop.permute.xlu0 %3515
    %3519 = vset.pattern.permute.xlu0 0
    %3520 = vperm.xlu0 %3519, %v3510
    %v3521 = vpop.permute.xlu0 %3520
    %3524 = vset.pattern.permute.xlu0 0
    %3525 = vperm.xlu0 %3524, %v3511
    %v3526 = vpop.permute.xlu0 %3525
    %3529 = vset.pattern.permute.xlu0 0
    %3530 = vperm.xlu0 %3529, %v3512
    %v3531 = vpop.permute.xlu0 %3530
    %v3533 = vmul.f32 %v3516, %v3483
    %v3534 = vmul.f32 %v3521, %v3488
    %v3535 = vmul.f32 %v3526, %v3493
    %v3536 = vmul.f32 %v3531, %v3498
    %v3537 = vadd.f32 %v3258, %v3533
    %v3538 = vadd.f32 %v3259, %v3534
    %v3539 = vadd.f32 %v3260, %v3535
    %v3540 = vadd.f32 %v3261, %v3536
    %v3541 = vsub.f32 %v25, %v3483
    %v3542 = vsub.f32 %v26, %v3488
    %v3543 = vsub.f32 %v27, %v3493
    %v3544 = vsub.f32 %v28, %v3498
    %v3545 = vmul.f32 %v3541, %v3541
    %v3546 = vmul.f32 %v3542, %v3542
    %v3547 = vmul.f32 %v3543, %v3543
    %v3548 = vmul.f32 %v3544, %v3544
    %v3549 = vsel %vm195, %v3545, 0.0
    %3550 = vadd.xlane.f32.xlu0 %v3549
    %v3551 = vpop.xlane.xlu0 %3550
    %v3552 = vsel %vm195, %v3546, 0.0
    %3553 = vadd.xlane.f32.xlu0 %v3552
    %v3554 = vpop.xlane.xlu0 %3553
    %v3555 = vsel %vm195, %v3547, 0.0
    %3556 = vadd.xlane.f32.xlu0 %v3555
    %v3557 = vpop.xlane.xlu0 %3556
    %v3558 = vsel %vm195, %v3548, 0.0
    %3559 = vadd.xlane.f32.xlu0 %v3558
    %v3560 = vpop.xlane.xlu0 %3559
    %v3561 = vmin.f32 %v3282, %v3551
    %v3562 = vmin.f32 %v3283, %v3554
    %v3563 = vmin.f32 %v3284, %v3557
    %v3564 = vmin.f32 %v3285, %v3560
    %v3565 = vsel %vm212, %v3561, -1e+30
    %v3566 = vsel %vm213, %v3562, -1e+30
    %v3567 = vsel %vm214, %v3563, -1e+30
    %v3568 = vsel %vm215, %v3564, -1e+30
    %v3569 = vsel %vm220, %v3565, -inf
    %v3570 = vsel %vm220, %v3566, -inf
    %v3571 = vsel %vm220, %v3567, -inf
    %v3572 = vsel %vm220, %v3568, -inf
    %v3573 = vmax.f32 %v3569, %v3570
    %v3574 = vmax.f32 %v3571, %v3572
    %v3575 = vmax.f32 %v3573, %v3574
    %v3576 = vrot.slane %v3575, 4
    %v3577 = vmax.f32 %v3575, %v3576
    %v3578 = vrot.slane %v3577, 2
    %v3579 = vmax.f32 %v3577, %v3578
    %v3580 = vrot.slane %v3579, 1
    %v3581 = vmax.f32 %v3579, %v3580
    %v3582 = vmul.f32 %v37, %v3581
    %v3583 = vmul.f32 %v38, %v3581
    %v3584 = vmul.f32 %v39, %v3581
    %v3585 = vmul.f32 %v40, %v3581
    %v3586 = vsel %vm220, %v3582, 0.0
    %3587 = vadd.xlane.f32.xlu0 %v3586
    %v3588 = vpop.xlane.xlu0 %3587
    %v3589 = vsel %vm220, %v3583, 0.0
    %3590 = vadd.xlane.f32.xlu0 %v3589
    %v3591 = vpop.xlane.xlu0 %3590
    %v3592 = vsel %vm220, %v3584, 0.0
    %3593 = vadd.xlane.f32.xlu0 %v3592
    %v3594 = vpop.xlane.xlu0 %3593
    %v3595 = vsel %vm220, %v3585, 0.0
    %3596 = vadd.xlane.f32.xlu0 %v3595
    %v3597 = vpop.xlane.xlu0 %3596
    %vm3598 = vcmp.ge.f32.partialorder %v3561, %v3588
    %vm3599 = vcmp.ge.f32.partialorder %v3562, %v3591
    %vm3600 = vcmp.ge.f32.partialorder %v3563, %v3594
    %vm3601 = vcmp.ge.f32.partialorder %v3564, %v3597
    %v3602 = vsel %vm3598, %v41, 16.0
    %v3603 = vsel %vm3599, %v42, 16.0
    %v3604 = vsel %vm3600, %v43, 16.0
    %v3605 = vsel %vm3601, %v44, 16.0
    %3607 = vset.pattern.permute.xlu0 0
    %3608 = vperm.xlu0 %3607, %v3602
    %v3609 = vpop.permute.xlu0 %3608
    %3612 = vset.pattern.permute.xlu0 0
    %3613 = vperm.xlu0 %3612, %v3603
    %v3614 = vpop.permute.xlu0 %3613
    %3617 = vset.pattern.permute.xlu0 0
    %3618 = vperm.xlu0 %3617, %v3604
    %v3619 = vpop.permute.xlu0 %3618
    %3622 = vset.pattern.permute.xlu0 0
    %3623 = vperm.xlu0 %3622, %v3605
    %v3624 = vpop.permute.xlu0 %3623
    %v3626 = vsel %vm212, %v3609, 16.0
    %v3627 = vsel %vm213, %v3614, 16.0
    %v3628 = vsel %vm214, %v3619, 16.0
    %v3629 = vsel %vm215, %v3624, 16.0
    %v3630 = vsel %vm220, %v3626, inf
    %v3631 = vsel %vm220, %v3627, inf
    %v3632 = vsel %vm220, %v3628, inf
    %v3633 = vsel %vm220, %v3629, inf
    %v3634 = vmin.f32 %v3630, %v3631
    %v3635 = vmin.f32 %v3632, %v3633
    %v3636 = vmin.f32 %v3634, %v3635
    %v3637 = vrot.slane %v3636, 4
    %v3638 = vmin.f32 %v3636, %v3637
    %v3639 = vrot.slane %v3638, 2
    %v3640 = vmin.f32 %v3638, %v3639
    %v3641 = vrot.slane %v3640, 1
    %v3642 = vmin.f32 %v3640, %v3641
    %v3643 = vmul.f32 %v37, %v3642
    %v3644 = vmul.f32 %v38, %v3642
    %v3645 = vmul.f32 %v39, %v3642
    %v3646 = vmul.f32 %v40, %v3642
    %v3647 = vsel %vm220, %v3643, 0.0
    %3648 = vadd.xlane.f32.xlu0 %v3647
    %v3649 = vpop.xlane.xlu0 %3648
    %v3650 = vsel %vm220, %v3644, 0.0
    %3651 = vadd.xlane.f32.xlu0 %v3650
    %v3652 = vpop.xlane.xlu0 %3651
    %v3653 = vsel %vm220, %v3645, 0.0
    %3654 = vadd.xlane.f32.xlu0 %v3653
    %v3655 = vpop.xlane.xlu0 %3654
    %v3656 = vsel %vm220, %v3646, 0.0
    %3657 = vadd.xlane.f32.xlu0 %v3656
    %v3658 = vpop.xlane.xlu0 %3657
    %vm3659 = vcmp.eq.f32.partialorder %v41, %v3649
    %vm3660 = vcmp.eq.f32.partialorder %v42, %v3652
    %vm3661 = vcmp.eq.f32.partialorder %v43, %v3655
    %vm3662 = vcmp.eq.f32.partialorder %v44, %v3658
    %v3663 = vsel %vm3659, 1, 0
    %v3664 = vsel %vm3660, 1, 0
    %v3665 = vsel %vm3661, 1, 0
    %v3666 = vsel %vm3662, 1, 0
    %v3667 = vcvt.s32.f32 %v3663
    %v3668 = vcvt.s32.f32 %v3664
    %v3669 = vcvt.s32.f32 %v3665
    %v3670 = vcvt.s32.f32 %v3666
    %3672 = vset.pattern.permute.xlu0 0
    %3673 = vperm.xlu0 %3672, %v3667
    %v3674 = vpop.permute.xlu0 %3673
    %3677 = vset.pattern.permute.xlu0 0
    %3678 = vperm.xlu0 %3677, %v3668
    %v3679 = vpop.permute.xlu0 %3678
    %3682 = vset.pattern.permute.xlu0 0
    %3683 = vperm.xlu0 %3682, %v3669
    %v3684 = vpop.permute.xlu0 %3683
    %3687 = vset.pattern.permute.xlu0 0
    %3688 = vperm.xlu0 %3687, %v3670
    %v3689 = vpop.permute.xlu0 %3688
    %v3691 = vmul.f32 %v3674, %v25
    %v3692 = vmul.f32 %v3679, %v26
    %v3693 = vmul.f32 %v3684, %v27
    %v3694 = vmul.f32 %v3689, %v28
    %3695 = vmatprep.subr.mxu0 0.0
    %3696 = vmatpush1.msra.mxu0 0.0
    %3697 = vmatprep.subr.mxu0 0.0
    %3698 = vmatpush1.msra.mxu0 0.0
    %3699 = vmatprep.subr.mxu0 0.0
    %3700 = vmatpush1.msra.mxu0 0.0
    %3701 = vmatprep.subr.mxu0 0.0
    %3702 = vmatpush1.msra.mxu0 0.0
    %3703 = vmatprep.subr.mxu0 0.0
    %3704 = vmatpush1.msra.mxu0 0.0
    %3705 = vmatprep.subr.mxu0 0.0
    %3706 = vmatpush1.msra.mxu0 0.0
    %3707 = vmatprep.subr.mxu0 0.0
    %3708 = vmatpush1.msra.mxu0 0.0
    %3709 = vmatprep.subr.mxu0 0.0
    %3710 = vmatpush1.msra.mxu0 0.0
    %3711 = vmatprep.subr.mxu0 0.0
    %3712 = vmatpush1.msra.mxu0 0.0
    %3713 = vmatprep.subr.mxu0 0.0
    %3714 = vmatpush1.msra.mxu0 0.0
    %3715 = vmatprep.subr.mxu0 0.0
    %3716 = vmatpush1.msra.mxu0 0.0
    %3717 = vmatprep.subr.mxu0 0.0
    %3718 = vmatpush1.msra.mxu0 0.0
    %3719 = vmatprep.subr.mxu0 0.0
    %3720 = vmatpush1.msra.mxu0 %v3694
    %3721 = vmatprep.subr.mxu0 0.0
    %3722 = vmatpush1.msra.mxu0 %v3693
    %3723 = vmatprep.subr.mxu0 0.0
    %3724 = vmatpush1.msra.mxu0 %v3692
    %3725 = vmatprep.subr.mxu0 0.0
    %3726 = vmatpush1.msra.mxu0 %v3691
    %3727 = vmatprep.subr.mxu0 0.0
    %3728 = vmatpush2.msra.mxu0 0.0
    %3729 = vmatprep.subr.mxu0 0.0
    %3730 = vmatpush2.msra.mxu0 0.0
    %3731 = vmatprep.subr.mxu0 0.0
    %3732 = vmatpush2.msra.mxu0 0.0
    %3733 = vmatprep.subr.mxu0 0.0
    %3734 = vmatpush2.msra.mxu0 0.0
    %3735 = vmatprep.subr.mxu0 0.0
    %3736 = vmatpush2.msra.mxu0 0.0
    %3737 = vmatprep.subr.mxu0 0.0
    %3738 = vmatpush2.msra.mxu0 0.0
    %3739 = vmatprep.subr.mxu0 0.0
    %3740 = vmatpush2.msra.mxu0 0.0
    %3741 = vmatprep.subr.mxu0 0.0
    %3742 = vmatpush2.msra.mxu0 0.0
    %3743 = vmatprep.subr.mxu0 0.0
    %3744 = vmatpush2.msra.mxu0 0.0
    %3745 = vmatprep.subr.mxu0 0.0
    %3746 = vmatpush2.msra.mxu0 0.0
    %3747 = vmatprep.subr.mxu0 0.0
    %3748 = vmatpush2.msra.mxu0 0.0
    %3749 = vmatprep.subr.mxu0 0.0
    %3750 = vmatpush2.msra.mxu0 0.0
    %3751 = vmatprep.subr.mxu0 0.0
    %3752 = vmatpush2.msra.mxu0 0.0
    %3753 = vmatprep.subr.mxu0 0.0
    %3754 = vmatpush2.msra.mxu0 0.0
    %3755 = vmatprep.subr.mxu0 0.0
    %3756 = vmatpush2.msra.mxu0 0.0
    %3757 = vmatprep.subr.mxu0 0.0
    %3758 = vmatpush2.msra.mxu0 0.0
    %3759 = vmatprep.mubr.f32.mxu0 0.0
    %3760 = vmatmul.mubr.f32.gmra.mxu0 %v83
    %v3761 = vpop.f32.mrf.mxu0
    %v3762 = vadd.f32 0.0, %v3761
    %v3763 = vpop.f32.mrf.mxu0
    %3764 = vmatprep.mubr.f32.mxu0 0.0
    %3765 = vmatmul.mubr.f32.gmra.mxu0 %v86
    %v3766 = vpop.f32.mrf.mxu0
    %v3767 = vadd.f32 0.0, %v3766
    %v3768 = vpop.f32.mrf.mxu0
    %3769 = vmatprep.mubr.f32.mxu0 0.0
    %3770 = vmatmul.mubr.f32.gmra.mxu0 %v89
    %v3771 = vpop.f32.mrf.mxu0
    %v3772 = vadd.f32 0.0, %v3771
    %v3773 = vpop.f32.mrf.mxu0
    %3774 = vmatprep.mubr.f32.mxu0 0.0
    %3775 = vmatmul.mubr.f32.gmra.mxu0 %v92
    %v3776 = vpop.f32.mrf.mxu0
    %v3777 = vadd.f32 0.0, %v3776
    %v3778 = vpop.f32.mrf.mxu0
    %3779 = vdwg.mxu0
    %vm3780 = vcmp.eq.f32.partialorder %v41, 13.0
    %vm3781 = vcmp.eq.f32.partialorder %v42, 13.0
    %vm3782 = vcmp.eq.f32.partialorder %v43, 13.0
    %vm3783 = vcmp.eq.f32.partialorder %v44, 13.0
    %v3784 = vsel %vm3780, 1, 0
    %v3785 = vsel %vm3781, 1, 0
    %v3786 = vsel %vm3782, 1, 0
    %v3787 = vsel %vm3783, 1, 0
    %v3788 = vcvt.s32.f32 %v3784
    %v3789 = vcvt.s32.f32 %v3785
    %v3790 = vcvt.s32.f32 %v3786
    %v3791 = vcvt.s32.f32 %v3787
    %3793 = vset.pattern.permute.xlu0 0
    %3794 = vperm.xlu0 %3793, %v3788
    %v3795 = vpop.permute.xlu0 %3794
    %3798 = vset.pattern.permute.xlu0 0
    %3799 = vperm.xlu0 %3798, %v3789
    %v3800 = vpop.permute.xlu0 %3799
    %3803 = vset.pattern.permute.xlu0 0
    %3804 = vperm.xlu0 %3803, %v3790
    %v3805 = vpop.permute.xlu0 %3804
    %3808 = vset.pattern.permute.xlu0 0
    %3809 = vperm.xlu0 %3808, %v3791
    %v3810 = vpop.permute.xlu0 %3809
    %v3812 = vmul.f32 %v3795, %v3762
    %v3813 = vmul.f32 %v3800, %v3767
    %v3814 = vmul.f32 %v3805, %v3772
    %v3815 = vmul.f32 %v3810, %v3777
    %v3816 = vadd.f32 %v3537, %v3812
    %v3817 = vadd.f32 %v3538, %v3813
    %v3818 = vadd.f32 %v3539, %v3814
    %v3819 = vadd.f32 %v3540, %v3815
    %v3820 = vsub.f32 %v25, %v3762
    %v3821 = vsub.f32 %v26, %v3767
    %v3822 = vsub.f32 %v27, %v3772
    %v3823 = vsub.f32 %v28, %v3777
    %v3824 = vmul.f32 %v3820, %v3820
    %v3825 = vmul.f32 %v3821, %v3821
    %v3826 = vmul.f32 %v3822, %v3822
    %v3827 = vmul.f32 %v3823, %v3823
    %v3828 = vsel %vm195, %v3824, 0.0
    %3829 = vadd.xlane.f32.xlu0 %v3828
    %v3830 = vpop.xlane.xlu0 %3829
    %v3831 = vsel %vm195, %v3825, 0.0
    %3832 = vadd.xlane.f32.xlu0 %v3831
    %v3833 = vpop.xlane.xlu0 %3832
    %v3834 = vsel %vm195, %v3826, 0.0
    %3835 = vadd.xlane.f32.xlu0 %v3834
    %v3836 = vpop.xlane.xlu0 %3835
    %v3837 = vsel %vm195, %v3827, 0.0
    %3838 = vadd.xlane.f32.xlu0 %v3837
    %v3839 = vpop.xlane.xlu0 %3838
    %v3840 = vmin.f32 %v3561, %v3830
    %v3841 = vmin.f32 %v3562, %v3833
    %v3842 = vmin.f32 %v3563, %v3836
    %v3843 = vmin.f32 %v3564, %v3839
    %v3844 = vsel %vm212, %v3840, -1e+30
    %v3845 = vsel %vm213, %v3841, -1e+30
    %v3846 = vsel %vm214, %v3842, -1e+30
    %v3847 = vsel %vm215, %v3843, -1e+30
    %v3848 = vsel %vm220, %v3844, -inf
    %v3849 = vsel %vm220, %v3845, -inf
    %v3850 = vsel %vm220, %v3846, -inf
    %v3851 = vsel %vm220, %v3847, -inf
    %v3852 = vmax.f32 %v3848, %v3849
    %v3853 = vmax.f32 %v3850, %v3851
    %v3854 = vmax.f32 %v3852, %v3853
    %v3855 = vrot.slane %v3854, 4
    %v3856 = vmax.f32 %v3854, %v3855
    %v3857 = vrot.slane %v3856, 2
    %v3858 = vmax.f32 %v3856, %v3857
    %v3859 = vrot.slane %v3858, 1
    %v3860 = vmax.f32 %v3858, %v3859
    %v3861 = vmul.f32 %v37, %v3860
    %v3862 = vmul.f32 %v38, %v3860
    %v3863 = vmul.f32 %v39, %v3860
    %v3864 = vmul.f32 %v40, %v3860
    %v3865 = vsel %vm220, %v3861, 0.0
    %3866 = vadd.xlane.f32.xlu0 %v3865
    %v3867 = vpop.xlane.xlu0 %3866
    %v3868 = vsel %vm220, %v3862, 0.0
    %3869 = vadd.xlane.f32.xlu0 %v3868
    %v3870 = vpop.xlane.xlu0 %3869
    %v3871 = vsel %vm220, %v3863, 0.0
    %3872 = vadd.xlane.f32.xlu0 %v3871
    %v3873 = vpop.xlane.xlu0 %3872
    %v3874 = vsel %vm220, %v3864, 0.0
    %3875 = vadd.xlane.f32.xlu0 %v3874
    %v3876 = vpop.xlane.xlu0 %3875
    %vm3877 = vcmp.ge.f32.partialorder %v3840, %v3867
    %vm3878 = vcmp.ge.f32.partialorder %v3841, %v3870
    %vm3879 = vcmp.ge.f32.partialorder %v3842, %v3873
    %vm3880 = vcmp.ge.f32.partialorder %v3843, %v3876
    %v3881 = vsel %vm3877, %v41, 16.0
    %v3882 = vsel %vm3878, %v42, 16.0
    %v3883 = vsel %vm3879, %v43, 16.0
    %v3884 = vsel %vm3880, %v44, 16.0
    %3886 = vset.pattern.permute.xlu0 0
    %3887 = vperm.xlu0 %3886, %v3881
    %v3888 = vpop.permute.xlu0 %3887
    %3891 = vset.pattern.permute.xlu0 0
    %3892 = vperm.xlu0 %3891, %v3882
    %v3893 = vpop.permute.xlu0 %3892
    %3896 = vset.pattern.permute.xlu0 0
    %3897 = vperm.xlu0 %3896, %v3883
    %v3898 = vpop.permute.xlu0 %3897
    %3901 = vset.pattern.permute.xlu0 0
    %3902 = vperm.xlu0 %3901, %v3884
    %v3903 = vpop.permute.xlu0 %3902
    %v3905 = vsel %vm212, %v3888, 16.0
    %v3906 = vsel %vm213, %v3893, 16.0
    %v3907 = vsel %vm214, %v3898, 16.0
    %v3908 = vsel %vm215, %v3903, 16.0
    %v3909 = vsel %vm220, %v3905, inf
    %v3910 = vsel %vm220, %v3906, inf
    %v3911 = vsel %vm220, %v3907, inf
    %v3912 = vsel %vm220, %v3908, inf
    %v3913 = vmin.f32 %v3909, %v3910
    %v3914 = vmin.f32 %v3911, %v3912
    %v3915 = vmin.f32 %v3913, %v3914
    %v3916 = vrot.slane %v3915, 4
    %v3917 = vmin.f32 %v3915, %v3916
    %v3918 = vrot.slane %v3917, 2
    %v3919 = vmin.f32 %v3917, %v3918
    %v3920 = vrot.slane %v3919, 1
    %v3921 = vmin.f32 %v3919, %v3920
    %v3922 = vmul.f32 %v37, %v3921
    %v3923 = vmul.f32 %v38, %v3921
    %v3924 = vmul.f32 %v39, %v3921
    %v3925 = vmul.f32 %v40, %v3921
    %v3926 = vsel %vm220, %v3922, 0.0
    %3927 = vadd.xlane.f32.xlu0 %v3926
    %v3928 = vpop.xlane.xlu0 %3927
    %v3929 = vsel %vm220, %v3923, 0.0
    %3930 = vadd.xlane.f32.xlu0 %v3929
    %v3931 = vpop.xlane.xlu0 %3930
    %v3932 = vsel %vm220, %v3924, 0.0
    %3933 = vadd.xlane.f32.xlu0 %v3932
    %v3934 = vpop.xlane.xlu0 %3933
    %v3935 = vsel %vm220, %v3925, 0.0
    %3936 = vadd.xlane.f32.xlu0 %v3935
    %v3937 = vpop.xlane.xlu0 %3936
    %vm3938 = vcmp.eq.f32.partialorder %v41, %v3928
    %vm3939 = vcmp.eq.f32.partialorder %v42, %v3931
    %vm3940 = vcmp.eq.f32.partialorder %v43, %v3934
    %vm3941 = vcmp.eq.f32.partialorder %v44, %v3937
    %v3942 = vsel %vm3938, 1, 0
    %v3943 = vsel %vm3939, 1, 0
    %v3944 = vsel %vm3940, 1, 0
    %v3945 = vsel %vm3941, 1, 0
    %v3946 = vcvt.s32.f32 %v3942
    %v3947 = vcvt.s32.f32 %v3943
    %v3948 = vcvt.s32.f32 %v3944
    %v3949 = vcvt.s32.f32 %v3945
    %3951 = vset.pattern.permute.xlu0 0
    %3952 = vperm.xlu0 %3951, %v3946
    %v3953 = vpop.permute.xlu0 %3952
    %3956 = vset.pattern.permute.xlu0 0
    %3957 = vperm.xlu0 %3956, %v3947
    %v3958 = vpop.permute.xlu0 %3957
    %3961 = vset.pattern.permute.xlu0 0
    %3962 = vperm.xlu0 %3961, %v3948
    %v3963 = vpop.permute.xlu0 %3962
    %3966 = vset.pattern.permute.xlu0 0
    %3967 = vperm.xlu0 %3966, %v3949
    %v3968 = vpop.permute.xlu0 %3967
    %v3970 = vmul.f32 %v3953, %v25
    %v3971 = vmul.f32 %v3958, %v26
    %v3972 = vmul.f32 %v3963, %v27
    %v3973 = vmul.f32 %v3968, %v28
    %3974 = vmatprep.subr.mxu0 0.0
    %3975 = vmatpush1.msra.mxu0 0.0
    %3976 = vmatprep.subr.mxu0 0.0
    %3977 = vmatpush1.msra.mxu0 0.0
    %3978 = vmatprep.subr.mxu0 0.0
    %3979 = vmatpush1.msra.mxu0 0.0
    %3980 = vmatprep.subr.mxu0 0.0
    %3981 = vmatpush1.msra.mxu0 0.0
    %3982 = vmatprep.subr.mxu0 0.0
    %3983 = vmatpush1.msra.mxu0 0.0
    %3984 = vmatprep.subr.mxu0 0.0
    %3985 = vmatpush1.msra.mxu0 0.0
    %3986 = vmatprep.subr.mxu0 0.0
    %3987 = vmatpush1.msra.mxu0 0.0
    %3988 = vmatprep.subr.mxu0 0.0
    %3989 = vmatpush1.msra.mxu0 0.0
    %3990 = vmatprep.subr.mxu0 0.0
    %3991 = vmatpush1.msra.mxu0 0.0
    %3992 = vmatprep.subr.mxu0 0.0
    %3993 = vmatpush1.msra.mxu0 0.0
    %3994 = vmatprep.subr.mxu0 0.0
    %3995 = vmatpush1.msra.mxu0 0.0
    %3996 = vmatprep.subr.mxu0 0.0
    %3997 = vmatpush1.msra.mxu0 0.0
    %3998 = vmatprep.subr.mxu0 0.0
    %3999 = vmatpush1.msra.mxu0 %v3973
    %4000 = vmatprep.subr.mxu0 0.0
    %4001 = vmatpush1.msra.mxu0 %v3972
    %4002 = vmatprep.subr.mxu0 0.0
    %4003 = vmatpush1.msra.mxu0 %v3971
    %4004 = vmatprep.subr.mxu0 0.0
    %4005 = vmatpush1.msra.mxu0 %v3970
    %4006 = vmatprep.subr.mxu0 0.0
    %4007 = vmatpush2.msra.mxu0 0.0
    %4008 = vmatprep.subr.mxu0 0.0
    %4009 = vmatpush2.msra.mxu0 0.0
    %4010 = vmatprep.subr.mxu0 0.0
    %4011 = vmatpush2.msra.mxu0 0.0
    %4012 = vmatprep.subr.mxu0 0.0
    %4013 = vmatpush2.msra.mxu0 0.0
    %4014 = vmatprep.subr.mxu0 0.0
    %4015 = vmatpush2.msra.mxu0 0.0
    %4016 = vmatprep.subr.mxu0 0.0
    %4017 = vmatpush2.msra.mxu0 0.0
    %4018 = vmatprep.subr.mxu0 0.0
    %4019 = vmatpush2.msra.mxu0 0.0
    %4020 = vmatprep.subr.mxu0 0.0
    %4021 = vmatpush2.msra.mxu0 0.0
    %4022 = vmatprep.subr.mxu0 0.0
    %4023 = vmatpush2.msra.mxu0 0.0
    %4024 = vmatprep.subr.mxu0 0.0
    %4025 = vmatpush2.msra.mxu0 0.0
    %4026 = vmatprep.subr.mxu0 0.0
    %4027 = vmatpush2.msra.mxu0 0.0
    %4028 = vmatprep.subr.mxu0 0.0
    %4029 = vmatpush2.msra.mxu0 0.0
    %4030 = vmatprep.subr.mxu0 0.0
    %4031 = vmatpush2.msra.mxu0 0.0
    %4032 = vmatprep.subr.mxu0 0.0
    %4033 = vmatpush2.msra.mxu0 0.0
    %4034 = vmatprep.subr.mxu0 0.0
    %4035 = vmatpush2.msra.mxu0 0.0
    %4036 = vmatprep.subr.mxu0 0.0
    %4037 = vmatpush2.msra.mxu0 0.0
    %4038 = vmatprep.mubr.f32.mxu0 0.0
    %4039 = vmatmul.mubr.f32.gmra.mxu0 %v83
    %v4040 = vpop.f32.mrf.mxu0
    %v4041 = vadd.f32 0.0, %v4040
    %v4042 = vpop.f32.mrf.mxu0
    %4043 = vmatprep.mubr.f32.mxu0 0.0
    %4044 = vmatmul.mubr.f32.gmra.mxu0 %v86
    %v4045 = vpop.f32.mrf.mxu0
    %v4046 = vadd.f32 0.0, %v4045
    %v4047 = vpop.f32.mrf.mxu0
    %4048 = vmatprep.mubr.f32.mxu0 0.0
    %4049 = vmatmul.mubr.f32.gmra.mxu0 %v89
    %v4050 = vpop.f32.mrf.mxu0
    %v4051 = vadd.f32 0.0, %v4050
    %v4052 = vpop.f32.mrf.mxu0
    %4053 = vmatprep.mubr.f32.mxu0 0.0
    %4054 = vmatmul.mubr.f32.gmra.mxu0 %v92
    %v4055 = vpop.f32.mrf.mxu0
    %v4056 = vadd.f32 0.0, %v4055
    %v4057 = vpop.f32.mrf.mxu0
    %4058 = vdwg.mxu0
    %vm4059 = vcmp.eq.f32.partialorder %v41, 14.0
    %vm4060 = vcmp.eq.f32.partialorder %v42, 14.0
    %vm4061 = vcmp.eq.f32.partialorder %v43, 14.0
    %vm4062 = vcmp.eq.f32.partialorder %v44, 14.0
    %v4063 = vsel %vm4059, 1, 0
    %v4064 = vsel %vm4060, 1, 0
    %v4065 = vsel %vm4061, 1, 0
    %v4066 = vsel %vm4062, 1, 0
    %v4067 = vcvt.s32.f32 %v4063
    %v4068 = vcvt.s32.f32 %v4064
    %v4069 = vcvt.s32.f32 %v4065
    %v4070 = vcvt.s32.f32 %v4066
    %4072 = vset.pattern.permute.xlu0 0
    %4073 = vperm.xlu0 %4072, %v4067
    %v4074 = vpop.permute.xlu0 %4073
    %4077 = vset.pattern.permute.xlu0 0
    %4078 = vperm.xlu0 %4077, %v4068
    %v4079 = vpop.permute.xlu0 %4078
    %4082 = vset.pattern.permute.xlu0 0
    %4083 = vperm.xlu0 %4082, %v4069
    %v4084 = vpop.permute.xlu0 %4083
    %4087 = vset.pattern.permute.xlu0 0
    %4088 = vperm.xlu0 %4087, %v4070
    %v4089 = vpop.permute.xlu0 %4088
    %v4091 = vmul.f32 %v4074, %v4041
    %v4092 = vmul.f32 %v4079, %v4046
    %v4093 = vmul.f32 %v4084, %v4051
    %v4094 = vmul.f32 %v4089, %v4056
    %v4095 = vadd.f32 %v3816, %v4091
    %v4096 = vadd.f32 %v3817, %v4092
    %v4097 = vadd.f32 %v3818, %v4093
    %v4098 = vadd.f32 %v3819, %v4094
    %v4099 = vsub.f32 %v25, %v4041
    %v4100 = vsub.f32 %v26, %v4046
    %v4101 = vsub.f32 %v27, %v4051
    %v4102 = vsub.f32 %v28, %v4056
    %v4103 = vmul.f32 %v4099, %v4099
    %v4104 = vmul.f32 %v4100, %v4100
    %v4105 = vmul.f32 %v4101, %v4101
    %v4106 = vmul.f32 %v4102, %v4102
    %v4107 = vsel %vm195, %v4103, 0.0
    %4108 = vadd.xlane.f32.xlu0 %v4107
    %v4109 = vpop.xlane.xlu0 %4108
    %v4110 = vsel %vm195, %v4104, 0.0
    %4111 = vadd.xlane.f32.xlu0 %v4110
    %v4112 = vpop.xlane.xlu0 %4111
    %v4113 = vsel %vm195, %v4105, 0.0
    %4114 = vadd.xlane.f32.xlu0 %v4113
    %v4115 = vpop.xlane.xlu0 %4114
    %v4116 = vsel %vm195, %v4106, 0.0
    %4117 = vadd.xlane.f32.xlu0 %v4116
    %v4118 = vpop.xlane.xlu0 %4117
    %v4119 = vmin.f32 %v3840, %v4109
    %v4120 = vmin.f32 %v3841, %v4112
    %v4121 = vmin.f32 %v3842, %v4115
    %v4122 = vmin.f32 %v3843, %v4118
    %v4123 = vsel %vm212, %v4119, -1e+30
    %v4124 = vsel %vm213, %v4120, -1e+30
    %v4125 = vsel %vm214, %v4121, -1e+30
    %v4126 = vsel %vm215, %v4122, -1e+30
    %v4127 = vsel %vm220, %v4123, -inf
    %v4128 = vsel %vm220, %v4124, -inf
    %v4129 = vsel %vm220, %v4125, -inf
    %v4130 = vsel %vm220, %v4126, -inf
    %v4131 = vmax.f32 %v4127, %v4128
    %v4132 = vmax.f32 %v4129, %v4130
    %v4133 = vmax.f32 %v4131, %v4132
    %v4134 = vrot.slane %v4133, 4
    %v4135 = vmax.f32 %v4133, %v4134
    %v4136 = vrot.slane %v4135, 2
    %v4137 = vmax.f32 %v4135, %v4136
    %v4138 = vrot.slane %v4137, 1
    %v4139 = vmax.f32 %v4137, %v4138
    %v4140 = vmul.f32 %v37, %v4139
    %v4141 = vmul.f32 %v38, %v4139
    %v4142 = vmul.f32 %v39, %v4139
    %v4143 = vmul.f32 %v40, %v4139
    %v4144 = vsel %vm220, %v4140, 0.0
    %4145 = vadd.xlane.f32.xlu0 %v4144
    %v4146 = vpop.xlane.xlu0 %4145
    %v4147 = vsel %vm220, %v4141, 0.0
    %4148 = vadd.xlane.f32.xlu0 %v4147
    %v4149 = vpop.xlane.xlu0 %4148
    %v4150 = vsel %vm220, %v4142, 0.0
    %4151 = vadd.xlane.f32.xlu0 %v4150
    %v4152 = vpop.xlane.xlu0 %4151
    %v4153 = vsel %vm220, %v4143, 0.0
    %4154 = vadd.xlane.f32.xlu0 %v4153
    %v4155 = vpop.xlane.xlu0 %4154
    %vm4156 = vcmp.ge.f32.partialorder %v4119, %v4146
    %vm4157 = vcmp.ge.f32.partialorder %v4120, %v4149
    %vm4158 = vcmp.ge.f32.partialorder %v4121, %v4152
    %vm4159 = vcmp.ge.f32.partialorder %v4122, %v4155
    %v4160 = vsel %vm4156, %v41, 16.0
    %v4161 = vsel %vm4157, %v42, 16.0
    %v4162 = vsel %vm4158, %v43, 16.0
    %v4163 = vsel %vm4159, %v44, 16.0
    %4165 = vset.pattern.permute.xlu0 0
    %4166 = vperm.xlu0 %4165, %v4160
    %v4167 = vpop.permute.xlu0 %4166
    %4170 = vset.pattern.permute.xlu0 0
    %4171 = vperm.xlu0 %4170, %v4161
    %v4172 = vpop.permute.xlu0 %4171
    %4175 = vset.pattern.permute.xlu0 0
    %4176 = vperm.xlu0 %4175, %v4162
    %v4177 = vpop.permute.xlu0 %4176
    %4180 = vset.pattern.permute.xlu0 0
    %4181 = vperm.xlu0 %4180, %v4163
    %v4182 = vpop.permute.xlu0 %4181
    %v4184 = vsel %vm212, %v4167, 16.0
    %v4185 = vsel %vm213, %v4172, 16.0
    %v4186 = vsel %vm214, %v4177, 16.0
    %v4187 = vsel %vm215, %v4182, 16.0
    %v4188 = vsel %vm220, %v4184, inf
    %v4189 = vsel %vm220, %v4185, inf
    %v4190 = vsel %vm220, %v4186, inf
    %v4191 = vsel %vm220, %v4187, inf
    %v4192 = vmin.f32 %v4188, %v4189
    %v4193 = vmin.f32 %v4190, %v4191
    %v4194 = vmin.f32 %v4192, %v4193
    %v4195 = vrot.slane %v4194, 4
    %v4196 = vmin.f32 %v4194, %v4195
    %v4197 = vrot.slane %v4196, 2
    %v4198 = vmin.f32 %v4196, %v4197
    %v4199 = vrot.slane %v4198, 1
    %v4200 = vmin.f32 %v4198, %v4199
    %v4201 = vmul.f32 %v37, %v4200
    %v4202 = vmul.f32 %v38, %v4200
    %v4203 = vmul.f32 %v39, %v4200
    %v4204 = vmul.f32 %v40, %v4200
    %v4205 = vsel %vm220, %v4201, 0.0
    %4206 = vadd.xlane.f32.xlu0 %v4205
    %v4207 = vpop.xlane.xlu0 %4206
    %v4208 = vsel %vm220, %v4202, 0.0
    %4209 = vadd.xlane.f32.xlu0 %v4208
    %v4210 = vpop.xlane.xlu0 %4209
    %v4211 = vsel %vm220, %v4203, 0.0
    %4212 = vadd.xlane.f32.xlu0 %v4211
    %v4213 = vpop.xlane.xlu0 %4212
    %v4214 = vsel %vm220, %v4204, 0.0
    %4215 = vadd.xlane.f32.xlu0 %v4214
    %v4216 = vpop.xlane.xlu0 %4215
    %vm4217 = vcmp.eq.f32.partialorder %v41, %v4207
    %vm4218 = vcmp.eq.f32.partialorder %v42, %v4210
    %vm4219 = vcmp.eq.f32.partialorder %v43, %v4213
    %vm4220 = vcmp.eq.f32.partialorder %v44, %v4216
    %v4221 = vsel %vm4217, 1, 0
    %v4222 = vsel %vm4218, 1, 0
    %v4223 = vsel %vm4219, 1, 0
    %v4224 = vsel %vm4220, 1, 0
    %v4225 = vcvt.s32.f32 %v4221
    %v4226 = vcvt.s32.f32 %v4222
    %v4227 = vcvt.s32.f32 %v4223
    %v4228 = vcvt.s32.f32 %v4224
    %4230 = vset.pattern.permute.xlu0 0
    %4231 = vperm.xlu0 %4230, %v4225
    %v4232 = vpop.permute.xlu0 %4231
    %4235 = vset.pattern.permute.xlu0 0
    %4236 = vperm.xlu0 %4235, %v4226
    %v4237 = vpop.permute.xlu0 %4236
    %4240 = vset.pattern.permute.xlu0 0
    %4241 = vperm.xlu0 %4240, %v4227
    %v4242 = vpop.permute.xlu0 %4241
    %4245 = vset.pattern.permute.xlu0 0
    %4246 = vperm.xlu0 %4245, %v4228
    %v4247 = vpop.permute.xlu0 %4246
    %v4249 = vmul.f32 %v4232, %v25
    %v4250 = vmul.f32 %v4237, %v26
    %v4251 = vmul.f32 %v4242, %v27
    %v4252 = vmul.f32 %v4247, %v28
    %4253 = vmatprep.subr.mxu0 0.0
    %4254 = vmatpush1.msra.mxu0 0.0
    %4255 = vmatprep.subr.mxu0 0.0
    %4256 = vmatpush1.msra.mxu0 0.0
    %4257 = vmatprep.subr.mxu0 0.0
    %4258 = vmatpush1.msra.mxu0 0.0
    %4259 = vmatprep.subr.mxu0 0.0
    %4260 = vmatpush1.msra.mxu0 0.0
    %4261 = vmatprep.subr.mxu0 0.0
    %4262 = vmatpush1.msra.mxu0 0.0
    %4263 = vmatprep.subr.mxu0 0.0
    %4264 = vmatpush1.msra.mxu0 0.0
    %4265 = vmatprep.subr.mxu0 0.0
    %4266 = vmatpush1.msra.mxu0 0.0
    %4267 = vmatprep.subr.mxu0 0.0
    %4268 = vmatpush1.msra.mxu0 0.0
    %4269 = vmatprep.subr.mxu0 0.0
    %4270 = vmatpush1.msra.mxu0 0.0
    %4271 = vmatprep.subr.mxu0 0.0
    %4272 = vmatpush1.msra.mxu0 0.0
    %4273 = vmatprep.subr.mxu0 0.0
    %4274 = vmatpush1.msra.mxu0 0.0
    %4275 = vmatprep.subr.mxu0 0.0
    %4276 = vmatpush1.msra.mxu0 0.0
    %4277 = vmatprep.subr.mxu0 0.0
    %4278 = vmatpush1.msra.mxu0 %v4252
    %4279 = vmatprep.subr.mxu0 0.0
    %4280 = vmatpush1.msra.mxu0 %v4251
    %4281 = vmatprep.subr.mxu0 0.0
    %4282 = vmatpush1.msra.mxu0 %v4250
    %4283 = vmatprep.subr.mxu0 0.0
    %4284 = vmatpush1.msra.mxu0 %v4249
    %4285 = vmatprep.subr.mxu0 0.0
    %4286 = vmatpush2.msra.mxu0 0.0
    %4287 = vmatprep.subr.mxu0 0.0
    %4288 = vmatpush2.msra.mxu0 0.0
    %4289 = vmatprep.subr.mxu0 0.0
    %4290 = vmatpush2.msra.mxu0 0.0
    %4291 = vmatprep.subr.mxu0 0.0
    %4292 = vmatpush2.msra.mxu0 0.0
    %4293 = vmatprep.subr.mxu0 0.0
    %4294 = vmatpush2.msra.mxu0 0.0
    %4295 = vmatprep.subr.mxu0 0.0
    %4296 = vmatpush2.msra.mxu0 0.0
    %4297 = vmatprep.subr.mxu0 0.0
    %4298 = vmatpush2.msra.mxu0 0.0
    %4299 = vmatprep.subr.mxu0 0.0
    %4300 = vmatpush2.msra.mxu0 0.0
    %4301 = vmatprep.subr.mxu0 0.0
    %4302 = vmatpush2.msra.mxu0 0.0
    %4303 = vmatprep.subr.mxu0 0.0
    %4304 = vmatpush2.msra.mxu0 0.0
    %4305 = vmatprep.subr.mxu0 0.0
    %4306 = vmatpush2.msra.mxu0 0.0
    %4307 = vmatprep.subr.mxu0 0.0
    %4308 = vmatpush2.msra.mxu0 0.0
    %4309 = vmatprep.subr.mxu0 0.0
    %4310 = vmatpush2.msra.mxu0 0.0
    %4311 = vmatprep.subr.mxu0 0.0
    %4312 = vmatpush2.msra.mxu0 0.0
    %4313 = vmatprep.subr.mxu0 0.0
    %4314 = vmatpush2.msra.mxu0 0.0
    %4315 = vmatprep.subr.mxu0 0.0
    %4316 = vmatpush2.msra.mxu0 0.0
    %4317 = vmatprep.mubr.f32.mxu0 0.0
    %4318 = vmatmul.mubr.f32.gmra.mxu0 %v83
    %v4319 = vpop.f32.mrf.mxu0
    %v4320 = vadd.f32 0.0, %v4319
    %v4321 = vpop.f32.mrf.mxu0
    %4322 = vmatprep.mubr.f32.mxu0 0.0
    %4323 = vmatmul.mubr.f32.gmra.mxu0 %v86
    %v4324 = vpop.f32.mrf.mxu0
    %v4325 = vadd.f32 0.0, %v4324
    %v4326 = vpop.f32.mrf.mxu0
    %4327 = vmatprep.mubr.f32.mxu0 0.0
    %4328 = vmatmul.mubr.f32.gmra.mxu0 %v89
    %v4329 = vpop.f32.mrf.mxu0
    %v4330 = vadd.f32 0.0, %v4329
    %v4331 = vpop.f32.mrf.mxu0
    %4332 = vmatprep.mubr.f32.mxu0 0.0
    %4333 = vmatmul.mubr.f32.gmra.mxu0 %v92
    %v4334 = vpop.f32.mrf.mxu0
    %v4335 = vadd.f32 0.0, %v4334
    %v4336 = vpop.f32.mrf.mxu0
    %4337 = vdwg.mxu0
    %vm4338 = vcmp.eq.f32.partialorder %v41, 15.0
    %vm4339 = vcmp.eq.f32.partialorder %v42, 15.0
    %vm4340 = vcmp.eq.f32.partialorder %v43, 15.0
    %vm4341 = vcmp.eq.f32.partialorder %v44, 15.0
    %v4342 = vsel %vm4338, 1, 0
    %v4343 = vsel %vm4339, 1, 0
    %v4344 = vsel %vm4340, 1, 0
    %v4345 = vsel %vm4341, 1, 0
    %v4346 = vcvt.s32.f32 %v4342
    %v4347 = vcvt.s32.f32 %v4343
    %v4348 = vcvt.s32.f32 %v4344
    %v4349 = vcvt.s32.f32 %v4345
    %4351 = vset.pattern.permute.xlu0 0
    %4352 = vperm.xlu0 %4351, %v4346
    %v4353 = vpop.permute.xlu0 %4352
    %4356 = vset.pattern.permute.xlu0 0
    %4357 = vperm.xlu0 %4356, %v4347
    %v4358 = vpop.permute.xlu0 %4357
    %4361 = vset.pattern.permute.xlu0 0
    %4362 = vperm.xlu0 %4361, %v4348
    %v4363 = vpop.permute.xlu0 %4362
    %4366 = vset.pattern.permute.xlu0 0
    %4367 = vperm.xlu0 %4366, %v4349
    %v4368 = vpop.permute.xlu0 %4367
    %v4370 = vmul.f32 %v4353, %v4320
    %v4371 = vmul.f32 %v4358, %v4325
    %v4372 = vmul.f32 %v4363, %v4330
    %v4373 = vmul.f32 %v4368, %v4335
    %v4374 = vadd.f32 %v4095, %v4370
    %v4375 = vadd.f32 %v4096, %v4371
    %v4376 = vadd.f32 %v4097, %v4372
    %v4377 = vadd.f32 %v4098, %v4373
    %v4378 = vld [vmem:[#allocation2 + $0x30] sm:$0x7]
    %v4380 = vsel %vm195, %v4374, 0
    %v4383 = vsel %vm195, %v4375, 0
    %v4386 = vsel %vm195, %v4376, 0
    %v4389 = vsel %vm195, %v4377, 0
    %vm4391 = vcmask 1042432
    %v4393 = vsel %vm4391, %v4378, 0
    %4395 = vmatprep.subr.mxu0 0.0
    %4396 = vmatpush1.msra.mxu0 0.0
    %4397 = vmatprep.subr.mxu0 0.0
    %4398 = vmatpush1.msra.mxu0 0.0
    %4399 = vmatprep.subr.mxu0 0.0
    %4400 = vmatpush1.msra.mxu0 0.0
    %4401 = vmatprep.subr.mxu0 0.0
    %4402 = vmatpush1.msra.mxu0 0.0
    %4403 = vmatprep.subr.mxu0 0.0
    %4404 = vmatpush1.msra.mxu0 0.0
    %4405 = vmatprep.subr.mxu0 0.0
    %4406 = vmatpush1.msra.mxu0 0.0
    %4407 = vmatprep.subr.mxu0 0.0
    %4408 = vmatpush1.msra.mxu0 0.0
    %4409 = vmatprep.subr.mxu0 0.0
    %4410 = vmatpush1.msra.mxu0 0.0
    %4411 = vmatprep.subr.mxu0 0.0
    %4412 = vmatpush1.msra.mxu0 0.0
    %4413 = vmatprep.subr.mxu0 0.0
    %4414 = vmatpush1.msra.mxu0 0.0
    %4415 = vmatprep.subr.mxu0 0.0
    %4416 = vmatpush1.msra.mxu0 0.0
    %4417 = vmatprep.subr.mxu0 0.0
    %4418 = vmatpush1.msra.mxu0 0.0
    %4419 = vmatprep.subr.mxu0 0.0
    %4420 = vmatpush1.msra.mxu0 0.0
    %4421 = vmatprep.subr.mxu0 0.0
    %4422 = vmatpush1.msra.mxu0 0.0
    %4423 = vmatprep.subr.mxu0 0.0
    %4424 = vmatpush1.msra.mxu0 0.0
    %4425 = vmatprep.subr.mxu0 0.0
    %4426 = vmatpush1.msra.mxu0 %v4393
    %4427 = vmatprep.subr.mxu0 0.0
    %4428 = vmatpush2.msra.mxu0 0.0
    %4429 = vmatprep.subr.mxu0 0.0
    %4430 = vmatpush2.msra.mxu0 0.0
    %4431 = vmatprep.subr.mxu0 0.0
    %4432 = vmatpush2.msra.mxu0 0.0
    %4433 = vmatprep.subr.mxu0 0.0
    %4434 = vmatpush2.msra.mxu0 0.0
    %4435 = vmatprep.subr.mxu0 0.0
    %4436 = vmatpush2.msra.mxu0 0.0
    %4437 = vmatprep.subr.mxu0 0.0
    %4438 = vmatpush2.msra.mxu0 0.0
    %4439 = vmatprep.subr.mxu0 0.0
    %4440 = vmatpush2.msra.mxu0 0.0
    %4441 = vmatprep.subr.mxu0 0.0
    %4442 = vmatpush2.msra.mxu0 0.0
    %4443 = vmatprep.subr.mxu0 0.0
    %4444 = vmatpush2.msra.mxu0 0.0
    %4445 = vmatprep.subr.mxu0 0.0
    %4446 = vmatpush2.msra.mxu0 0.0
    %4447 = vmatprep.subr.mxu0 0.0
    %4448 = vmatpush2.msra.mxu0 0.0
    %4449 = vmatprep.subr.mxu0 0.0
    %4450 = vmatpush2.msra.mxu0 0.0
    %4451 = vmatprep.subr.mxu0 0.0
    %4452 = vmatpush2.msra.mxu0 0.0
    %4453 = vmatprep.subr.mxu0 0.0
    %4454 = vmatpush2.msra.mxu0 0.0
    %4455 = vmatprep.subr.mxu0 0.0
    %4456 = vmatpush2.msra.mxu0 0.0
    %4457 = vmatprep.subr.mxu0 0.0
    %4458 = vmatpush2.msra.mxu0 0.0
    %4459 = vmatprep.mubr.f32.mxu0 0.0
    %4460 = vmatmul.mubr.f32.gmra.mxu0 %v4380
    %v4461 = vpop.f32.mrf.mxu0
    %v4462 = vadd.f32 %v29, %v4461
    %v4463 = vpop.f32.mrf.mxu0
    %4464 = vmatprep.mubr.f32.mxu0 0.0
    %4465 = vmatmul.mubr.f32.gmra.mxu0 %v4383
    %v4466 = vpop.f32.mrf.mxu0
    %v4467 = vadd.f32 %v30, %v4466
    %v4468 = vpop.f32.mrf.mxu0
    %4469 = vmatprep.mubr.f32.mxu0 0.0
    %4470 = vmatmul.mubr.f32.gmra.mxu0 %v4386
    %v4471 = vpop.f32.mrf.mxu0
    %v4472 = vadd.f32 %v31, %v4471
    %v4473 = vpop.f32.mrf.mxu0
    %4474 = vmatprep.mubr.f32.mxu0 0.0
    %4475 = vmatmul.mubr.f32.gmra.mxu0 %v4389
    %v4476 = vpop.f32.mrf.mxu0
    %v4477 = vadd.f32 %v32, %v4476
    %v4478 = vpop.f32.mrf.mxu0
    %4479 = vdwg.mxu0
    %vm4480 = vcmask 64512
    %v4481 = vsel %vm4480, %v4462, 0.0
    %4482 = vadd.xlane.f32.xlu0 %v4481
    %v4483 = vpop.xlane.xlu0 %4482
    %v4484 = vsel %vm4480, %v4467, 0.0
    %4485 = vadd.xlane.f32.xlu0 %v4484
    %v4486 = vpop.xlane.xlu0 %4485
    %v4487 = vsel %vm4480, %v4472, 0.0
    %4488 = vadd.xlane.f32.xlu0 %v4487
    %v4489 = vpop.xlane.xlu0 %4488
    %v4490 = vsel %vm4480, %v4477, 0.0
    %4491 = vadd.xlane.f32.xlu0 %v4490
    %v4492 = vpop.xlane.xlu0 %4491
    %v4493 = vrcp.pop 8.0
    %v4494 = vmul.f32 %v4483, %v4493
    %v4495 = vmul.f32 %v4486, %v4493
    %v4496 = vmul.f32 %v4489, %v4493
    %v4497 = vmul.f32 %v4492, %v4493
    %v4498 = vsub.f32 %v4462, %v4494
    %v4499 = vsub.f32 %v4467, %v4495
    %v4500 = vsub.f32 %v4472, %v4496
    %v4501 = vsub.f32 %v4477, %v4497
    %v4502 = vmul.f32 %v4498, %v4498
    %v4503 = vmul.f32 %v4499, %v4499
    %v4504 = vmul.f32 %v4500, %v4500
    %v4505 = vmul.f32 %v4501, %v4501
    %v4506 = vsel %vm4480, %v4502, 0.0
    %4507 = vadd.xlane.f32.xlu0 %v4506
    %v4508 = vpop.xlane.xlu0 %4507
    %v4509 = vsel %vm4480, %v4503, 0.0
    %4510 = vadd.xlane.f32.xlu0 %v4509
    %v4511 = vpop.xlane.xlu0 %4510
    %v4512 = vsel %vm4480, %v4504, 0.0
    %4513 = vadd.xlane.f32.xlu0 %v4512
    %v4514 = vpop.xlane.xlu0 %4513
    %v4515 = vsel %vm4480, %v4505, 0.0
    %4516 = vadd.xlane.f32.xlu0 %v4515
    %v4517 = vpop.xlane.xlu0 %4516
    %v4518 = vmul.f32 %v4508, %v4493
    %v4519 = vmul.f32 %v4511, %v4493
    %v4520 = vmul.f32 %v4514, %v4493
    %v4521 = vmul.f32 %v4517, %v4493
    %v4522 = vadd.f32 %v4518, 1e-05
    %v4523 = vadd.f32 %v4519, 1e-05
    %v4524 = vadd.f32 %v4520, 1e-05
    %v4525 = vadd.f32 %v4521, 1e-05
    %v4526 = vrsqrt.pop %v4522
    %v4527 = vrsqrt.pop %v4523
    %v4528 = vrsqrt.pop %v4524
    %v4529 = vrsqrt.pop %v4525
    %v4530 = vmul.f32 %v4498, %v4526
    %v4531 = vmul.f32 %v4499, %v4527
    %v4532 = vmul.f32 %v4500, %v4528
    %v4533 = vmul.f32 %v4501, %v4529
    %v4534 = vld [vmem:[#allocation2 + $0x120] sm:$0x1]
    %v4535 = vlaneseq
    %v4536 = vshrl.u32 %v4535, 7
    %v4537 = vsub.s32 0, %v4536
    %v4538 = vrot.slane %v4534, %v4537
    %v4539 = vmul.f32 %v4530, %v4538
    %v4540 = vmul.f32 %v4531, %v4538
    %v4541 = vmul.f32 %v4532, %v4538
    %v4542 = vmul.f32 %v4533, %v4538
    %v4543 = vld [vmem:[#allocation2 + $0x128] sm:$0x1]
    %v4544 = vlaneseq
    %v4545 = vshrl.u32 %v4544, 7
    %v4546 = vsub.s32 0, %v4545
    %v4547 = vrot.slane %v4543, %v4546
    %v4548 = vadd.f32 %v4539, %v4547
    %v4549 = vadd.f32 %v4540, %v4547
    %v4550 = vadd.f32 %v4541, %v4547
    %v4551 = vadd.f32 %v4542, %v4547
    %v4552 = vld [vmem:[#allocation2 + $0x100] sm:$0xff]
    %v4553 = vld [vmem:[#allocation2 + $0x108] sm:$0x1]
    %v4554 = vlaneseq
    %v4555 = vshrl.u32 %v4554, 7
    %v4556 = vsub.s32 0, %v4555
    %v4557 = vrot.slane %v4553, %v4556
    %v4559 = vsel %vm4480, %v4548, 0
    %v4562 = vsel %vm4480, %v4549, 0
    %v4565 = vsel %vm4480, %v4550, 0
    %v4568 = vsel %vm4480, %v4551, 0
    %4570 = vmatprep.subr.mxu0 0.0
    %4571 = vmatpush1.msra.mxu0 0.0
    %4572 = vmatprep.subr.mxu0 0.0
    %4573 = vmatpush1.msra.mxu0 0.0
    %4574 = vmatprep.subr.mxu0 0.0
    %4575 = vmatpush1.msra.mxu0 0.0
    %4576 = vmatprep.subr.mxu0 0.0
    %4577 = vmatpush1.msra.mxu0 0.0
    %4578 = vmatprep.subr.mxu0 0.0
    %4579 = vmatpush1.msra.mxu0 0.0
    %4580 = vmatprep.subr.mxu0 0.0
    %4581 = vmatpush1.msra.mxu0 0.0
    %4582 = vmatprep.subr.mxu0 0.0
    %4583 = vmatpush1.msra.mxu0 0.0
    %4584 = vmatprep.subr.mxu0 0.0
    %4585 = vmatpush1.msra.mxu0 0.0
    %4586 = vmatprep.subr.mxu0 0.0
    %4587 = vmatpush1.msra.mxu0 0.0
    %4588 = vmatprep.subr.mxu0 0.0
    %4589 = vmatpush1.msra.mxu0 0.0
    %4590 = vmatprep.subr.mxu0 0.0
    %4591 = vmatpush1.msra.mxu0 0.0
    %4592 = vmatprep.subr.mxu0 0.0
    %4593 = vmatpush1.msra.mxu0 0.0
    %4594 = vmatprep.subr.mxu0 0.0
    %4595 = vmatpush1.msra.mxu0 0.0
    %4596 = vmatprep.subr.mxu0 0.0
    %4597 = vmatpush1.msra.mxu0 0.0
    %4598 = vmatprep.subr.mxu0 0.0
    %4599 = vmatpush1.msra.mxu0 0.0
    %4600 = vmatprep.subr.mxu0 0.0
    %4601 = vmatpush1.msra.mxu0 %v4552
    %4602 = vmatprep.subr.mxu0 0.0
    %4603 = vmatpush2.msra.mxu0 0.0
    %4604 = vmatprep.subr.mxu0 0.0
    %4605 = vmatpush2.msra.mxu0 0.0
    %4606 = vmatprep.subr.mxu0 0.0
    %4607 = vmatpush2.msra.mxu0 0.0
    %4608 = vmatprep.subr.mxu0 0.0
    %4609 = vmatpush2.msra.mxu0 0.0
    %4610 = vmatprep.subr.mxu0 0.0
    %4611 = vmatpush2.msra.mxu0 0.0
    %4612 = vmatprep.subr.mxu0 0.0
    %4613 = vmatpush2.msra.mxu0 0.0
    %4614 = vmatprep.subr.mxu0 0.0
    %4615 = vmatpush2.msra.mxu0 0.0
    %4616 = vmatprep.subr.mxu0 0.0
    %4617 = vmatpush2.msra.mxu0 0.0
    %4618 = vmatprep.subr.mxu0 0.0
    %4619 = vmatpush2.msra.mxu0 0.0
    %4620 = vmatprep.subr.mxu0 0.0
    %4621 = vmatpush2.msra.mxu0 0.0
    %4622 = vmatprep.subr.mxu0 0.0
    %4623 = vmatpush2.msra.mxu0 0.0
    %4624 = vmatprep.subr.mxu0 0.0
    %4625 = vmatpush2.msra.mxu0 0.0
    %4626 = vmatprep.subr.mxu0 0.0
    %4627 = vmatpush2.msra.mxu0 0.0
    %4628 = vmatprep.subr.mxu0 0.0
    %4629 = vmatpush2.msra.mxu0 0.0
    %4630 = vmatprep.subr.mxu0 0.0
    %4631 = vmatpush2.msra.mxu0 0.0
    %4632 = vmatprep.subr.mxu0 0.0
    %4633 = vmatpush2.msra.mxu0 0.0
    %4634 = vmatprep.mubr.f32.mxu0 0.0
    %4635 = vmatmul.mubr.f32.gmra.mxu0 %v4559
    %v4636 = vpop.f32.mrf.mxu0
    %v4637 = vadd.f32 %v4557, %v4636
    %v4638 = vpop.f32.mrf.mxu0
    %4639 = vmatprep.mubr.f32.mxu0 0.0
    %4640 = vmatmul.mubr.f32.gmra.mxu0 %v4562
    %v4641 = vpop.f32.mrf.mxu0
    %v4642 = vadd.f32 %v4557, %v4641
    %v4643 = vpop.f32.mrf.mxu0
    %4644 = vmatprep.mubr.f32.mxu0 0.0
    %4645 = vmatmul.mubr.f32.gmra.mxu0 %v4565
    %v4646 = vpop.f32.mrf.mxu0
    %v4647 = vadd.f32 %v4557, %v4646
    %v4648 = vpop.f32.mrf.mxu0
    %4649 = vmatprep.mubr.f32.mxu0 0.0
    %4650 = vmatmul.mubr.f32.gmra.mxu0 %v4568
    %v4651 = vpop.f32.mrf.mxu0
    %v4652 = vadd.f32 %v4557, %v4651
    %v4653 = vpop.f32.mrf.mxu0
    %4654 = vdwg.mxu0
    %4655 = vmatprep.subr.mxu0 0.0
    %4656 = vmatpush1.msra.mxu0 0.0
    %4657 = vmatprep.subr.mxu0 0.0
    %4658 = vmatpush1.msra.mxu0 0.0
    %4659 = vmatprep.subr.mxu0 0.0
    %4660 = vmatpush1.msra.mxu0 0.0
    %4661 = vmatprep.subr.mxu0 0.0
    %4662 = vmatpush1.msra.mxu0 0.0
    %4663 = vmatprep.subr.mxu0 0.0
    %4664 = vmatpush1.msra.mxu0 0.0
    %4665 = vmatprep.subr.mxu0 0.0
    %4666 = vmatpush1.msra.mxu0 0.0
    %4667 = vmatprep.subr.mxu0 0.0
    %4668 = vmatpush1.msra.mxu0 0.0
    %4669 = vmatprep.subr.mxu0 0.0
    %4670 = vmatpush1.msra.mxu0 0.0
    %4671 = vmatprep.subr.mxu0 0.0
    %4672 = vmatpush1.msra.mxu0 0.0
    %4673 = vmatprep.subr.mxu0 0.0
    %4674 = vmatpush1.msra.mxu0 0.0
    %4675 = vmatprep.subr.mxu0 0.0
    %4676 = vmatpush1.msra.mxu0 0.0
    %4677 = vmatprep.subr.mxu0 0.0
    %4678 = vmatpush1.msra.mxu0 0.0
    %4679 = vmatprep.subr.mxu0 0.0
    %4680 = vmatpush1.msra.mxu0 %v4652
    %4681 = vmatprep.subr.mxu0 0.0
    %4682 = vmatpush1.msra.mxu0 %v4647
    %4683 = vmatprep.subr.mxu0 0.0
    %4684 = vmatpush1.msra.mxu0 %v4642
    %4685 = vmatprep.subr.mxu0 0.0
    %4686 = vmatpush1.msra.mxu0 %v4637
    %4687 = vmatprep.subr.mxu0 0.0
    %4688 = vmatpush2.msra.mxu0 0.0
    %4689 = vmatprep.subr.mxu0 0.0
    %4690 = vmatpush2.msra.mxu0 0.0
    %4691 = vmatprep.subr.mxu0 0.0
    %4692 = vmatpush2.msra.mxu0 0.0
    %4693 = vmatprep.subr.mxu0 0.0
    %4694 = vmatpush2.msra.mxu0 0.0
    %4695 = vmatprep.subr.mxu0 0.0
    %4696 = vmatpush2.msra.mxu0 0.0
    %4697 = vmatprep.subr.mxu0 0.0
    %4698 = vmatpush2.msra.mxu0 0.0
    %4699 = vmatprep.subr.mxu0 0.0
    %4700 = vmatpush2.msra.mxu0 0.0
    %4701 = vmatprep.subr.mxu0 0.0
    %4702 = vmatpush2.msra.mxu0 0.0
    %4703 = vmatprep.subr.mxu0 0.0
    %4704 = vmatpush2.msra.mxu0 0.0
    %4705 = vmatprep.subr.mxu0 0.0
    %4706 = vmatpush2.msra.mxu0 0.0
    %4707 = vmatprep.subr.mxu0 0.0
    %4708 = vmatpush2.msra.mxu0 0.0
    %4709 = vmatprep.subr.mxu0 0.0
    %4710 = vmatpush2.msra.mxu0 0.0
    %4711 = vmatprep.subr.mxu0 0.0
    %4712 = vmatpush2.msra.mxu0 0.0
    %4713 = vmatprep.subr.mxu0 0.0
    %4714 = vmatpush2.msra.mxu0 0.0
    %4715 = vmatprep.subr.mxu0 0.0
    %4716 = vmatpush2.msra.mxu0 0.0
    %4717 = vmatprep.subr.mxu0 0.0
    %4718 = vmatpush2.msra.mxu0 0.0
    %4719 = vmatprep.mubr.f32.mxu0 0.0
    %4720 = vmatmul.mubr.f32.gmra.mxu0 %v83
    %v4721 = vpop.f32.mrf.mxu0
    %v4722 = vadd.f32 0.0, %v4721
    %v4723 = vpop.f32.mrf.mxu0
    %4724 = vmatprep.mubr.f32.mxu0 0.0
    %4725 = vmatmul.mubr.f32.gmra.mxu0 %v86
    %v4726 = vpop.f32.mrf.mxu0
    %v4727 = vadd.f32 0.0, %v4726
    %v4728 = vpop.f32.mrf.mxu0
    %4729 = vmatprep.mubr.f32.mxu0 0.0
    %4730 = vmatmul.mubr.f32.gmra.mxu0 %v89
    %v4731 = vpop.f32.mrf.mxu0
    %v4732 = vadd.f32 0.0, %v4731
    %v4733 = vpop.f32.mrf.mxu0
    %4734 = vmatprep.mubr.f32.mxu0 0.0
    %4735 = vmatmul.mubr.f32.gmra.mxu0 %v92
    %v4736 = vpop.f32.mrf.mxu0
    %v4737 = vadd.f32 0.0, %v4736
    %v4738 = vpop.f32.mrf.mxu0
    %4739 = vdwg.mxu0
    %v4740 = vadd.f32 %v4462, %v4722
    %v4741 = vadd.f32 %v4467, %v4727
    %v4742 = vadd.f32 %v4472, %v4732
    %v4743 = vadd.f32 %v4477, %v4737
    %v4744 = vsel %vm4480, %v4740, 0.0
    %4745 = vadd.xlane.f32.xlu0 %v4744
    %v4746 = vpop.xlane.xlu0 %4745
    %v4747 = vsel %vm4480, %v4741, 0.0
    %4748 = vadd.xlane.f32.xlu0 %v4747
    %v4749 = vpop.xlane.xlu0 %4748
    %v4750 = vsel %vm4480, %v4742, 0.0
    %4751 = vadd.xlane.f32.xlu0 %v4750
    %v4752 = vpop.xlane.xlu0 %4751
    %v4753 = vsel %vm4480, %v4743, 0.0
    %4754 = vadd.xlane.f32.xlu0 %v4753
    %v4755 = vpop.xlane.xlu0 %4754
    %v4756 = vmul.f32 %v4746, %v4493
    %v4757 = vmul.f32 %v4749, %v4493
    %v4758 = vmul.f32 %v4752, %v4493
    %v4759 = vmul.f32 %v4755, %v4493
    %v4760 = vsub.f32 %v4740, %v4756
    %v4761 = vsub.f32 %v4741, %v4757
    %v4762 = vsub.f32 %v4742, %v4758
    %v4763 = vsub.f32 %v4743, %v4759
    %v4764 = vmul.f32 %v4760, %v4760
    %v4765 = vmul.f32 %v4761, %v4761
    %v4766 = vmul.f32 %v4762, %v4762
    %v4767 = vmul.f32 %v4763, %v4763
    %v4768 = vsel %vm4480, %v4764, 0.0
    %4769 = vadd.xlane.f32.xlu0 %v4768
    %v4770 = vpop.xlane.xlu0 %4769
    %v4771 = vsel %vm4480, %v4765, 0.0
    %4772 = vadd.xlane.f32.xlu0 %v4771
    %v4773 = vpop.xlane.xlu0 %4772
    %v4774 = vsel %vm4480, %v4766, 0.0
    %4775 = vadd.xlane.f32.xlu0 %v4774
    %v4776 = vpop.xlane.xlu0 %4775
    %v4777 = vsel %vm4480, %v4767, 0.0
    %4778 = vadd.xlane.f32.xlu0 %v4777
    %v4779 = vpop.xlane.xlu0 %4778
    %v4780 = vmul.f32 %v4770, %v4493
    %v4781 = vmul.f32 %v4773, %v4493
    %v4782 = vmul.f32 %v4776, %v4493
    %v4783 = vmul.f32 %v4779, %v4493
    %v4784 = vadd.f32 %v4780, 1e-05
    %v4785 = vadd.f32 %v4781, 1e-05
    %v4786 = vadd.f32 %v4782, 1e-05
    %v4787 = vadd.f32 %v4783, 1e-05
    %v4788 = vrsqrt.pop %v4784
    %v4789 = vrsqrt.pop %v4785
    %v4790 = vrsqrt.pop %v4786
    %v4791 = vrsqrt.pop %v4787
    %v4792 = vmul.f32 %v4760, %v4788
    %v4793 = vmul.f32 %v4761, %v4789
    %v4794 = vmul.f32 %v4762, %v4790
    %v4795 = vmul.f32 %v4763, %v4791
    %v4796 = vld [vmem:[#allocation2 + $0x130] sm:$0x1]
    %v4797 = vlaneseq
    %v4798 = vshrl.u32 %v4797, 7
    %v4799 = vsub.s32 0, %v4798
    %v4800 = vrot.slane %v4796, %v4799
    %v4801 = vmul.f32 %v4792, %v4800
    %v4802 = vmul.f32 %v4793, %v4800
    %v4803 = vmul.f32 %v4794, %v4800
    %v4804 = vmul.f32 %v4795, %v4800
    %v4805 = vld [vmem:[#allocation2 + $0x138] sm:$0x1]
    %v4806 = vlaneseq
    %v4807 = vshrl.u32 %v4806, 7
    %v4808 = vsub.s32 0, %v4807
    %v4809 = vrot.slane %v4805, %v4808
    %v4810 = vadd.f32 %v4801, %v4809
    %v4811 = vadd.f32 %v4802, %v4809
    %v4812 = vadd.f32 %v4803, %v4809
    %v4813 = vadd.f32 %v4804, %v4809
    %v4814 = vld [vmem:[#allocation2 + $0x110] sm:$0xff]
    %v4815 = vld [vmem:[#allocation2 + $0x118] sm:$0x1]
    %v4816 = vlaneseq
    %v4817 = vshrl.u32 %v4816, 7
    %v4818 = vsub.s32 0, %v4817
    %v4819 = vrot.slane %v4815, %v4818
    %v4821 = vsel %vm4480, %v4810, 0
    %v4824 = vsel %vm4480, %v4811, 0
    %v4827 = vsel %vm4480, %v4812, 0
    %v4830 = vsel %vm4480, %v4813, 0
    %4832 = vmatprep.subr.mxu0 0.0
    %4833 = vmatpush1.msra.mxu0 0.0
    %4834 = vmatprep.subr.mxu0 0.0
    %4835 = vmatpush1.msra.mxu0 0.0
    %4836 = vmatprep.subr.mxu0 0.0
    %4837 = vmatpush1.msra.mxu0 0.0
    %4838 = vmatprep.subr.mxu0 0.0
    %4839 = vmatpush1.msra.mxu0 0.0
    %4840 = vmatprep.subr.mxu0 0.0
    %4841 = vmatpush1.msra.mxu0 0.0
    %4842 = vmatprep.subr.mxu0 0.0
    %4843 = vmatpush1.msra.mxu0 0.0
    %4844 = vmatprep.subr.mxu0 0.0
    %4845 = vmatpush1.msra.mxu0 0.0
    %4846 = vmatprep.subr.mxu0 0.0
    %4847 = vmatpush1.msra.mxu0 0.0
    %4848 = vmatprep.subr.mxu0 0.0
    %4849 = vmatpush1.msra.mxu0 0.0
    %4850 = vmatprep.subr.mxu0 0.0
    %4851 = vmatpush1.msra.mxu0 0.0
    %4852 = vmatprep.subr.mxu0 0.0
    %4853 = vmatpush1.msra.mxu0 0.0
    %4854 = vmatprep.subr.mxu0 0.0
    %4855 = vmatpush1.msra.mxu0 0.0
    %4856 = vmatprep.subr.mxu0 0.0
    %4857 = vmatpush1.msra.mxu0 0.0
    %4858 = vmatprep.subr.mxu0 0.0
    %4859 = vmatpush1.msra.mxu0 0.0
    %4860 = vmatprep.subr.mxu0 0.0
    %4861 = vmatpush1.msra.mxu0 0.0
    %4862 = vmatprep.subr.mxu0 0.0
    %4863 = vmatpush1.msra.mxu0 %v4814
    %4864 = vmatprep.subr.mxu0 0.0
    %4865 = vmatpush2.msra.mxu0 0.0
    %4866 = vmatprep.subr.mxu0 0.0
    %4867 = vmatpush2.msra.mxu0 0.0
    %4868 = vmatprep.subr.mxu0 0.0
    %4869 = vmatpush2.msra.mxu0 0.0
    %4870 = vmatprep.subr.mxu0 0.0
    %4871 = vmatpush2.msra.mxu0 0.0
    %4872 = vmatprep.subr.mxu0 0.0
    %4873 = vmatpush2.msra.mxu0 0.0
    %4874 = vmatprep.subr.mxu0 0.0
    %4875 = vmatpush2.msra.mxu0 0.0
    %4876 = vmatprep.subr.mxu0 0.0
    %4877 = vmatpush2.msra.mxu0 0.0
    %4878 = vmatprep.subr.mxu0 0.0
    %4879 = vmatpush2.msra.mxu0 0.0
    %4880 = vmatprep.subr.mxu0 0.0
    %4881 = vmatpush2.msra.mxu0 0.0
    %4882 = vmatprep.subr.mxu0 0.0
    %4883 = vmatpush2.msra.mxu0 0.0
    %4884 = vmatprep.subr.mxu0 0.0
    %4885 = vmatpush2.msra.mxu0 0.0
    %4886 = vmatprep.subr.mxu0 0.0
    %4887 = vmatpush2.msra.mxu0 0.0
    %4888 = vmatprep.subr.mxu0 0.0
    %4889 = vmatpush2.msra.mxu0 0.0
    %4890 = vmatprep.subr.mxu0 0.0
    %4891 = vmatpush2.msra.mxu0 0.0
    %4892 = vmatprep.subr.mxu0 0.0
    %4893 = vmatpush2.msra.mxu0 0.0
    %4894 = vmatprep.subr.mxu0 0.0
    %4895 = vmatpush2.msra.mxu0 0.0
    %4896 = vmatprep.mubr.f32.mxu0 0.0
    %4897 = vmatmul.mubr.f32.gmra.mxu0 %v4821
    %v4898 = vpop.f32.mrf.mxu0
    %v4899 = vadd.f32 %v4819, %v4898
    %v4900 = vpop.f32.mrf.mxu0
    %4901 = vmatprep.mubr.f32.mxu0 0.0
    %4902 = vmatmul.mubr.f32.gmra.mxu0 %v4824
    %v4903 = vpop.f32.mrf.mxu0
    %v4904 = vadd.f32 %v4819, %v4903
    %v4905 = vpop.f32.mrf.mxu0
    %4906 = vmatprep.mubr.f32.mxu0 0.0
    %4907 = vmatmul.mubr.f32.gmra.mxu0 %v4827
    %v4908 = vpop.f32.mrf.mxu0
    %v4909 = vadd.f32 %v4819, %v4908
    %v4910 = vpop.f32.mrf.mxu0
    %4911 = vmatprep.mubr.f32.mxu0 0.0
    %4912 = vmatmul.mubr.f32.gmra.mxu0 %v4830
    %v4913 = vpop.f32.mrf.mxu0
    %v4914 = vadd.f32 %v4819, %v4913
    %v4915 = vpop.f32.mrf.mxu0
    %4916 = vdwg.mxu0
    %4917 = vmatprep.subr.mxu0 0.0
    %4918 = vmatpush1.msra.mxu0 0.0
    %4919 = vmatprep.subr.mxu0 0.0
    %4920 = vmatpush1.msra.mxu0 0.0
    %4921 = vmatprep.subr.mxu0 0.0
    %4922 = vmatpush1.msra.mxu0 0.0
    %4923 = vmatprep.subr.mxu0 0.0
    %4924 = vmatpush1.msra.mxu0 0.0
    %4925 = vmatprep.subr.mxu0 0.0
    %4926 = vmatpush1.msra.mxu0 0.0
    %4927 = vmatprep.subr.mxu0 0.0
    %4928 = vmatpush1.msra.mxu0 0.0
    %4929 = vmatprep.subr.mxu0 0.0
    %4930 = vmatpush1.msra.mxu0 0.0
    %4931 = vmatprep.subr.mxu0 0.0
    %4932 = vmatpush1.msra.mxu0 0.0
    %4933 = vmatprep.subr.mxu0 0.0
    %4934 = vmatpush1.msra.mxu0 0.0
    %4935 = vmatprep.subr.mxu0 0.0
    %4936 = vmatpush1.msra.mxu0 0.0
    %4937 = vmatprep.subr.mxu0 0.0
    %4938 = vmatpush1.msra.mxu0 0.0
    %4939 = vmatprep.subr.mxu0 0.0
    %4940 = vmatpush1.msra.mxu0 0.0
    %4941 = vmatprep.subr.mxu0 0.0
    %4942 = vmatpush1.msra.mxu0 %v4914
    %4943 = vmatprep.subr.mxu0 0.0
    %4944 = vmatpush1.msra.mxu0 %v4909
    %4945 = vmatprep.subr.mxu0 0.0
    %4946 = vmatpush1.msra.mxu0 %v4904
    %4947 = vmatprep.subr.mxu0 0.0
    %4948 = vmatpush1.msra.mxu0 %v4899
    %4949 = vmatprep.subr.mxu0 0.0
    %4950 = vmatpush2.msra.mxu0 0.0
    %4951 = vmatprep.subr.mxu0 0.0
    %4952 = vmatpush2.msra.mxu0 0.0
    %4953 = vmatprep.subr.mxu0 0.0
    %4954 = vmatpush2.msra.mxu0 0.0
    %4955 = vmatprep.subr.mxu0 0.0
    %4956 = vmatpush2.msra.mxu0 0.0
    %4957 = vmatprep.subr.mxu0 0.0
    %4958 = vmatpush2.msra.mxu0 0.0
    %4959 = vmatprep.subr.mxu0 0.0
    %4960 = vmatpush2.msra.mxu0 0.0
    %4961 = vmatprep.subr.mxu0 0.0
    %4962 = vmatpush2.msra.mxu0 0.0
    %4963 = vmatprep.subr.mxu0 0.0
    %4964 = vmatpush2.msra.mxu0 0.0
    %4965 = vmatprep.subr.mxu0 0.0
    %4966 = vmatpush2.msra.mxu0 0.0
    %4967 = vmatprep.subr.mxu0 0.0
    %4968 = vmatpush2.msra.mxu0 0.0
    %4969 = vmatprep.subr.mxu0 0.0
    %4970 = vmatpush2.msra.mxu0 0.0
    %4971 = vmatprep.subr.mxu0 0.0
    %4972 = vmatpush2.msra.mxu0 0.0
    %4973 = vmatprep.subr.mxu0 0.0
    %4974 = vmatpush2.msra.mxu0 0.0
    %4975 = vmatprep.subr.mxu0 0.0
    %4976 = vmatpush2.msra.mxu0 0.0
    %4977 = vmatprep.subr.mxu0 0.0
    %4978 = vmatpush2.msra.mxu0 0.0
    %4979 = vmatprep.subr.mxu0 0.0
    %4980 = vmatpush2.msra.mxu0 0.0
    %4981 = vmatprep.mubr.f32.mxu0 0.0
    %4982 = vmatmul.mubr.f32.gmra.mxu0 %v83
    %v4983 = vpop.f32.mrf.mxu0
    %v4984 = vadd.f32 0.0, %v4983
    %v4985 = vpop.f32.mrf.mxu0
    %4986 = vmatprep.mubr.f32.mxu0 0.0
    %4987 = vmatmul.mubr.f32.gmra.mxu0 %v86
    %v4988 = vpop.f32.mrf.mxu0
    %v4989 = vadd.f32 0.0, %v4988
    %v4990 = vpop.f32.mrf.mxu0
    %4991 = vmatprep.mubr.f32.mxu0 0.0
    %4992 = vmatmul.mubr.f32.gmra.mxu0 %v89
    %v4993 = vpop.f32.mrf.mxu0
    %v4994 = vadd.f32 0.0, %v4993
    %v4995 = vpop.f32.mrf.mxu0
    %4996 = vmatprep.mubr.f32.mxu0 0.0
    %4997 = vmatmul.mubr.f32.gmra.mxu0 %v92
    %v4998 = vpop.f32.mrf.mxu0
    %v4999 = vadd.f32 0.0, %v4998
    %v5000 = vpop.f32.mrf.mxu0
    %5001 = vdwg.mxu0
    %v5002 = vadd.f32 %v4740, %v4984
    %v5003 = vadd.f32 %v4741, %v4989
    %v5004 = vadd.f32 %v4742, %v4994
    %v5005 = vadd.f32 %v4743, %v4999
    %v5006 = vld [vmem:[#allocation2 + $0x150] sm:$0xff]
    %v5007 = vld [vmem:[#allocation2 + $0x158] sm:$0x1]
    %v5008 = vlaneseq
    %v5009 = vshrl.u32 %v5008, 7
    %v5010 = vsub.s32 0, %v5009
    %v5011 = vrot.slane %v5007, %v5010
    %v5013 = vsel %vm4480, %v5002, 0
    %v5016 = vsel %vm4480, %v5003, 0
    %v5019 = vsel %vm4480, %v5004, 0
    %v5022 = vsel %vm4480, %v5005, 0
    %5024 = vmatprep.subr.mxu0 0.0
    %5025 = vmatpush1.msra.mxu0 0.0
    %5026 = vmatprep.subr.mxu0 0.0
    %5027 = vmatpush1.msra.mxu0 0.0
    %5028 = vmatprep.subr.mxu0 0.0
    %5029 = vmatpush1.msra.mxu0 0.0
    %5030 = vmatprep.subr.mxu0 0.0
    %5031 = vmatpush1.msra.mxu0 0.0
    %5032 = vmatprep.subr.mxu0 0.0
    %5033 = vmatpush1.msra.mxu0 0.0
    %5034 = vmatprep.subr.mxu0 0.0
    %5035 = vmatpush1.msra.mxu0 0.0
    %5036 = vmatprep.subr.mxu0 0.0
    %5037 = vmatpush1.msra.mxu0 0.0
    %5038 = vmatprep.subr.mxu0 0.0
    %5039 = vmatpush1.msra.mxu0 0.0
    %5040 = vmatprep.subr.mxu0 0.0
    %5041 = vmatpush1.msra.mxu0 0.0
    %5042 = vmatprep.subr.mxu0 0.0
    %5043 = vmatpush1.msra.mxu0 0.0
    %5044 = vmatprep.subr.mxu0 0.0
    %5045 = vmatpush1.msra.mxu0 0.0
    %5046 = vmatprep.subr.mxu0 0.0
    %5047 = vmatpush1.msra.mxu0 0.0
    %5048 = vmatprep.subr.mxu0 0.0
    %5049 = vmatpush1.msra.mxu0 0.0
    %5050 = vmatprep.subr.mxu0 0.0
    %5051 = vmatpush1.msra.mxu0 0.0
    %5052 = vmatprep.subr.mxu0 0.0
    %5053 = vmatpush1.msra.mxu0 0.0
    %5054 = vmatprep.subr.mxu0 0.0
    %5055 = vmatpush1.msra.mxu0 %v5006
    %5056 = vmatprep.subr.mxu0 0.0
    %5057 = vmatpush2.msra.mxu0 0.0
    %5058 = vmatprep.subr.mxu0 0.0
    %5059 = vmatpush2.msra.mxu0 0.0
    %5060 = vmatprep.subr.mxu0 0.0
    %5061 = vmatpush2.msra.mxu0 0.0
    %5062 = vmatprep.subr.mxu0 0.0
    %5063 = vmatpush2.msra.mxu0 0.0
    %5064 = vmatprep.subr.mxu0 0.0
    %5065 = vmatpush2.msra.mxu0 0.0
    %5066 = vmatprep.subr.mxu0 0.0
    %5067 = vmatpush2.msra.mxu0 0.0
    %5068 = vmatprep.subr.mxu0 0.0
    %5069 = vmatpush2.msra.mxu0 0.0
    %5070 = vmatprep.subr.mxu0 0.0
    %5071 = vmatpush2.msra.mxu0 0.0
    %5072 = vmatprep.subr.mxu0 0.0
    %5073 = vmatpush2.msra.mxu0 0.0
    %5074 = vmatprep.subr.mxu0 0.0
    %5075 = vmatpush2.msra.mxu0 0.0
    %5076 = vmatprep.subr.mxu0 0.0
    %5077 = vmatpush2.msra.mxu0 0.0
    %5078 = vmatprep.subr.mxu0 0.0
    %5079 = vmatpush2.msra.mxu0 0.0
    %5080 = vmatprep.subr.mxu0 0.0
    %5081 = vmatpush2.msra.mxu0 0.0
    %5082 = vmatprep.subr.mxu0 0.0
    %5083 = vmatpush2.msra.mxu0 0.0
    %5084 = vmatprep.subr.mxu0 0.0
    %5085 = vmatpush2.msra.mxu0 0.0
    %5086 = vmatprep.subr.mxu0 0.0
    %5087 = vmatpush2.msra.mxu0 0.0
    %5088 = vmatprep.mubr.f32.mxu0 0.0
    %5089 = vmatmul.mubr.f32.gmra.mxu0 %v5013
    %v5090 = vpop.f32.mrf.mxu0
    %v5091 = vadd.f32 %v5011, %v5090
    %v5092 = vpop.f32.mrf.mxu0
    %5093 = vmatprep.mubr.f32.mxu0 0.0
    %5094 = vmatmul.mubr.f32.gmra.mxu0 %v5016
    %v5095 = vpop.f32.mrf.mxu0
    %v5096 = vadd.f32 %v5011, %v5095
    %v5097 = vpop.f32.mrf.mxu0
    %5098 = vmatprep.mubr.f32.mxu0 0.0
    %5099 = vmatmul.mubr.f32.gmra.mxu0 %v5019
    %v5100 = vpop.f32.mrf.mxu0
    %v5101 = vadd.f32 %v5011, %v5100
    %v5102 = vpop.f32.mrf.mxu0
    %5103 = vmatprep.mubr.f32.mxu0 0.0
    %5104 = vmatmul.mubr.f32.gmra.mxu0 %v5022
    %v5105 = vpop.f32.mrf.mxu0
    %v5106 = vadd.f32 %v5011, %v5105
    %v5107 = vpop.f32.mrf.mxu0
    %5108 = vdwg.mxu0
    %v5109 = vmax.f32 %v5091, 0.0
    %v5110 = vmax.f32 %v5096, 0.0
    %v5111 = vmax.f32 %v5101, 0.0
    %v5112 = vmax.f32 %v5106, 0.0
    %v5113 = vld [vmem:[#allocation2 + $0x160] sm:$0xff]
    %v5114 = vld [vmem:[#allocation2 + $0x168] sm:$0xff]
    %v5115 = vld [vmem:[#allocation2 + $0x170] sm:$0xff]
    %v5116 = vld [vmem:[#allocation2 + $0x178] sm:$0xff]
    %v5117 = vld [vmem:[#allocation2 + $0x180] sm:$0x1]
    %v5118 = vlaneseq
    %v5119 = vshrl.u32 %v5118, 7
    %v5120 = vsub.s32 0, %v5119
    %v5121 = vrot.slane %v5117, %v5120
    %v5123 = vsel %vm81, %v5109, 0
    %v5126 = vsel %vm81, %v5110, 0
    %v5129 = vsel %vm81, %v5111, 0
    %v5132 = vsel %vm81, %v5112, 0
    %5134 = vmatprep.subr.mxu0 0.0
    %5135 = vmatpush1.msra.mxu0 0.0
    %5136 = vmatprep.subr.mxu0 0.0
    %5137 = vmatpush1.msra.mxu0 0.0
    %5138 = vmatprep.subr.mxu0 0.0
    %5139 = vmatpush1.msra.mxu0 0.0
    %5140 = vmatprep.subr.mxu0 0.0
    %5141 = vmatpush1.msra.mxu0 0.0
    %5142 = vmatprep.subr.mxu0 0.0
    %5143 = vmatpush1.msra.mxu0 0.0
    %5144 = vmatprep.subr.mxu0 0.0
    %5145 = vmatpush1.msra.mxu0 0.0
    %5146 = vmatprep.subr.mxu0 0.0
    %5147 = vmatpush1.msra.mxu0 0.0
    %5148 = vmatprep.subr.mxu0 0.0
    %5149 = vmatpush1.msra.mxu0 0.0
    %5150 = vmatprep.subr.mxu0 0.0
    %5151 = vmatpush1.msra.mxu0 0.0
    %5152 = vmatprep.subr.mxu0 0.0
    %5153 = vmatpush1.msra.mxu0 0.0
    %5154 = vmatprep.subr.mxu0 0.0
    %5155 = vmatpush1.msra.mxu0 0.0
    %5156 = vmatprep.subr.mxu0 0.0
    %5157 = vmatpush1.msra.mxu0 0.0
    %5158 = vmatprep.subr.mxu0 0.0
    %5159 = vmatpush1.msra.mxu0 %v5116
    %5160 = vmatprep.subr.mxu0 0.0
    %5161 = vmatpush1.msra.mxu0 %v5115
    %5162 = vmatprep.subr.mxu0 0.0
    %5163 = vmatpush1.msra.mxu0 %v5114
    %5164 = vmatprep.subr.mxu0 0.0
    %5165 = vmatpush1.msra.mxu0 %v5113
    %5166 = vmatprep.subr.mxu0 0.0
    %5167 = vmatpush2.msra.mxu0 0.0
    %5168 = vmatprep.subr.mxu0 0.0
    %5169 = vmatpush2.msra.mxu0 0.0
    %5170 = vmatprep.subr.mxu0 0.0
    %5171 = vmatpush2.msra.mxu0 0.0
    %5172 = vmatprep.subr.mxu0 0.0
    %5173 = vmatpush2.msra.mxu0 0.0
    %5174 = vmatprep.subr.mxu0 0.0
    %5175 = vmatpush2.msra.mxu0 0.0
    %5176 = vmatprep.subr.mxu0 0.0
    %5177 = vmatpush2.msra.mxu0 0.0
    %5178 = vmatprep.subr.mxu0 0.0
    %5179 = vmatpush2.msra.mxu0 0.0
    %5180 = vmatprep.subr.mxu0 0.0
    %5181 = vmatpush2.msra.mxu0 0.0
    %5182 = vmatprep.subr.mxu0 0.0
    %5183 = vmatpush2.msra.mxu0 0.0
    %5184 = vmatprep.subr.mxu0 0.0
    %5185 = vmatpush2.msra.mxu0 0.0
    %5186 = vmatprep.subr.mxu0 0.0
    %5187 = vmatpush2.msra.mxu0 0.0
    %5188 = vmatprep.subr.mxu0 0.0
    %5189 = vmatpush2.msra.mxu0 0.0
    %5190 = vmatprep.subr.mxu0 0.0
    %5191 = vmatpush2.msra.mxu0 0.0
    %5192 = vmatprep.subr.mxu0 0.0
    %5193 = vmatpush2.msra.mxu0 0.0
    %5194 = vmatprep.subr.mxu0 0.0
    %5195 = vmatpush2.msra.mxu0 0.0
    %5196 = vmatprep.subr.mxu0 0.0
    %5197 = vmatpush2.msra.mxu0 0.0
    %5198 = vmatprep.mubr.f32.mxu0 0.0
    %5199 = vmatmul.mubr.f32.gmra.mxu0 %v5123
    %v5200 = vpop.f32.mrf.mxu0
    %v5201 = vadd.f32 %v5121, %v5200
    %v5202 = vpop.f32.mrf.mxu0
    %5203 = vmatprep.mubr.f32.mxu0 0.0
    %5204 = vmatmul.mubr.f32.gmra.mxu0 %v5126
    %v5205 = vpop.f32.mrf.mxu0
    %v5206 = vadd.f32 %v5121, %v5205
    %v5207 = vpop.f32.mrf.mxu0
    %5208 = vmatprep.mubr.f32.mxu0 0.0
    %5209 = vmatmul.mubr.f32.gmra.mxu0 %v5129
    %v5210 = vpop.f32.mrf.mxu0
    %v5211 = vadd.f32 %v5121, %v5210
    %v5212 = vpop.f32.mrf.mxu0
    %5213 = vmatprep.mubr.f32.mxu0 0.0
    %5214 = vmatmul.mubr.f32.gmra.mxu0 %v5132
    %v5215 = vpop.f32.mrf.mxu0
    %v5216 = vadd.f32 %v5121, %v5215
    %v5217 = vpop.f32.mrf.mxu0
    %5218 = vdwg.mxu0
    %v5219 = vadd.f32 %v5002, %v5201
    %v5220 = vadd.f32 %v5003, %v5206
    %v5221 = vadd.f32 %v5004, %v5211
    %v5222 = vadd.f32 %v5005, %v5216
    %v5223 = vsel %vm4480, %v5219, 0.0
    %5224 = vadd.xlane.f32.xlu0 %v5223
    %v5225 = vpop.xlane.xlu0 %5224
    %v5226 = vsel %vm4480, %v5220, 0.0
    %5227 = vadd.xlane.f32.xlu0 %v5226
    %v5228 = vpop.xlane.xlu0 %5227
    %v5229 = vsel %vm4480, %v5221, 0.0
    %5230 = vadd.xlane.f32.xlu0 %v5229
    %v5231 = vpop.xlane.xlu0 %5230
    %v5232 = vsel %vm4480, %v5222, 0.0
    %5233 = vadd.xlane.f32.xlu0 %v5232
    %v5234 = vpop.xlane.xlu0 %5233
    %v5235 = vmul.f32 %v5225, %v4493
    %v5236 = vmul.f32 %v5228, %v4493
    %v5237 = vmul.f32 %v5231, %v4493
    %v5238 = vmul.f32 %v5234, %v4493
    %v5239 = vsub.f32 %v5219, %v5235
    %v5240 = vsub.f32 %v5220, %v5236
    %v5241 = vsub.f32 %v5221, %v5237
    %v5242 = vsub.f32 %v5222, %v5238
    %v5243 = vmul.f32 %v5239, %v5239
    %v5244 = vmul.f32 %v5240, %v5240
    %v5245 = vmul.f32 %v5241, %v5241
    %v5246 = vmul.f32 %v5242, %v5242
    %v5247 = vsel %vm4480, %v5243, 0.0
    %5248 = vadd.xlane.f32.xlu0 %v5247
    %v5249 = vpop.xlane.xlu0 %5248
    %v5250 = vsel %vm4480, %v5244, 0.0
    %5251 = vadd.xlane.f32.xlu0 %v5250
    %v5252 = vpop.xlane.xlu0 %5251
    %v5253 = vsel %vm4480, %v5245, 0.0
    %5254 = vadd.xlane.f32.xlu0 %v5253
    %v5255 = vpop.xlane.xlu0 %5254
    %v5256 = vsel %vm4480, %v5246, 0.0
    %5257 = vadd.xlane.f32.xlu0 %v5256
    %v5258 = vpop.xlane.xlu0 %5257
    %v5259 = vmul.f32 %v5249, %v4493
    %v5260 = vmul.f32 %v5252, %v4493
    %v5261 = vmul.f32 %v5255, %v4493
    %v5262 = vmul.f32 %v5258, %v4493
    %v5263 = vadd.f32 %v5259, 1e-05
    %v5264 = vadd.f32 %v5260, 1e-05
    %v5265 = vadd.f32 %v5261, 1e-05
    %v5266 = vadd.f32 %v5262, 1e-05
    %v5267 = vrsqrt.pop %v5263
    %v5268 = vrsqrt.pop %v5264
    %v5269 = vrsqrt.pop %v5265
    %v5270 = vrsqrt.pop %v5266
    %v5271 = vmul.f32 %v5239, %v5267
    %v5272 = vmul.f32 %v5240, %v5268
    %v5273 = vmul.f32 %v5241, %v5269
    %v5274 = vmul.f32 %v5242, %v5270
    %v5275 = vld [vmem:[#allocation2 + $0x140] sm:$0x1]
    %v5276 = vlaneseq
    %v5277 = vshrl.u32 %v5276, 7
    %v5278 = vsub.s32 0, %v5277
    %v5279 = vrot.slane %v5275, %v5278
    %v5280 = vmul.f32 %v5271, %v5279
    %v5281 = vmul.f32 %v5272, %v5279
    %v5282 = vmul.f32 %v5273, %v5279
    %v5283 = vmul.f32 %v5274, %v5279
    %v5284 = vld [vmem:[#allocation2 + $0x148] sm:$0x1]
    %v5285 = vlaneseq
    %v5286 = vshrl.u32 %v5285, 7
    %v5287 = vsub.s32 0, %v5286
    %v5288 = vrot.slane %v5284, %v5287
    %v5289 = vadd.f32 %v5280, %v5288
    %v5290 = vadd.f32 %v5281, %v5288
    %v5291 = vadd.f32 %v5282, %v5288
    %v5292 = vadd.f32 %v5283, %v5288
    %v5293 = vld [vmem:[#allocation2 + $0x188] sm:$0xff]
    %v5294 = vld [vmem:[#allocation2 + $0x190] sm:$0x1]
    %v5295 = vlaneseq
    %v5296 = vshrl.u32 %v5295, 7
    %v5297 = vsub.s32 0, %v5296
    %v5298 = vrot.slane %v5294, %v5297
    %v5300 = vsel %vm4480, %v5289, 0
    %v5303 = vsel %vm4480, %v5290, 0
    %v5306 = vsel %vm4480, %v5291, 0
    %v5309 = vsel %vm4480, %v5292, 0
    %5311 = vmatprep.subr.mxu0 0.0
    %5312 = vmatpush1.msra.mxu0 0.0
    %5313 = vmatprep.subr.mxu0 0.0
    %5314 = vmatpush1.msra.mxu0 0.0
    %5315 = vmatprep.subr.mxu0 0.0
    %5316 = vmatpush1.msra.mxu0 0.0
    %5317 = vmatprep.subr.mxu0 0.0
    %5318 = vmatpush1.msra.mxu0 0.0
    %5319 = vmatprep.subr.mxu0 0.0
    %5320 = vmatpush1.msra.mxu0 0.0
    %5321 = vmatprep.subr.mxu0 0.0
    %5322 = vmatpush1.msra.mxu0 0.0
    %5323 = vmatprep.subr.mxu0 0.0
    %5324 = vmatpush1.msra.mxu0 0.0
    %5325 = vmatprep.subr.mxu0 0.0
    %5326 = vmatpush1.msra.mxu0 0.0
    %5327 = vmatprep.subr.mxu0 0.0
    %5328 = vmatpush1.msra.mxu0 0.0
    %5329 = vmatprep.subr.mxu0 0.0
    %5330 = vmatpush1.msra.mxu0 0.0
    %5331 = vmatprep.subr.mxu0 0.0
    %5332 = vmatpush1.msra.mxu0 0.0
    %5333 = vmatprep.subr.mxu0 0.0
    %5334 = vmatpush1.msra.mxu0 0.0
    %5335 = vmatprep.subr.mxu0 0.0
    %5336 = vmatpush1.msra.mxu0 0.0
    %5337 = vmatprep.subr.mxu0 0.0
    %5338 = vmatpush1.msra.mxu0 0.0
    %5339 = vmatprep.subr.mxu0 0.0
    %5340 = vmatpush1.msra.mxu0 0.0
    %5341 = vmatprep.subr.mxu0 0.0
    %5342 = vmatpush1.msra.mxu0 %v5293
    %5343 = vmatprep.subr.mxu0 0.0
    %5344 = vmatpush2.msra.mxu0 0.0
    %5345 = vmatprep.subr.mxu0 0.0
    %5346 = vmatpush2.msra.mxu0 0.0
    %5347 = vmatprep.subr.mxu0 0.0
    %5348 = vmatpush2.msra.mxu0 0.0
    %5349 = vmatprep.subr.mxu0 0.0
    %5350 = vmatpush2.msra.mxu0 0.0
    %5351 = vmatprep.subr.mxu0 0.0
    %5352 = vmatpush2.msra.mxu0 0.0
    %5353 = vmatprep.subr.mxu0 0.0
    %5354 = vmatpush2.msra.mxu0 0.0
    %5355 = vmatprep.subr.mxu0 0.0
    %5356 = vmatpush2.msra.mxu0 0.0
    %5357 = vmatprep.subr.mxu0 0.0
    %5358 = vmatpush2.msra.mxu0 0.0
    %5359 = vmatprep.subr.mxu0 0.0
    %5360 = vmatpush2.msra.mxu0 0.0
    %5361 = vmatprep.subr.mxu0 0.0
    %5362 = vmatpush2.msra.mxu0 0.0
    %5363 = vmatprep.subr.mxu0 0.0
    %5364 = vmatpush2.msra.mxu0 0.0
    %5365 = vmatprep.subr.mxu0 0.0
    %5366 = vmatpush2.msra.mxu0 0.0
    %5367 = vmatprep.subr.mxu0 0.0
    %5368 = vmatpush2.msra.mxu0 0.0
    %5369 = vmatprep.subr.mxu0 0.0
    %5370 = vmatpush2.msra.mxu0 0.0
    %5371 = vmatprep.subr.mxu0 0.0
    %5372 = vmatpush2.msra.mxu0 0.0
    %5373 = vmatprep.subr.mxu0 0.0
    %5374 = vmatpush2.msra.mxu0 0.0
    %5375 = vmatprep.mubr.f32.mxu0 0.0
    %5376 = vmatmul.mubr.f32.gmra.mxu0 %v5300
    %v5377 = vpop.f32.mrf.mxu0
    %v5378 = vadd.f32 %v5298, %v5377
    %v5379 = vpop.f32.mrf.mxu0
    %5380 = vmatprep.mubr.f32.mxu0 0.0
    %5381 = vmatmul.mubr.f32.gmra.mxu0 %v5303
    %v5382 = vpop.f32.mrf.mxu0
    %v5383 = vadd.f32 %v5298, %v5382
    %v5384 = vpop.f32.mrf.mxu0
    %5385 = vmatprep.mubr.f32.mxu0 0.0
    %5386 = vmatmul.mubr.f32.gmra.mxu0 %v5306
    %v5387 = vpop.f32.mrf.mxu0
    %v5388 = vadd.f32 %v5298, %v5387
    %v5389 = vpop.f32.mrf.mxu0
    %5390 = vmatprep.mubr.f32.mxu0 0.0
    %5391 = vmatmul.mubr.f32.gmra.mxu0 %v5309
    %v5392 = vpop.f32.mrf.mxu0
    %v5393 = vadd.f32 %v5298, %v5392
    %v5394 = vpop.f32.mrf.mxu0
    %5395 = vdwg.mxu0
    %5396 = vst [vmem:[%s2] sm:$0xff] %v5378
    %5397 = vst [vmem:[%s2 + $0x8] sm:$0xff] %v5383
    %5398 = vst [vmem:[%s2 + $0x10] sm:$0xff] %v5388
    %5399 = vst [vmem:[%s2 + $0x18] sm:$0xff] %v5393
    // Predicated region
    $region14: #{forward.1} parent=1 // pred_check
      _
    $region15: #{forward.1} parent=1 // pred_check_branch
      %5401 = sbr.rel (0) target = $region17
    $region16: #{forward.1} parent=1 // pred_region
      _
    $region17: #{forward.1} parent=1 // pred_fallthru
      _
    // Predicated region
    $region18: #{forward.1} parent=1 // pred_check
      _
    $region19: #{forward.1} parent=1 // pred_check_branch
      %5403 = sbr.rel (0) target = $region21
    $region20: #{forward.1} parent=1 // pred_region
      _
    $region21: #{forward.1} parent=1 // pred_fallthru
      _
    %5404 = vsyncpa [#allocation3], 1

</llo_original>
